<compile_context>
chip_gen: v5e
topology: v5e:2x2
jax: 0.10.0
libtpu: 0.0.40
codegen_flags: <defaults>
</compile_context>

<pallas_src>
import functools

import jax
import jax.numpy as jnp
from jax import lax
from jax.experimental import pallas as pl
from jax.experimental.pallas import tpu as pltpu


HALO = 3  # row halo on each side: three chained 3x3 convs


# ----------------------------------------------------------------------------
# Pallas kernel: one (batch, disparity, H-tile) step of
#   conv3x3(64->128)+ReLU -> conv3x3(128->64)+ReLU -> conv3x3(64->16)+ReLU
#   -> 1x1(16->1)+ReLU, stored as the (Ht, W) slice of the cost volume.
# Weights: (3, 3*Cin, Cout) bf16 with BN folded (leading axis = dh row tap);
# biases: (1, Cout) f32.
# ----------------------------------------------------------------------------
def _volume_kernel(x_ref, w1_ref, b1_ref, w2_ref, b2_ref, w3_ref, b3_ref,
                   w4_ref, b4_ref, o_ref, *, H, W, Ht, PF):
    i = pl.program_id(1)                       # disparity index
    th = pl.program_id(2)                      # H-tile index
    Hext = Ht + 2 * HALO                       # rows computed this step
    Np = Hext * W
    row0 = th * Ht - HALO                      # global row of local row 0 (< 0 ok)

    # ---- hoisted masks over the extended (halo'd) extent ----
    q = lax.broadcasted_iota(jnp.int32, (Np, 1), 0)       # local flat position
    col = q % W
    m_left = col >= 1                                     # dw = -1 tap exists
    m_right = col <= W - 2                                # dw = +1 tap exists
    row_lo = (0 - row0) * W                               # first in-image flat idx
    row_hi = (H - row0) * W                               # one past the last
    valid = (col >= i) & (q >= row_lo) & (q < row_hi)     # crop + image-row validity
    C2 = x_ref.shape[2]
    even = (lax.broadcasted_iota(jnp.int32, (1, C2), 1) % 2) == 0
    wcol = lax.broadcasted_iota(jnp.int32, (1, W), 1)

    # ---- interleaved, disparity-shifted input slab for this tile ----
    base = PF + row0 * W                                  # >= 0 by construction
    x_un = x_ref[0, pl.ds(base, Np), :]                   # featR channels (odd lanes)
    x_sh = x_ref[0, pl.ds(base - i, Np), :]               # featL channels shifted by i
    x0 = jnp.where(even, x_sh, x_un)
    x0 = jnp.where(valid, x0, 0.0)

    def conv3x3_relu(x, w_ref, b_ref):
        # x: (Np, Cin) f32, already zeroed at invalid positions.
        cin = x.shape[-1]
        zc = jnp.zeros((1, cin), jnp.float32)
        x_m1 = jnp.where(m_left, jnp.concatenate([zc, x[:-1, :]], axis=0), 0.0)
        x_p1 = jnp.where(m_right, jnp.concatenate([x[1:, :], zc], axis=0), 0.0)
        xc = jnp.concatenate([x_m1, x, x_p1], axis=-1).astype(jnp.bfloat16)
        # three MXU passes (dh = -1, 0, +1) sharing one bf16 operand, f32 acc
        t_m1 = jnp.dot(xc, w_ref[0], preferred_element_type=jnp.float32)
        t_0 = jnp.dot(xc, w_ref[1], preferred_element_type=jnp.float32)
        t_p1 = jnp.dot(xc, w_ref[2], preferred_element_type=jnp.float32)
        cout = t_0.shape[-1]
        zr = jnp.zeros((W, cout), jnp.float32)
        y = (t_0
             + jnp.concatenate([zr, t_m1[:-W, :]], axis=0)    # + t_m1[n - W]
             + jnp.concatenate([t_p1[W:, :], zr], axis=0))    # + t_p1[n + W]
        y = jnp.maximum(y + b_ref[...], 0.0)
        return jnp.where(valid, y, 0.0)        # re-zero crop / out-of-image rows

    y = conv3x3_relu(x0, w1_ref, b1_ref)       # (Np, 128)  depth 8 x ch 16
    y = conv3x3_relu(y, w2_ref, b2_ref)        # (Np, 64)   depth 2 x ch 32
    y = conv3x3_relu(y, w3_ref, b3_ref)        # (Np, 16)   depth 1 x ch 16

    # Stage 4: 1x1 (16 -> 1) + BN + ReLU on the VPU, fused with the (Ht, W) store.
    t = y * w4_ref[...]                                    # (Np, 16) f32
    z = jnp.sum(t.reshape(Hext, W, t.shape[-1]), axis=-1)  # (Hext, W), W on lanes
    z = jnp.maximum(z + b4_ref[...], 0.0)
    z = jnp.where(wcol >= i, z, 0.0)                       # volume[:, i, :, :i] stays 0
    o_ref[0, 0] = z[HALO:HALO + Ht, :]


# ----------------------------------------------------------------------------
# Wrapper reproducing volume_build.forward — a single fused pallas_call.
# ----------------------------------------------------------------------------
def _pick_vmem_limit():
    try:
        cap = getattr(pltpu.get_tpu_info(), "vmem_capacity_bytes", None)
        if cap:
            return int(min(cap - 8 * 2**20, 110 * 2**20))
    except Exception:
        pass
    return 56 * 2**20


def _spec(shape, index_map, single_buffer=False):
    if single_buffer:
        try:   # weights / per-batch input: reclaim the double-buffer VMEM
            return pl.BlockSpec(shape, index_map, pipeline_mode=pl.Buffered(1))
        except Exception:
            pass
    return pl.BlockSpec(shape, index_map)


def volume_build_forward(featL, featR, eff, volume_size, h_tile=None):
    B, C, H, W = featL.shape
    N = H * W
    if (h_tile is None or h_tile <= 0 or H % h_tile != 0
            or (h_tile % 8 != 0 and h_tile != H)):
        h_tile = H                               # fall back to one tile per image
    Ht = h_tile
    PF = ((HALO * W + volume_size - 1 + 7) // 8) * 8   # front zero pad (8-aligned)
    PB = HALO * W                                      # back zero pad
    w1, b1, w2, b2, w3, b3, w4, b4 = eff

    # Interleave channels once (channel 2c = L_c, channel 2c+1 = R_c), flat H*W.
    L = jnp.transpose(featL, (0, 2, 3, 1))       # (B, H, W, C)
    R = jnp.transpose(featR, (0, 2, 3, 1))
    X = jnp.stack([L, R], axis=-1).reshape(B, H, W, 2 * C)
    Xf = X.reshape(B, N, 2 * C).astype(jnp.float32)
    Xp = jnp.pad(Xf, ((0, 0), (PF, PB), (0, 0)))  # halo + disparity padding

    kernel = functools.partial(_volume_kernel, H=H, W=W, Ht=Ht, PF=PF)

    def wspec(a):
        nd = a.ndim
        return _spec(a.shape, lambda b, d, h, _nd=nd: (0,) * _nd, single_buffer=True)

    return pl.pallas_call(
        kernel,
        out_shape=jax.ShapeDtypeStruct((B, volume_size, H, W), jnp.float32),
        grid=(B, volume_size, H // Ht),
        in_specs=[_spec((1, PF + N + PB, 2 * C), lambda b, d, h: (b, 0, 0),
                        single_buffer=True),
                  wspec(w1), wspec(b1), wspec(w2), wspec(b2),
                  wspec(w3), wspec(b3), wspec(w4), wspec(b4)],
        out_specs=pl.BlockSpec((1, 1, Ht, W), lambda b, d, h: (b, d, h, 0)),
        compiler_params=pltpu.CompilerParams(
            dimension_semantics=("parallel", "parallel", "parallel"),
            vmem_limit_bytes=_pick_vmem_limit()),
    )(Xp, w1, b1, w2, b2, w3, b3, w4, b4)


# ----------------------------------------------------------------------------
# Deterministic parameter init (PyTorch layer shapes) + BN folding / tap folding
# ----------------------------------------------------------------------------
def init_params(key):
    ks = iter(jax.random.split(key, 24))

    def nrm(shape, scale=0.05):
        return scale * jax.random.normal(next(ks), shape, jnp.float32)

    p = {}
    p['w1'] = nrm((16, 1, 8, 3, 3));  p['b1'] = nrm((16,))
    p['g1'] = 1.0 + nrm((16,)); p['be1'] = nrm((16,)); p['m1'] = nrm((16,))
    p['v1'] = jax.random.uniform(next(ks), (16,), jnp.float32, 0.5, 1.5)
    p['w2'] = nrm((32, 16, 4, 3, 3)); p['b2'] = nrm((32,))
    p['g2'] = 1.0 + nrm((32,)); p['be2'] = nrm((32,)); p['m2'] = nrm((32,))
    p['v2'] = jax.random.uniform(next(ks), (32,), jnp.float32, 0.5, 1.5)
    p['w3'] = nrm((16, 32, 2, 3, 3)); p['b3'] = nrm((16,))
    p['g3'] = 1.0 + nrm((16,)); p['be3'] = nrm((16,)); p['m3'] = nrm((16,))
    p['v3'] = jax.random.uniform(next(ks), (16,), jnp.float32, 0.5, 1.5)
    p['wv'] = nrm((1, 16, 1, 1))
    p['gv'] = 1.0 + nrm((1,)); p['bev'] = nrm((1,)); p['mv'] = nrm((1,))
    p['vv'] = jax.random.uniform(next(ks), (1,), jnp.float32, 0.5, 1.5)
    return p


def build_effective_params(p, eps=1e-5):
    # Stage 1: Conv3d(1->16, k=(8,3,3), s=(8,1,1)) == grouped 2D conv, 8 groups
    # (output channel d'*16 + co uses interleaved input channels 8*d' + kd).
    w1_ = jnp.transpose(p['w1'][:, 0], (2, 3, 1, 0))        # (kh, kw, kd=8, co=16)
    w1e = jnp.zeros((3, 3, 64, 128), jnp.float32)
    for g in range(8):
        w1e = w1e.at[:, :, g * 8:(g + 1) * 8, g * 16:(g + 1) * 16].set(w1_)
    s1 = jnp.tile(p['g1'], 8) / jnp.sqrt(jnp.tile(p['v1'], 8) + eps)
    w1f = (w1e * s1).reshape(3, 3 * 64, 128).astype(jnp.bfloat16)
    b1f = (jnp.tile(p['b1'], 8) - jnp.tile(p['m1'], 8)) * s1 + jnp.tile(p['be1'], 8)

    # Stage 2: Conv3d(16->32, k=(4,3,3), s=(4,1,1)) -> 2 groups, 64 -> 32 each
    w2_ = jnp.transpose(p['w2'], (3, 4, 2, 1, 0)).reshape(3, 3, 64, 32)  # kd*16+ci
    w2e = jnp.zeros((3, 3, 128, 64), jnp.float32)
    for g in range(2):
        w2e = w2e.at[:, :, g * 64:(g + 1) * 64, g * 32:(g + 1) * 32].set(w2_)
    s2 = jnp.tile(p['g2'], 2) / jnp.sqrt(jnp.tile(p['v2'], 2) + eps)
    w2f = (w2e * s2).reshape(3, 3 * 128, 64).astype(jnp.bfloat16)
    b2f = (jnp.tile(p['b2'], 2) - jnp.tile(p['m2'], 2)) * s2 + jnp.tile(p['be2'], 2)

    # Stage 3: Conv3d(32->16, k=(2,3,3), s=(2,1,1)) -> single group 64 -> 16
    w3e = jnp.transpose(p['w3'], (3, 4, 2, 1, 0)).reshape(3, 3, 64, 16)  # kd*32+ci
    s3 = p['g3'] / jnp.sqrt(p['v3'] + eps)
    w3f = (w3e * s3).reshape(3, 3 * 64, 16).astype(jnp.bfloat16)
    b3f = (p['b3'] - p['m3']) * s3 + p['be3']

    # Stage 4: volume11 = Conv2d(16->1, k=1, bias=False) + BN2d(1); kept f32 for
    # the in-kernel VPU broadcast-multiply + lane reduce.
    sv = p['gv'] / jnp.sqrt(p['vv'] + eps)
    w4f = p['wv'][:, :, 0, 0] * sv.reshape(1, 1)            # (1, 16)
    b4f = (0.0 - p['mv']) * sv + p['bev']                   # (1,)

    return (w1f, b1f.reshape(1, -1), w2f, b2f.reshape(1, -1),
            w3f, b3f.reshape(1, -1), w4f, b4f.reshape(1, 1))


# ----------------------------------------------------------------------------
# Pure-JAX reference (direct Conv3d / Conv2d path, BN in eval mode, f32 HIGHEST)
# ----------------------------------------------------------------------------
def reference_forward(featL, featR, p, volume_size, eps=1e-5):
    B, C, H, W = featL.shape

    def bn(x, g, be, m, v):
        s = g / jnp.sqrt(v + eps)
        shape = (1, -1) + (1,) * (x.ndim - 2)
        return x * s.reshape(shape) + (be - m * s).reshape(shape)

    def conv3d(x, w, b, sd):
        y = lax.conv_general_dilated(
            x, w, window_strides=(sd, 1, 1),
            padding=((0, 0), (1, 1), (1, 1)),
            dimension_numbers=('NCDHW', 'OIDHW', 'NCDHW'),
            precision=lax.Precision.HIGHEST)
        return y + b.reshape(1, -1, 1, 1, 1)

    outs = []
    for i in range(volume_size):
        Wi = W - i
        L = featL[:, :, :, :Wi]
        R = featR[:, :, :, i:]
        x = jnp.zeros((B, 2 * C, H, Wi), jnp.float32)
        x = x.at[:, 0::2].set(L).at[:, 1::2].set(R)
        x = x[:, None]
        y = jax.nn.relu(bn(conv3d(x, p['w1'], p['b1'], 8), p['g1'], p['be1'], p['m1'], p['v1']))
        y = jax.nn.relu(bn(conv3d(y, p['w2'], p['b2'], 4), p['g2'], p['be2'], p['m2'], p['v2']))
        y = jax.nn.relu(bn(conv3d(y, p['w3'], p['b3'], 2), p['g3'], p['be3'], p['m3'], p['v3']))
        y = y[:, :, 0]
        z = lax.conv_general_dilated(
            y, p['wv'], (1, 1), 'VALID',
            dimension_numbers=('NCHW', 'OIHW', 'NCHW'),
            precision=lax.Precision.HIGHEST)
        z = jax.nn.relu(bn(z, p['gv'], p['bev'], p['mv'], p['vv']))[:, 0]
        outs.append(jnp.pad(z, ((0, 0), (0, 0), (i, 0))))
    return jnp.stack(outs, axis=1)


if __name__ == "__main__":
    key = jax.random.PRNGKey(0)
    kL, kR, kp = jax.random.split(key, 3)
    # C must be 32: the Conv3d depth chain (8*4*2) collapses depth 2C=64 -> 1.
    B, C, H, W = 2, 32, 16, 8
    volume_size = 4

    featL = jax.random.normal(kL, (B, C, H, W), jnp.float32)
    featR = jax.random.normal(kR, (B, C, H, W), jnp.float32)

    params = init_params(kp)
    eff = build_effective_params(params)

    # h_tile=8 -> two H tiles, so the halo across a tile boundary is exercised
    # and checked against the reference.
    out = volume_build_forward(featL, featR, eff, volume_size, h_tile=8)
    out = jax.block_until_ready(out)
    assert out.shape == (B, volume_size, H, W)

    ref = reference_forward(featL, featR, params, volume_size)
    err = float(jnp.max(jnp.abs(out - ref)))
    tol = 5e-2 * max(1.0, float(jnp.max(jnp.abs(ref))))   # bf16 MXU operands
    if not err < tol:
        raise AssertionError(f"mismatch vs reference: max abs err {err} (tol {tol})")
    print("KERNEL_OK")
</pallas_src>

<mosaic_0001>
module attributes {stable_mosaic.version = 11 : i64} {
  func.func @_volume_kernel(%arg0: i32, %arg1: i32, %arg2: i32, %arg3: memref<1x184x64xf32, #tpu.memory_space<vmem>>, %arg4: memref<3x192x128xbf16, #tpu.memory_space<vmem>>, %arg5: memref<1x128xf32, #tpu.memory_space<vmem>>, %arg6: memref<3x384x64xbf16, #tpu.memory_space<vmem>>, %arg7: memref<1x64xf32, #tpu.memory_space<vmem>>, %arg8: memref<3x192x16xbf16, #tpu.memory_space<vmem>>, %arg9: memref<1x16xf32, #tpu.memory_space<vmem>>, %arg10: memref<1x16xf32, #tpu.memory_space<vmem>>, %arg11: memref<1x1xf32, #tpu.memory_space<vmem>>, %arg12: memref<1x1x8x8xf32, #tpu.memory_space<vmem>>) attributes {dimension_semantics = [#tpu.dimension_semantics<parallel>, #tpu.dimension_semantics<parallel>, #tpu.dimension_semantics<parallel>], iteration_bounds = array<i64: 2, 4, 2>, scalar_prefetch = 0 : i64, scratch_operands = 0 : i64, tpu.core_type = #tpu.core_type<tc>, window_params = [{pipeline_mode = #tpu.pipeline_mode<synchronous>, transform_indices = @transform_0, window_bounds = array<i64: 1, 184, 64>}, {pipeline_mode = #tpu.pipeline_mode<synchronous>, transform_indices = @transform_1, window_bounds = array<i64: 3, 192, 128>}, {pipeline_mode = #tpu.pipeline_mode<synchronous>, transform_indices = @transform_2, window_bounds = array<i64: 1, 128>}, {pipeline_mode = #tpu.pipeline_mode<synchronous>, transform_indices = @transform_3, window_bounds = array<i64: 3, 384, 64>}, {pipeline_mode = #tpu.pipeline_mode<synchronous>, transform_indices = @transform_4, window_bounds = array<i64: 1, 64>}, {pipeline_mode = #tpu.pipeline_mode<synchronous>, transform_indices = @transform_5, window_bounds = array<i64: 3, 192, 16>}, {pipeline_mode = #tpu.pipeline_mode<synchronous>, transform_indices = @transform_6, window_bounds = array<i64: 1, 16>}, {pipeline_mode = #tpu.pipeline_mode<synchronous>, transform_indices = @transform_7, window_bounds = array<i64: 1, 16>}, {pipeline_mode = #tpu.pipeline_mode<synchronous>, transform_indices = @transform_8, window_bounds = array<i64: 1, 1>}, {transform_indices = @transform_9, window_bounds = array<i64: 1, 1, 8, 8>}]} {
    %c8_i32 = arith.constant 8 : i32
    %0 = arith.muli %arg2, %c8_i32 : i32
    %c3_i32 = arith.constant 3 : i32
    %1 = arith.subi %0, %c3_i32 : i32
    %2 = tpu.iota {dimensions = array<i32: 0>} : vector<112x1xi32>
    %c8_i32_0 = arith.constant 8 : i32
    %c0_i32 = arith.constant 0 : i32
    %3 = arith.cmpi eq, %c8_i32_0, %c0_i32 : i32
    %c1_i32 = arith.constant 1 : i32
    %4 = arith.select %3, %c1_i32, %c8_i32_0 : i32
    %5 = vector.broadcast %4 : i32 to vector<112x1xi32>
    %6 = arith.remsi %2, %5 : vector<112x1xi32>
    %c0_i32_1 = arith.constant 0 : i32
    %7 = vector.broadcast %c0_i32_1 : i32 to vector<112x1xi32>
    %8 = arith.cmpi ne, %6, %7 : vector<112x1xi32>
    %c0_i32_2 = arith.constant 0 : i32
    %9 = vector.broadcast %c0_i32_2 : i32 to vector<112x1xi32>
    %10 = arith.cmpi slt, %6, %9 : vector<112x1xi32>
    %c0_i32_3 = arith.constant 0 : i32
    %11 = arith.cmpi slt, %4, %c0_i32_3 : i32
    %12 = vector.broadcast %11 : i1 to vector<112x1xi1>
    %13 = vector.broadcast %12 : vector<112x1xi1> to vector<112x1xi1>
    %14 = arith.xori %10, %13 : vector<112x1xi1>
    %15 = arith.andi %14, %8 : vector<112x1xi1>
    %16 = vector.broadcast %4 : i32 to vector<112x1xi32>
    %17 = arith.addi %6, %16 : vector<112x1xi32>
    %18 = arith.select %15, %17, %6 : vector<112x1xi1>, vector<112x1xi32>
    %c1_i32_4 = arith.constant 1 : i32
    %19 = vector.broadcast %c1_i32_4 : i32 to vector<112x1xi32>
    %20 = arith.cmpi sge, %18, %19 : vector<112x1xi32>
    %c6_i32 = arith.constant 6 : i32
    %21 = vector.broadcast %c6_i32 : i32 to vector<112x1xi32>
    %22 = arith.cmpi sle, %18, %21 : vector<112x1xi32>
    %c0_i32_5 = arith.constant 0 : i32
    %23 = arith.subi %c0_i32_5, %1 : i32
    %c8_i32_6 = arith.constant 8 : i32
    %24 = arith.muli %23, %c8_i32_6 : i32
    %c16_i32 = arith.constant 16 : i32
    %25 = arith.subi %c16_i32, %1 : i32
    %c8_i32_7 = arith.constant 8 : i32
    %26 = arith.muli %25, %c8_i32_7 : i32
    %27 = vector.broadcast %arg1 : i32 to vector<112x1xi32>
    %28 = arith.cmpi sge, %18, %27 : vector<112x1xi32>
    %29 = vector.broadcast %24 : i32 to vector<112x1xi32>
    %30 = arith.cmpi sge, %2, %29 : vector<112x1xi32>
    %31 = arith.andi %28, %30 : vector<112x1xi1>
    %32 = vector.broadcast %26 : i32 to vector<112x1xi32>
    %33 = arith.cmpi slt, %2, %32 : vector<112x1xi32>
    %34 = arith.andi %31, %33 : vector<112x1xi1>
    %35 = tpu.iota {dimensions = array<i32: 1>} : vector<1x64xi32>
    %c2_i32 = arith.constant 2 : i32
    %c0_i32_8 = arith.constant 0 : i32
    %36 = arith.cmpi eq, %c2_i32, %c0_i32_8 : i32
    %c1_i32_9 = arith.constant 1 : i32
    %37 = arith.select %36, %c1_i32_9, %c2_i32 : i32
    %38 = vector.broadcast %37 : i32 to vector<1x64xi32>
    %39 = arith.remsi %35, %38 : vector<1x64xi32>
    %c0_i32_10 = arith.constant 0 : i32
    %40 = vector.broadcast %c0_i32_10 : i32 to vector<1x64xi32>
    %41 = arith.cmpi ne, %39, %40 : vector<1x64xi32>
    %c0_i32_11 = arith.constant 0 : i32
    %42 = vector.broadcast %c0_i32_11 : i32 to vector<1x64xi32>
    %43 = arith.cmpi slt, %39, %42 : vector<1x64xi32>
    %c0_i32_12 = arith.constant 0 : i32
    %44 = arith.cmpi slt, %37, %c0_i32_12 : i32
    %45 = vector.broadcast %44 : i1 to vector<1x64xi1>
    %46 = vector.broadcast %45 : vector<1x64xi1> to vector<1x64xi1>
    %47 = arith.xori %43, %46 : vector<1x64xi1>
    %48 = arith.andi %47, %41 : vector<1x64xi1>
    %49 = vector.broadcast %37 : i32 to vector<1x64xi32>
    %50 = arith.addi %39, %49 : vector<1x64xi32>
    %51 = arith.select %48, %50, %39 : vector<1x64xi1>, vector<1x64xi32>
    %c0_i32_13 = arith.constant 0 : i32
    %52 = vector.broadcast %c0_i32_13 : i32 to vector<1x64xi32>
    %53 = arith.cmpi eq, %51, %52 : vector<1x64xi32>
    %54 = tpu.iota {dimensions = array<i32: 1>} : vector<1x8xi32>
    %c8_i32_14 = arith.constant 8 : i32
    %55 = arith.muli %1, %c8_i32_14 : i32
    %c32_i32 = arith.constant 32 : i32
    %56 = arith.addi %c32_i32, %55 : i32
    %c0 = arith.constant 0 : index
    %57 = arith.index_cast %56 : i32 to index
    %c0_15 = arith.constant 0 : index
    %58 = vector.load %arg3[%c0, %57, %c0_15] : memref<1x184x64xf32, #tpu.memory_space<vmem>>, vector<1x112x64xf32>
    %59 = vector.shape_cast %58 : vector<1x112x64xf32> to vector<112x64xf32>
    %60 = arith.subi %56, %arg1 : i32
    %c0_16 = arith.constant 0 : index
    %61 = arith.index_cast %60 : i32 to index
    %c0_17 = arith.constant 0 : index
    %62 = vector.load %arg3[%c0_16, %61, %c0_17] : memref<1x184x64xf32, #tpu.memory_space<vmem>>, vector<1x112x64xf32>
    %63 = vector.shape_cast %62 : vector<1x112x64xf32> to vector<112x64xf32>
    %64 = vector.shape_cast %53 : vector<1x64xi1> to vector<1x64xi1>
    %65 = vector.broadcast %64 : vector<1x64xi1> to vector<112x64xi1>
    %66 = arith.select %65, %63, %59 : vector<112x64xi1>, vector<112x64xf32>
    %cst = arith.constant 0.000000e+00 : f32
    %67 = vector.shape_cast %34 : vector<112x1xi1> to vector<112x1xi1>
    %68 = vector.broadcast %67 : vector<112x1xi1> to vector<112x64xi1>
    %69 = vector.broadcast %cst : f32 to vector<112x64xf32>
    %70 = arith.select %68, %66, %69 : vector<112x64xi1>, vector<112x64xf32>
    %cst_18 = arith.constant 0.000000e+00 : f32
    %71 = vector.broadcast %cst_18 : f32 to vector<1x64xf32>
    %72 = vector.extract_strided_slice %70 {offsets = [0, 0], sizes = [111, 64], strides = [1, 1]} : vector<112x64xf32> to vector<111x64xf32>
    %73 = tpu.concatenate %71, %72 in 0 : vector<1x64xf32>, vector<111x64xf32> -> vector<112x64xf32>
    %cst_19 = arith.constant 0.000000e+00 : f32
    %74 = vector.shape_cast %20 : vector<112x1xi1> to vector<112x1xi1>
    %75 = vector.broadcast %74 : vector<112x1xi1> to vector<112x64xi1>
    %76 = vector.broadcast %cst_19 : f32 to vector<112x64xf32>
    %77 = arith.select %75, %73, %76 : vector<112x64xi1>, vector<112x64xf32>
    %78 = vector.extract_strided_slice %70 {offsets = [1, 0], sizes = [111, 64], strides = [1, 1]} : vector<112x64xf32> to vector<111x64xf32>
    %79 = tpu.concatenate %78, %71 in 0 : vector<111x64xf32>, vector<1x64xf32> -> vector<112x64xf32>
    %cst_20 = arith.constant 0.000000e+00 : f32
    %80 = vector.shape_cast %22 : vector<112x1xi1> to vector<112x1xi1>
    %81 = vector.broadcast %80 : vector<112x1xi1> to vector<112x64xi1>
    %82 = vector.broadcast %cst_20 : f32 to vector<112x64xf32>
    %83 = arith.select %81, %79, %82 : vector<112x64xi1>, vector<112x64xf32>
    %84 = tpu.concatenate %77, %70, %83 in 1 : vector<112x64xf32>, vector<112x64xf32>, vector<112x64xf32> -> vector<112x192xf32>
    %85 = arith.truncf %84 : vector<112x192xf32> to vector<112x192xbf16>
    %c0_21 = arith.constant 0 : index
    %c0_22 = arith.constant 0 : index
    %c0_23 = arith.constant 0 : index
    %86 = vector.load %arg4[%c0_21, %c0_22, %c0_23] : memref<3x192x128xbf16, #tpu.memory_space<vmem>>, vector<1x192x128xbf16>
    %87 = vector.shape_cast %86 : vector<1x192x128xbf16> to vector<192x128xbf16>
    %cst_24 = arith.constant dense<0.000000e+00> : vector<112x128xf32>
    %88 = tpu.matmul %85, %87, %cst_24 {dimension_numbers = #tpu.dot_dimension_numbers<[1], [0], [0], [1], [0, 0, 1, 1], [], []>} : vector<112x192xbf16>, vector<192x128xbf16>, vector<112x128xf32> -> vector<112x128xf32>
    %c1 = arith.constant 1 : index
    %c0_25 = arith.constant 0 : index
    %c0_26 = arith.constant 0 : index
    %89 = vector.load %arg4[%c1, %c0_25, %c0_26] : memref<3x192x128xbf16, #tpu.memory_space<vmem>>, vector<1x192x128xbf16>
    %90 = vector.shape_cast %89 : vector<1x192x128xbf16> to vector<192x128xbf16>
    %cst_27 = arith.constant dense<0.000000e+00> : vector<112x128xf32>
    %91 = tpu.matmul %85, %90, %cst_27 {dimension_numbers = #tpu.dot_dimension_numbers<[1], [0], [0], [1], [0, 0, 1, 1], [], []>} : vector<112x192xbf16>, vector<192x128xbf16>, vector<112x128xf32> -> vector<112x128xf32>
    %c2 = arith.constant 2 : index
    %c0_28 = arith.constant 0 : index
    %c0_29 = arith.constant 0 : index
    %92 = vector.load %arg4[%c2, %c0_28, %c0_29] : memref<3x192x128xbf16, #tpu.memory_space<vmem>>, vector<1x192x128xbf16>
    %93 = vector.shape_cast %92 : vector<1x192x128xbf16> to vector<192x128xbf16>
    %cst_30 = arith.constant dense<0.000000e+00> : vector<112x128xf32>
    %94 = tpu.matmul %85, %93, %cst_30 {dimension_numbers = #tpu.dot_dimension_numbers<[1], [0], [0], [1], [0, 0, 1, 1], [], []>} : vector<112x192xbf16>, vector<192x128xbf16>, vector<112x128xf32> -> vector<112x128xf32>
    %cst_31 = arith.constant 0.000000e+00 : f32
    %95 = vector.broadcast %cst_31 : f32 to vector<8x128xf32>
    %96 = vector.extract_strided_slice %88 {offsets = [0, 0], sizes = [104, 128], strides = [1, 1]} : vector<112x128xf32> to vector<104x128xf32>
    %97 = tpu.concatenate %95, %96 in 0 : vector<8x128xf32>, vector<104x128xf32> -> vector<112x128xf32>
    %98 = arith.addf %91, %97 : vector<112x128xf32>
    %99 = vector.extract_strided_slice %94 {offsets = [8, 0], sizes = [104, 128], strides = [1, 1]} : vector<112x128xf32> to vector<104x128xf32>
    %100 = tpu.concatenate %99, %95 in 0 : vector<104x128xf32>, vector<8x128xf32> -> vector<112x128xf32>
    %101 = arith.addf %98, %100 : vector<112x128xf32>
    %c0_32 = arith.constant 0 : index
    %c0_33 = arith.constant 0 : index
    %102 = vector.load %arg5[%c0_32, %c0_33] : memref<1x128xf32, #tpu.memory_space<vmem>>, vector<1x128xf32>
    %103 = vector.broadcast %102 : vector<1x128xf32> to vector<112x128xf32>
    %104 = arith.addf %101, %103 : vector<112x128xf32>
    %cst_34 = arith.constant 0.000000e+00 : f32
    %105 = vector.broadcast %cst_34 : f32 to vector<112x128xf32>
    %106 = arith.maximumf %104, %105 : vector<112x128xf32>
    %cst_35 = arith.constant 0.000000e+00 : f32
    %107 = vector.shape_cast %34 : vector<112x1xi1> to vector<112x1xi1>
    %108 = vector.broadcast %107 : vector<112x1xi1> to vector<112x128xi1>
    %109 = vector.broadcast %cst_35 : f32 to vector<112x128xf32>
    %110 = arith.select %108, %106, %109 : vector<112x128xi1>, vector<112x128xf32>
    %cst_36 = arith.constant 0.000000e+00 : f32
    %111 = vector.broadcast %cst_36 : f32 to vector<1x128xf32>
    %112 = vector.extract_strided_slice %110 {offsets = [0, 0], sizes = [111, 128], strides = [1, 1]} : vector<112x128xf32> to vector<111x128xf32>
    %113 = tpu.concatenate %111, %112 in 0 : vector<1x128xf32>, vector<111x128xf32> -> vector<112x128xf32>
    %cst_37 = arith.constant 0.000000e+00 : f32
    %114 = vector.shape_cast %20 : vector<112x1xi1> to vector<112x1xi1>
    %115 = vector.broadcast %114 : vector<112x1xi1> to vector<112x128xi1>
    %116 = vector.broadcast %cst_37 : f32 to vector<112x128xf32>
    %117 = arith.select %115, %113, %116 : vector<112x128xi1>, vector<112x128xf32>
    %118 = vector.extract_strided_slice %110 {offsets = [1, 0], sizes = [111, 128], strides = [1, 1]} : vector<112x128xf32> to vector<111x128xf32>
    %119 = tpu.concatenate %118, %111 in 0 : vector<111x128xf32>, vector<1x128xf32> -> vector<112x128xf32>
    %cst_38 = arith.constant 0.000000e+00 : f32
    %120 = vector.shape_cast %22 : vector<112x1xi1> to vector<112x1xi1>
    %121 = vector.broadcast %120 : vector<112x1xi1> to vector<112x128xi1>
    %122 = vector.broadcast %cst_38 : f32 to vector<112x128xf32>
    %123 = arith.select %121, %119, %122 : vector<112x128xi1>, vector<112x128xf32>
    %124 = tpu.concatenate %117, %110, %123 in 1 : vector<112x128xf32>, vector<112x128xf32>, vector<112x128xf32> -> vector<112x384xf32>
    %125 = arith.truncf %124 : vector<112x384xf32> to vector<112x384xbf16>
    %c0_39 = arith.constant 0 : index
    %c0_40 = arith.constant 0 : index
    %c0_41 = arith.constant 0 : index
    %126 = vector.load %arg6[%c0_39, %c0_40, %c0_41] : memref<3x384x64xbf16, #tpu.memory_space<vmem>>, vector<1x384x64xbf16>
    %127 = vector.shape_cast %126 : vector<1x384x64xbf16> to vector<384x64xbf16>
    %cst_42 = arith.constant dense<0.000000e+00> : vector<112x64xf32>
    %128 = tpu.matmul %125, %127, %cst_42 {dimension_numbers = #tpu.dot_dimension_numbers<[1], [0], [0], [1], [0, 0, 1, 1], [], []>} : vector<112x384xbf16>, vector<384x64xbf16>, vector<112x64xf32> -> vector<112x64xf32>
    %c1_43 = arith.constant 1 : index
    %c0_44 = arith.constant 0 : index
    %c0_45 = arith.constant 0 : index
    %129 = vector.load %arg6[%c1_43, %c0_44, %c0_45] : memref<3x384x64xbf16, #tpu.memory_space<vmem>>, vector<1x384x64xbf16>
    %130 = vector.shape_cast %129 : vector<1x384x64xbf16> to vector<384x64xbf16>
    %cst_46 = arith.constant dense<0.000000e+00> : vector<112x64xf32>
    %131 = tpu.matmul %125, %130, %cst_46 {dimension_numbers = #tpu.dot_dimension_numbers<[1], [0], [0], [1], [0, 0, 1, 1], [], []>} : vector<112x384xbf16>, vector<384x64xbf16>, vector<112x64xf32> -> vector<112x64xf32>
    %c2_47 = arith.constant 2 : index
    %c0_48 = arith.constant 0 : index
    %c0_49 = arith.constant 0 : index
    %132 = vector.load %arg6[%c2_47, %c0_48, %c0_49] : memref<3x384x64xbf16, #tpu.memory_space<vmem>>, vector<1x384x64xbf16>
    %133 = vector.shape_cast %132 : vector<1x384x64xbf16> to vector<384x64xbf16>
    %cst_50 = arith.constant dense<0.000000e+00> : vector<112x64xf32>
    %134 = tpu.matmul %125, %133, %cst_50 {dimension_numbers = #tpu.dot_dimension_numbers<[1], [0], [0], [1], [0, 0, 1, 1], [], []>} : vector<112x384xbf16>, vector<384x64xbf16>, vector<112x64xf32> -> vector<112x64xf32>
    %cst_51 = arith.constant 0.000000e+00 : f32
    %135 = vector.broadcast %cst_51 : f32 to vector<8x64xf32>
    %136 = vector.extract_strided_slice %128 {offsets = [0, 0], sizes = [104, 64], strides = [1, 1]} : vector<112x64xf32> to vector<104x64xf32>
    %137 = tpu.concatenate %135, %136 in 0 : vector<8x64xf32>, vector<104x64xf32> -> vector<112x64xf32>
    %138 = arith.addf %131, %137 : vector<112x64xf32>
    %139 = vector.extract_strided_slice %134 {offsets = [8, 0], sizes = [104, 64], strides = [1, 1]} : vector<112x64xf32> to vector<104x64xf32>
    %140 = tpu.concatenate %139, %135 in 0 : vector<104x64xf32>, vector<8x64xf32> -> vector<112x64xf32>
    %141 = arith.addf %138, %140 : vector<112x64xf32>
    %c0_52 = arith.constant 0 : index
    %c0_53 = arith.constant 0 : index
    %142 = vector.load %arg7[%c0_52, %c0_53] : memref<1x64xf32, #tpu.memory_space<vmem>>, vector<1x64xf32>
    %143 = vector.broadcast %142 : vector<1x64xf32> to vector<112x64xf32>
    %144 = arith.addf %141, %143 : vector<112x64xf32>
    %cst_54 = arith.constant 0.000000e+00 : f32
    %145 = vector.broadcast %cst_54 : f32 to vector<112x64xf32>
    %146 = arith.maximumf %144, %145 : vector<112x64xf32>
    %cst_55 = arith.constant 0.000000e+00 : f32
    %147 = vector.shape_cast %34 : vector<112x1xi1> to vector<112x1xi1>
    %148 = vector.broadcast %147 : vector<112x1xi1> to vector<112x64xi1>
    %149 = vector.broadcast %cst_55 : f32 to vector<112x64xf32>
    %150 = arith.select %148, %146, %149 : vector<112x64xi1>, vector<112x64xf32>
    %cst_56 = arith.constant 0.000000e+00 : f32
    %151 = vector.broadcast %cst_56 : f32 to vector<1x64xf32>
    %152 = vector.extract_strided_slice %150 {offsets = [0, 0], sizes = [111, 64], strides = [1, 1]} : vector<112x64xf32> to vector<111x64xf32>
    %153 = tpu.concatenate %151, %152 in 0 : vector<1x64xf32>, vector<111x64xf32> -> vector<112x64xf32>
    %cst_57 = arith.constant 0.000000e+00 : f32
    %154 = vector.shape_cast %20 : vector<112x1xi1> to vector<112x1xi1>
    %155 = vector.broadcast %154 : vector<112x1xi1> to vector<112x64xi1>
    %156 = vector.broadcast %cst_57 : f32 to vector<112x64xf32>
    %157 = arith.select %155, %153, %156 : vector<112x64xi1>, vector<112x64xf32>
    %158 = vector.extract_strided_slice %150 {offsets = [1, 0], sizes = [111, 64], strides = [1, 1]} : vector<112x64xf32> to vector<111x64xf32>
    %159 = tpu.concatenate %158, %151 in 0 : vector<111x64xf32>, vector<1x64xf32> -> vector<112x64xf32>
    %cst_58 = arith.constant 0.000000e+00 : f32
    %160 = vector.shape_cast %22 : vector<112x1xi1> to vector<112x1xi1>
    %161 = vector.broadcast %160 : vector<112x1xi1> to vector<112x64xi1>
    %162 = vector.broadcast %cst_58 : f32 to vector<112x64xf32>
    %163 = arith.select %161, %159, %162 : vector<112x64xi1>, vector<112x64xf32>
    %164 = tpu.concatenate %157, %150, %163 in 1 : vector<112x64xf32>, vector<112x64xf32>, vector<112x64xf32> -> vector<112x192xf32>
    %165 = arith.truncf %164 : vector<112x192xf32> to vector<112x192xbf16>
    %c0_59 = arith.constant 0 : index
    %c0_60 = arith.constant 0 : index
    %c0_61 = arith.constant 0 : index
    %166 = vector.load %arg8[%c0_59, %c0_60, %c0_61] : memref<3x192x16xbf16, #tpu.memory_space<vmem>>, vector<1x192x16xbf16>
    %167 = vector.shape_cast %166 : vector<1x192x16xbf16> to vector<192x16xbf16>
    %cst_62 = arith.constant dense<0.000000e+00> : vector<112x16xf32>
    %168 = tpu.matmul %165, %167, %cst_62 {dimension_numbers = #tpu.dot_dimension_numbers<[1], [0], [0], [1], [0, 0, 1, 1], [], []>} : vector<112x192xbf16>, vector<192x16xbf16>, vector<112x16xf32> -> vector<112x16xf32>
    %c1_63 = arith.constant 1 : index
    %c0_64 = arith.constant 0 : index
    %c0_65 = arith.constant 0 : index
    %169 = vector.load %arg8[%c1_63, %c0_64, %c0_65] : memref<3x192x16xbf16, #tpu.memory_space<vmem>>, vector<1x192x16xbf16>
    %170 = vector.shape_cast %169 : vector<1x192x16xbf16> to vector<192x16xbf16>
    %cst_66 = arith.constant dense<0.000000e+00> : vector<112x16xf32>
    %171 = tpu.matmul %165, %170, %cst_66 {dimension_numbers = #tpu.dot_dimension_numbers<[1], [0], [0], [1], [0, 0, 1, 1], [], []>} : vector<112x192xbf16>, vector<192x16xbf16>, vector<112x16xf32> -> vector<112x16xf32>
    %c2_67 = arith.constant 2 : index
    %c0_68 = arith.constant 0 : index
    %c0_69 = arith.constant 0 : index
    %172 = vector.load %arg8[%c2_67, %c0_68, %c0_69] : memref<3x192x16xbf16, #tpu.memory_space<vmem>>, vector<1x192x16xbf16>
    %173 = vector.shape_cast %172 : vector<1x192x16xbf16> to vector<192x16xbf16>
    %cst_70 = arith.constant dense<0.000000e+00> : vector<112x16xf32>
    %174 = tpu.matmul %165, %173, %cst_70 {dimension_numbers = #tpu.dot_dimension_numbers<[1], [0], [0], [1], [0, 0, 1, 1], [], []>} : vector<112x192xbf16>, vector<192x16xbf16>, vector<112x16xf32> -> vector<112x16xf32>
    %cst_71 = arith.constant 0.000000e+00 : f32
    %175 = vector.broadcast %cst_71 : f32 to vector<8x16xf32>
    %176 = vector.extract_strided_slice %168 {offsets = [0, 0], sizes = [104, 16], strides = [1, 1]} : vector<112x16xf32> to vector<104x16xf32>
    %177 = tpu.concatenate %175, %176 in 0 : vector<8x16xf32>, vector<104x16xf32> -> vector<112x16xf32>
    %178 = arith.addf %171, %177 : vector<112x16xf32>
    %179 = vector.extract_strided_slice %174 {offsets = [8, 0], sizes = [104, 16], strides = [1, 1]} : vector<112x16xf32> to vector<104x16xf32>
    %180 = tpu.concatenate %179, %175 in 0 : vector<104x16xf32>, vector<8x16xf32> -> vector<112x16xf32>
    %181 = arith.addf %178, %180 : vector<112x16xf32>
    %c0_72 = arith.constant 0 : index
    %c0_73 = arith.constant 0 : index
    %182 = vector.load %arg9[%c0_72, %c0_73] : memref<1x16xf32, #tpu.memory_space<vmem>>, vector<1x16xf32>
    %183 = vector.broadcast %182 : vector<1x16xf32> to vector<112x16xf32>
    %184 = arith.addf %181, %183 : vector<112x16xf32>
    %cst_74 = arith.constant 0.000000e+00 : f32
    %185 = vector.broadcast %cst_74 : f32 to vector<112x16xf32>
    %186 = arith.maximumf %184, %185 : vector<112x16xf32>
    %cst_75 = arith.constant 0.000000e+00 : f32
    %187 = vector.shape_cast %34 : vector<112x1xi1> to vector<112x1xi1>
    %188 = vector.broadcast %187 : vector<112x1xi1> to vector<112x16xi1>
    %189 = vector.broadcast %cst_75 : f32 to vector<112x16xf32>
    %190 = arith.select %188, %186, %189 : vector<112x16xi1>, vector<112x16xf32>
    %c0_76 = arith.constant 0 : index
    %c0_77 = arith.constant 0 : index
    %191 = vector.load %arg10[%c0_76, %c0_77] : memref<1x16xf32, #tpu.memory_space<vmem>>, vector<1x16xf32>
    %192 = vector.broadcast %191 : vector<1x16xf32> to vector<112x16xf32>
    %193 = arith.mulf %190, %192 : vector<112x16xf32>
    %194 = vector.shape_cast %193 : vector<112x16xf32> to vector<14x8x16xf32>
    %cst_78 = arith.constant dense<0.000000e+00> : vector<14x8xf32>
    %195 = vector.multi_reduction <add>, %194, %cst_78 [2] : vector<14x8x16xf32> to vector<14x8xf32>
    %c0_79 = arith.constant 0 : index
    %c0_80 = arith.constant 0 : index
    %196 = vector.load %arg11[%c0_79, %c0_80] : memref<1x1xf32, #tpu.memory_space<vmem>>, vector<1x1xf32>
    %197 = vector.broadcast %196 : vector<1x1xf32> to vector<14x8xf32>
    %198 = arith.addf %195, %197 : vector<14x8xf32>
    %cst_81 = arith.constant 0.000000e+00 : f32
    %199 = vector.broadcast %cst_81 : f32 to vector<14x8xf32>
    %200 = arith.maximumf %198, %199 : vector<14x8xf32>
    %201 = vector.broadcast %arg1 : i32 to vector<1x8xi32>
    %202 = arith.cmpi sge, %54, %201 : vector<1x8xi32>
    %cst_82 = arith.constant 0.000000e+00 : f32
    %203 = vector.shape_cast %202 : vector<1x8xi1> to vector<1x8xi1>
    %204 = vector.broadcast %203 : vector<1x8xi1> to vector<14x8xi1>
    %205 = vector.broadcast %cst_82 : f32 to vector<14x8xf32>
    %206 = arith.select %204, %200, %205 : vector<14x8xi1>, vector<14x8xf32>
    %207 = vector.extract_strided_slice %206 {offsets = [3, 0], sizes = [8, 8], strides = [1, 1]} : vector<14x8xf32> to vector<8x8xf32>
    %c0_83 = arith.constant 0 : index
    %c0_84 = arith.constant 0 : index
    %c0_85 = arith.constant 0 : index
    %c0_86 = arith.constant 0 : index
    %208 = vector.load %arg12[%c0_83, %c0_84, %c0_85, %c0_86] : memref<1x1x8x8xf32, #tpu.memory_space<vmem>>, vector<1x1x8x8xf32>
    %209 = vector.shape_cast %208 : vector<1x1x8x8xf32> to vector<8x8xf32>
    %210 = vector.shape_cast %207 : vector<8x8xf32> to vector<1x1x8x8xf32>
    tpu.vector_store %arg12[%c0_83, %c0_84, %c0_85, %c0_86], %210 {strides = array<i32>} : memref<1x1x8x8xf32, #tpu.memory_space<vmem>>, vector<1x1x8x8xf32>,
    return
  }
  func.func @transform_0(%arg0: i32, %arg1: i32, %arg2: i32) -> (i32, i32, i32) {
    %c0_i32 = arith.constant 0 : i32
    %c0_i32_0 = arith.constant 0 : i32
    %c0_i32_1 = arith.constant 0 : i32
    return %arg0, %c0_i32, %c0_i32_0 : i32, i32, i32
  }
  func.func @transform_1(%arg0: i32, %arg1: i32, %arg2: i32) -> (i32, i32, i32) {
    %c0_i32 = arith.constant 0 : i32
    %c0_i32_0 = arith.constant 0 : i32
    %c0_i32_1 = arith.constant 0 : i32
    %c0_i32_2 = arith.constant 0 : i32
    return %c0_i32, %c0_i32_0, %c0_i32_1 : i32, i32, i32
  }
  func.func @transform_2(%arg0: i32, %arg1: i32, %arg2: i32) -> (i32, i32) {
    %c0_i32 = arith.constant 0 : i32
    %c0_i32_0 = arith.constant 0 : i32
    %c0_i32_1 = arith.constant 0 : i32
    return %c0_i32, %c0_i32_0 : i32, i32
  }
  func.func @transform_3(%arg0: i32, %arg1: i32, %arg2: i32) -> (i32, i32, i32) {
    %c0_i32 = arith.constant 0 : i32
    %c0_i32_0 = arith.constant 0 : i32
    %c0_i32_1 = arith.constant 0 : i32
    %c0_i32_2 = arith.constant 0 : i32
    return %c0_i32, %c0_i32_0, %c0_i32_1 : i32, i32, i32
  }
  func.func @transform_4(%arg0: i32, %arg1: i32, %arg2: i32) -> (i32, i32) {
    %c0_i32 = arith.constant 0 : i32
    %c0_i32_0 = arith.constant 0 : i32
    %c0_i32_1 = arith.constant 0 : i32
    return %c0_i32, %c0_i32_0 : i32, i32
  }
  func.func @transform_5(%arg0: i32, %arg1: i32, %arg2: i32) -> (i32, i32, i32) {
    %c0_i32 = arith.constant 0 : i32
    %c0_i32_0 = arith.constant 0 : i32
    %c0_i32_1 = arith.constant 0 : i32
    %c0_i32_2 = arith.constant 0 : i32
    return %c0_i32, %c0_i32_0, %c0_i32_1 : i32, i32, i32
  }
  func.func @transform_6(%arg0: i32, %arg1: i32, %arg2: i32) -> (i32, i32) {
    %c0_i32 = arith.constant 0 : i32
    %c0_i32_0 = arith.constant 0 : i32
    %c0_i32_1 = arith.constant 0 : i32
    return %c0_i32, %c0_i32_0 : i32, i32
  }
  func.func @transform_7(%arg0: i32, %arg1: i32, %arg2: i32) -> (i32, i32) {
    %c0_i32 = arith.constant 0 : i32
    %c0_i32_0 = arith.constant 0 : i32
    %c0_i32_1 = arith.constant 0 : i32
    return %c0_i32, %c0_i32_0 : i32, i32
  }
  func.func @transform_8(%arg0: i32, %arg1: i32, %arg2: i32) -> (i32, i32) {
    %c0_i32 = arith.constant 0 : i32
    %c0_i32_0 = arith.constant 0 : i32
    %c0_i32_1 = arith.constant 0 : i32
    return %c0_i32, %c0_i32_0 : i32, i32
  }
  func.func @transform_9(%arg0: i32, %arg1: i32, %arg2: i32) -> (i32, i32, i32, i32) {
    %c0_i32 = arith.constant 0 : i32
    %c0_i32_0 = arith.constant 0 : i32
    return %arg0, %arg1, %arg2, %c0_i32 : i32, i32, i32, i32
  }
}

</mosaic_0001>

<llo_original>
// kernel: tpu_custom_call.1
$region0: #{tpu_custom_call.1}
  #allocation0 [shape = 'u32[]', space=smem, size = 0x4, offset = 0x4, fixed_abs, tag = 'smem constant byte address 0x4 - core index']
  #allocation1 [shape = 'u32[72,128]{1,0:T(1,128)}', space=vmem, size = 0x9000, scoped, tag = 'internal scratch']
  #allocation2 [shape = 'f32[1,1]{1,0:T(1,128)S(1)}', space=vmem, size = 0x200, scoped, tag = 'scoped memory for tpu_custom_call.1']
  %s0 = inlined_call_operand.vmem [shape: f32[2,184,64], index: 0, kind: input, shape index: {}]
  %s1 = inlined_call_operand.vmem [shape: bf16[3,192,128], index: 1, kind: input, shape index: {}]
  %s2 = inlined_call_operand.vmem [shape: f32[1,128], index: 2, kind: input, shape index: {}]
  %s3 = inlined_call_operand.vmem [shape: bf16[3,384,64], index: 3, kind: input, shape index: {}]
  %s4 = inlined_call_operand.vmem [shape: f32[1,64], index: 4, kind: input, shape index: {}]
  %s5 = inlined_call_operand.vmem [shape: bf16[3,192,16], index: 5, kind: input, shape index: {}]
  %s6 = inlined_call_operand.vmem [shape: f32[1,16], index: 6, kind: input, shape index: {}]
  %s7 = inlined_call_operand.vmem [shape: f32[1,16], index: 7, kind: input, shape index: {}]
  %s8 = inlined_call_operand.<no memory space> [shape: f32[1,1], index: 8, kind: input, shape index: {}]
  %s9 = inlined_call_operand.vmem [shape: f32[2,4,16,8], index: 9, kind: output, shape index: {}]
  %s10 = sld [smem:[#allocation0]]
  $region69: #{tpu_custom_call.1} parent=0
    _
  %s12 = ssub.s32 1, %s10
  %s13 = scalar_select 0, %s12, %s10
  %v14 = vstv %s8
  %15 = vst [vmem:[#allocation2] sm:$0x1] %v14
  loop: start=0, step=1, limit=18
  $region2: #{tpu_custom_call.1} parent=0 // loop_pre_header
    _
  $region3: #{tpu_custom_call.1} parent=0 // loop_header
    %s17 = sphi 0, %s21
    %p18 = scmp.ge.s32.totalorder %s17, 18
    %s24 = sphi 0, %s43
    %s25 = sphi 0, %s39
    %s26 = sphi 0, %s35
    %s27 = sphi 0, %s24
    %s28 = sphi 0, %s25
    %s29 = sphi 0, %s26
    %s30 = sphi 0, %s27
    %s31 = sphi 0, %s28
    %s32 = sphi 0, %s29
    %s46 = sphi 0, %s48
    %s49 = sphi 0, %s46
    %s50 = sphi 0, %s49
    %s66 = sphi 0, %s50
    %s70 = sphi 0, %s70
    %s72 = sphi 0, %s70
    %s73 = sphi 0, %s72
    %s87 = sphi 0, %s73
    %s91 = sphi 0, %s91
    %s93 = sphi 0, %s91
    %s94 = sphi 0, %s93
    %s108 = sphi 0, %s94
    %s112 = sphi 0, %s112
    %s114 = sphi 0, %s112
    %s115 = sphi 0, %s114
    %s129 = sphi 0, %s115
    %s133 = sphi 0, %s133
    %s135 = sphi 0, %s133
    %s136 = sphi 0, %s135
    %s150 = sphi 0, %s136
    %s154 = sphi 0, %s154
    %s156 = sphi 0, %s154
    %s157 = sphi 0, %s156
    %s171 = sphi 0, %s157
    %s175 = sphi 0, %s175
    %s177 = sphi 0, %s175
    %s178 = sphi 0, %s177
    %s192 = sphi 0, %s178
    %s196 = sphi 0, %s196
    %s198 = sphi 0, %s196
    %s199 = sphi 0, %s198
    %s213 = sphi 0, %s199
    %s217 = sphi 0, %s217
    %s219 = sphi 0, %s217
    %s220 = sphi 0, %s219
    %s234 = sphi 0, %s220
    %s244 = sphi 0, %s246
    %s247 = sphi 0, %s244
    %s248 = sphi 0, %s247
    %s264 = sphi 0, %s248
  $region4: #{tpu_custom_call.1} parent=0 // loop_header_branch
    %20 = sbr.rel (%p18) target = $region8
  $region5: #{tpu_custom_call.1} parent=0 // loop_body
    %s22 = ssub.s32 %s17, 1
    %s23 = ssub.s32 %s17, 2
    %s33 = sadd.s32 1, %s26
    %p34 = scmp.ge.s32.totalorder %s33, 2
    %s35 = scalar_select %p34, 0, %s33
    %s36 = sadd.s32 1, %s25
    %s37 = scalar_select %p34, %s36, %s25
    %p38 = scmp.ge.s32.totalorder %s37, 4
    %s39 = scalar_select %p38, 0, %s37
    %s40 = sadd.s32 1, %s24
    %s41 = scalar_select %p38, %s40, %s24
    %p42 = scmp.ge.s32.totalorder %s41, 2
    %s43 = scalar_select %p42, 0, %s41
    %s44 = ssub.s32 %s24, %s43
    %p45 = scmp.eq.s32.totalorder %s44, 0
    %s47 = sadd.s32 %s46, 1
    %s48 = scalar_select %p45, %s46, %s47
    %p51 = pneg %p45
    %p52 = scmp.eq.s32.totalorder %s17, 15
    %p53 = por %p51, %p52
    %p54 = scmp.ne.s32.totalorder %s46, %s49
    %p55 = scmp.eq.s32.totalorder %s17, 0
    %p56 = por %p54, %p55
    %p57 = scmp.ne.s32.totalorder %s46, %s49
    %p58 = scmp.eq.s32.totalorder %s22, 15
    %p59 = por %p57, %p58
    %p60 = scmp.ne.s32.totalorder %s49, %s50
    %p61 = scmp.eq.s32.totalorder %s22, 0
    %p62 = por %p60, %p61
    %p63 = scmp.ne.s32.totalorder %s49, %s50
    %p64 = scmp.eq.s32.totalorder %s23, 15
    %p65 = por %p63, %p64
    %p67 = scmp.ne.s32.totalorder %s50, %s66
    %p68 = scmp.eq.s32.totalorder %s23, 0
    %p69 = por %p67, %p68
    %s71 = sadd.s32 %s70, 1
    %p74 = scmp.eq.s32.totalorder %s17, 15
    %p75 = scmp.ne.s32.totalorder %s70, %s72
    %p76 = scmp.eq.s32.totalorder %s17, 0
    %p77 = por %p75, %p76
    %p78 = scmp.ne.s32.totalorder %s70, %s72
    %p79 = scmp.eq.s32.totalorder %s22, 15
    %p80 = por %p78, %p79
    %p81 = scmp.ne.s32.totalorder %s72, %s73
    %p82 = scmp.eq.s32.totalorder %s22, 0
    %p83 = por %p81, %p82
    %p84 = scmp.ne.s32.totalorder %s72, %s73
    %p85 = scmp.eq.s32.totalorder %s23, 15
    %p86 = por %p84, %p85
    %p88 = scmp.ne.s32.totalorder %s73, %s87
    %p89 = scmp.eq.s32.totalorder %s23, 0
    %p90 = por %p88, %p89
    %s92 = sadd.s32 %s91, 1
    %p95 = scmp.eq.s32.totalorder %s17, 15
    %p96 = scmp.ne.s32.totalorder %s91, %s93
    %p97 = scmp.eq.s32.totalorder %s17, 0
    %p98 = por %p96, %p97
    %p99 = scmp.ne.s32.totalorder %s91, %s93
    %p100 = scmp.eq.s32.totalorder %s22, 15
    %p101 = por %p99, %p100
    %p102 = scmp.ne.s32.totalorder %s93, %s94
    %p103 = scmp.eq.s32.totalorder %s22, 0
    %p104 = por %p102, %p103
    %p105 = scmp.ne.s32.totalorder %s93, %s94
    %p106 = scmp.eq.s32.totalorder %s23, 15
    %p107 = por %p105, %p106
    %p109 = scmp.ne.s32.totalorder %s94, %s108
    %p110 = scmp.eq.s32.totalorder %s23, 0
    %p111 = por %p109, %p110
    %s113 = sadd.s32 %s112, 1
    %p116 = scmp.eq.s32.totalorder %s17, 15
    %p117 = scmp.ne.s32.totalorder %s112, %s114
    %p118 = scmp.eq.s32.totalorder %s17, 0
    %p119 = por %p117, %p118
    %p120 = scmp.ne.s32.totalorder %s112, %s114
    %p121 = scmp.eq.s32.totalorder %s22, 15
    %p122 = por %p120, %p121
    %p123 = scmp.ne.s32.totalorder %s114, %s115
    %p124 = scmp.eq.s32.totalorder %s22, 0
    %p125 = por %p123, %p124
    %p126 = scmp.ne.s32.totalorder %s114, %s115
    %p127 = scmp.eq.s32.totalorder %s23, 15
    %p128 = por %p126, %p127
    %p130 = scmp.ne.s32.totalorder %s115, %s129
    %p131 = scmp.eq.s32.totalorder %s23, 0
    %p132 = por %p130, %p131
    %s134 = sadd.s32 %s133, 1
    %p137 = scmp.eq.s32.totalorder %s17, 15
    %p138 = scmp.ne.s32.totalorder %s133, %s135
    %p139 = scmp.eq.s32.totalorder %s17, 0
    %p140 = por %p138, %p139
    %p141 = scmp.ne.s32.totalorder %s133, %s135
    %p142 = scmp.eq.s32.totalorder %s22, 15
    %p143 = por %p141, %p142
    %p144 = scmp.ne.s32.totalorder %s135, %s136
    %p145 = scmp.eq.s32.totalorder %s22, 0
    %p146 = por %p144, %p145
    %p147 = scmp.ne.s32.totalorder %s135, %s136
    %p148 = scmp.eq.s32.totalorder %s23, 15
    %p149 = por %p147, %p148
    %p151 = scmp.ne.s32.totalorder %s136, %s150
    %p152 = scmp.eq.s32.totalorder %s23, 0
    %p153 = por %p151, %p152
    %s155 = sadd.s32 %s154, 1
    %p158 = scmp.eq.s32.totalorder %s17, 15
    %p159 = scmp.ne.s32.totalorder %s154, %s156
    %p160 = scmp.eq.s32.totalorder %s17, 0
    %p161 = por %p159, %p160
    %p162 = scmp.ne.s32.totalorder %s154, %s156
    %p163 = scmp.eq.s32.totalorder %s22, 15
    %p164 = por %p162, %p163
    %p165 = scmp.ne.s32.totalorder %s156, %s157
    %p166 = scmp.eq.s32.totalorder %s22, 0
    %p167 = por %p165, %p166
    %p168 = scmp.ne.s32.totalorder %s156, %s157
    %p169 = scmp.eq.s32.totalorder %s23, 15
    %p170 = por %p168, %p169
    %p172 = scmp.ne.s32.totalorder %s157, %s171
    %p173 = scmp.eq.s32.totalorder %s23, 0
    %p174 = por %p172, %p173
    %s176 = sadd.s32 %s175, 1
    %p179 = scmp.eq.s32.totalorder %s17, 15
    %p180 = scmp.ne.s32.totalorder %s175, %s177
    %p181 = scmp.eq.s32.totalorder %s17, 0
    %p182 = por %p180, %p181
    %p183 = scmp.ne.s32.totalorder %s175, %s177
    %p184 = scmp.eq.s32.totalorder %s22, 15
    %p185 = por %p183, %p184
    %p186 = scmp.ne.s32.totalorder %s177, %s178
    %p187 = scmp.eq.s32.totalorder %s22, 0
    %p188 = por %p186, %p187
    %p189 = scmp.ne.s32.totalorder %s177, %s178
    %p190 = scmp.eq.s32.totalorder %s23, 15
    %p191 = por %p189, %p190
    %p193 = scmp.ne.s32.totalorder %s178, %s192
    %p194 = scmp.eq.s32.totalorder %s23, 0
    %p195 = por %p193, %p194
    %s197 = sadd.s32 %s196, 1
    %p200 = scmp.eq.s32.totalorder %s17, 15
    %p201 = scmp.ne.s32.totalorder %s196, %s198
    %p202 = scmp.eq.s32.totalorder %s17, 0
    %p203 = por %p201, %p202
    %p204 = scmp.ne.s32.totalorder %s196, %s198
    %p205 = scmp.eq.s32.totalorder %s22, 15
    %p206 = por %p204, %p205
    %p207 = scmp.ne.s32.totalorder %s198, %s199
    %p208 = scmp.eq.s32.totalorder %s22, 0
    %p209 = por %p207, %p208
    %p210 = scmp.ne.s32.totalorder %s198, %s199
    %p211 = scmp.eq.s32.totalorder %s23, 15
    %p212 = por %p210, %p211
    %p214 = scmp.ne.s32.totalorder %s199, %s213
    %p215 = scmp.eq.s32.totalorder %s23, 0
    %p216 = por %p214, %p215
    %s218 = sadd.s32 %s217, 1
    %p221 = scmp.eq.s32.totalorder %s17, 15
    %p222 = scmp.ne.s32.totalorder %s217, %s219
    %p223 = scmp.eq.s32.totalorder %s17, 0
    %p224 = por %p222, %p223
    %p225 = scmp.ne.s32.totalorder %s217, %s219
    %p226 = scmp.eq.s32.totalorder %s22, 15
    %p227 = por %p225, %p226
    %p228 = scmp.ne.s32.totalorder %s219, %s220
    %p229 = scmp.eq.s32.totalorder %s22, 0
    %p230 = por %p228, %p229
    %p231 = scmp.ne.s32.totalorder %s219, %s220
    %p232 = scmp.eq.s32.totalorder %s23, 15
    %p233 = por %p231, %p232
    %p235 = scmp.ne.s32.totalorder %s220, %s234
    %p236 = scmp.eq.s32.totalorder %s23, 0
    %p237 = por %p235, %p236
    %s238 = ssub.s32 %s24, %s43
    %s239 = ssub.s32 %s25, %s39
    %s240 = sor.u32 %s238, %s239
    %s241 = ssub.s32 %s26, %s35
    %s242 = sor.u32 %s240, %s241
    %p243 = scmp.eq.s32.totalorder %s242, 0
    %s245 = sadd.s32 %s244, 1
    %s246 = scalar_select %p243, %s244, %s245
    %p249 = pneg %p243
    %p250 = scmp.eq.s32.totalorder %s17, 15
    %p251 = por %p249, %p250
    %p252 = scmp.ne.s32.totalorder %s244, %s247
    %p253 = scmp.eq.s32.totalorder %s17, 0
    %p254 = por %p252, %p253
    %p255 = scmp.ne.s32.totalorder %s244, %s247
    %p256 = scmp.eq.s32.totalorder %s22, 15
    %p257 = por %p255, %p256
    %p258 = scmp.ne.s32.totalorder %s247, %s248
    %p259 = scmp.eq.s32.totalorder %s22, 0
    %p260 = por %p258, %p259
    %p261 = scmp.ne.s32.totalorder %s247, %s248
    %p262 = scmp.eq.s32.totalorder %s23, 15
    %p263 = por %p261, %p262
    %p265 = scmp.ne.s32.totalorder %s248, %s264
    %p266 = scmp.eq.s32.totalorder %s23, 0
    %p267 = por %p265, %p266
    %p268 = scmp.le.s32.totalorder 1, %s17
    %p269 = scmp.lt.s32.totalorder %s17, 17
    %p270 = pnand %p268, %p269
    %p271 = pneg %p270
    // Predicated region
    $region9: #{tpu_custom_call.1} parent=5 // pred_check
      _
    $region10: #{tpu_custom_call.1} parent=5 // pred_check_branch
      %273 = sbr.rel (%p270) target = $region12
    $region11: #{tpu_custom_call.1} parent=5 // pred_region
      %s274 = ssub.s32 %s17, 1
      // Predicated region
      $region13: #{tpu_custom_call.1} parent=11 // pred_check
        %p275 = pneg %p62
      $region14: #{tpu_custom_call.1} parent=11 // pred_check_branch
        %277 = sbr.rel (%p275) target = $region16
      $region15: #{tpu_custom_call.1} parent=11 // pred_region
        %p278 = scmp.lt.s32.totalorder %s27, 1
        %s279 = scalar_select %p278, %s27, 1
        %s280 = smul.addr %s279, 23
        %s281 = smul.addr %s280, 8
        %s282 = scalar_lea.vmem %s0, %s281
      $region16: #{tpu_custom_call.1} parent=11 // pred_fallthru
        _
      // Predicated region
      $region17: #{tpu_custom_call.1} parent=11 // pred_check
        %p283 = pneg %p83
      $region18: #{tpu_custom_call.1} parent=11 // pred_check_branch
        %285 = sbr.rel (%p283) target = $region20
      $region19: #{tpu_custom_call.1} parent=11 // pred_region
        _
      $region20: #{tpu_custom_call.1} parent=11 // pred_fallthru
        _
      // Predicated region
      $region21: #{tpu_custom_call.1} parent=11 // pred_check
        %p286 = pneg %p104
      $region22: #{tpu_custom_call.1} parent=11 // pred_check_branch
        %288 = sbr.rel (%p286) target = $region24
      $region23: #{tpu_custom_call.1} parent=11 // pred_region
        _
      $region24: #{tpu_custom_call.1} parent=11 // pred_fallthru
        _
      // Predicated region
      $region25: #{tpu_custom_call.1} parent=11 // pred_check
        %p289 = pneg %p125
      $region26: #{tpu_custom_call.1} parent=11 // pred_check_branch
        %291 = sbr.rel (%p289) target = $region28
      $region27: #{tpu_custom_call.1} parent=11 // pred_region
        _
      $region28: #{tpu_custom_call.1} parent=11 // pred_fallthru
        _
      // Predicated region
      $region29: #{tpu_custom_call.1} parent=11 // pred_check
        %p292 = pneg %p146
      $region30: #{tpu_custom_call.1} parent=11 // pred_check_branch
        %294 = sbr.rel (%p292) target = $region32
      $region31: #{tpu_custom_call.1} parent=11 // pred_region
        _
      $region32: #{tpu_custom_call.1} parent=11 // pred_fallthru
        _
      // Predicated region
      $region33: #{tpu_custom_call.1} parent=11 // pred_check
        %p295 = pneg %p167
      $region34: #{tpu_custom_call.1} parent=11 // pred_check_branch
        %297 = sbr.rel (%p295) target = $region36
      $region35: #{tpu_custom_call.1} parent=11 // pred_region
        _
      $region36: #{tpu_custom_call.1} parent=11 // pred_fallthru
        _
      // Predicated region
      $region37: #{tpu_custom_call.1} parent=11 // pred_check
        %p298 = pneg %p188
      $region38: #{tpu_custom_call.1} parent=11 // pred_check_branch
        %300 = sbr.rel (%p298) target = $region40
      $region39: #{tpu_custom_call.1} parent=11 // pred_region
        _
      $region40: #{tpu_custom_call.1} parent=11 // pred_fallthru
        _
      // Predicated region
      $region41: #{tpu_custom_call.1} parent=11 // pred_check
        %p301 = pneg %p209
      $region42: #{tpu_custom_call.1} parent=11 // pred_check_branch
        %303 = sbr.rel (%p301) target = $region44
      $region43: #{tpu_custom_call.1} parent=11 // pred_region
        _
      $region44: #{tpu_custom_call.1} parent=11 // pred_fallthru
        _
      // Predicated region
      $region45: #{tpu_custom_call.1} parent=11 // pred_check
        %p304 = pneg %p230
      $region46: #{tpu_custom_call.1} parent=11 // pred_check_branch
        %306 = sbr.rel (%p304) target = $region48
      $region47: #{tpu_custom_call.1} parent=11 // pred_region
        _
      $region48: #{tpu_custom_call.1} parent=11 // pred_fallthru
        _
    $region12: #{tpu_custom_call.1} parent=5 // pred_fallthru
      _
    %p307 = scmp.lt.s32.totalorder %s17, 16
    // Predicated region
    $region49: #{tpu_custom_call.1} parent=5 // pred_check
      %p308 = pneg %p307
    $region50: #{tpu_custom_call.1} parent=5 // pred_check_branch
      %310 = sbr.rel (%p308) target = $region52
    $region51: #{tpu_custom_call.1} parent=5 // pred_region
      _
    $region52: #{tpu_custom_call.1} parent=5 // pred_fallthru
      _
    %p311 = scmp.le.s32.totalorder 1, %s17
    %p312 = scmp.lt.s32.totalorder %s17, 17
    %p313 = pnand %p311, %p312
    %p314 = pneg %p313
    // Predicated region
    $region53: #{tpu_custom_call.1} parent=5 // pred_check
      _
    $region54: #{tpu_custom_call.1} parent=5 // pred_check_branch
      %316 = sbr.rel (%p313) target = $region56
    $region55: #{tpu_custom_call.1} parent=5 // pred_region
      %s317 = ssub.s32 %s17, 1
      %p318 = scmp.lt.s32.totalorder %s27, 1
      %s319 = scalar_select %p318, %s27, 1
      %s320 = smul.addr %s319, 23
      %s321 = smul.addr %s320, 8
      %s322 = scalar_lea.vmem %s0, %s321
      %p323 = pneg %p62
      %p324 = pneg %p59
      %p325 = pneg %p83
      %p326 = pneg %p80
      %p327 = pneg %p104
      %p328 = pneg %p101
      %p329 = pneg %p125
      %p330 = pneg %p122
      %p331 = pneg %p146
      %p332 = pneg %p143
      %p333 = pneg %p167
      %p334 = pneg %p164
      %p335 = pneg %p188
      %p336 = pneg %p185
      %p337 = pneg %p209
      %p338 = pneg %p206
      %p339 = pneg %p230
      %p340 = pneg %p227
      %p341 = pneg %p260
      %p342 = pneg %p257
      %p343 = scmp.lt.s32.totalorder %s27, 1
      %s344 = scalar_select %p343, %s27, 1
      %p345 = scmp.lt.s32.totalorder %s28, 3
      %s346 = scalar_select %p345, %s28, 3
      %p347 = scmp.lt.s32.totalorder %s29, 1
      %s348 = scalar_select %p347, %s29, 1
      %s349 = smul.addr %s346, 2
      %s350 = sadd.s32 %s348, %s349
      %s351 = smul.addr %s344, 8
      %s352 = sadd.s32 %s350, %s351
      %s353 = smul.addr %s352, 8
      %s354 = scalar_lea.vmem %s9, %s353
      %p355 = scmp.lt.s32.totalorder %s27, 1
      %s356 = scalar_select %p355, %s27, 1
      %s357 = smul.addr %s356, 23
      %s358 = smul.addr %s357, 8
      %s359 = scalar_lea.vmem %s0, %s358
      %p360 = scmp.lt.s32.totalorder %s27, 1
      %s361 = scalar_select %p360, %s27, 1
      %p362 = scmp.lt.s32.totalorder %s28, 3
      %s363 = scalar_select %p362, %s28, 3
      %p364 = scmp.lt.s32.totalorder %s29, 1
      %s365 = scalar_select %p364, %s29, 1
      %s366 = smul.addr %s363, 2
      %s367 = sadd.s32 %s365, %s366
      %s368 = smul.addr %s361, 8
      %s369 = sadd.s32 %s367, %s368
      %s370 = smul.addr %s369, 8
      %s371 = scalar_lea.vmem %s9, %s370
      %s373 = smul.u32 %s29, 8
      %s374 = ssub.s32 %s373, 3
      %v375 = vlaneseq
      %v376 = vshrl.u32 %v375, 7
      %v377 = vadd.s32 %v376, 8
      %v378 = vadd.s32 %v376, 16
      %v379 = vadd.s32 %v376, 24
      %v380 = vadd.s32 %v376, 32
      %v381 = vadd.s32 %v376, 40
      %v382 = vadd.s32 %v376, 48
      %v383 = vadd.s32 %v376, 56
      %v384 = vadd.s32 %v376, 64
      %v385 = vadd.s32 %v376, 72
      %v386 = vadd.s32 %v376, 80
      %v387 = vadd.s32 %v376, 88
      %v388 = vadd.s32 %v376, 96
      %v389 = vadd.s32 %v376, 104
      %vm390 = vcmp.lt.s32.totalorder %v376, 0
      %v391 = vsub.s32 0, %v376
      %v392 = vsel %vm390, %v391, %v376
      %v393 = vshrl.u32 %v392, 3
      %v394 = vand.u32 %v392, 7
      %v395 = vsub.s32 0, %v394
      %v396 = vsel %vm390, %v395, %v394
      %vm397 = vcmp.lt.s32.totalorder %v377, 0
      %v398 = vsub.s32 0, %v377
      %v399 = vsel %vm397, %v398, %v377
      %v400 = vshrl.u32 %v399, 3
      %v401 = vand.u32 %v399, 7
      %v402 = vsub.s32 0, %v401
      %v403 = vsel %vm397, %v402, %v401
      %vm404 = vcmp.lt.s32.totalorder %v378, 0
      %v405 = vsub.s32 0, %v378
      %v406 = vsel %vm404, %v405, %v378
      %v407 = vshrl.u32 %v406, 3
      %v408 = vand.u32 %v406, 7
      %v409 = vsub.s32 0, %v408
      %v410 = vsel %vm404, %v409, %v408
      %vm411 = vcmp.lt.s32.totalorder %v379, 0
      %v412 = vsub.s32 0, %v379
      %v413 = vsel %vm411, %v412, %v379
      %v414 = vshrl.u32 %v413, 3
      %v415 = vand.u32 %v413, 7
      %v416 = vsub.s32 0, %v415
      %v417 = vsel %vm411, %v416, %v415
      %vm418 = vcmp.lt.s32.totalorder %v380, 0
      %v419 = vsub.s32 0, %v380
      %v420 = vsel %vm418, %v419, %v380
      %v421 = vshrl.u32 %v420, 3
      %v422 = vand.u32 %v420, 7
      %v423 = vsub.s32 0, %v422
      %v424 = vsel %vm418, %v423, %v422
      %vm425 = vcmp.lt.s32.totalorder %v381, 0
      %v426 = vsub.s32 0, %v381
      %v427 = vsel %vm425, %v426, %v381
      %v428 = vshrl.u32 %v427, 3
      %v429 = vand.u32 %v427, 7
      %v430 = vsub.s32 0, %v429
      %v431 = vsel %vm425, %v430, %v429
      %vm432 = vcmp.lt.s32.totalorder %v382, 0
      %v433 = vsub.s32 0, %v382
      %v434 = vsel %vm432, %v433, %v382
      %v435 = vshrl.u32 %v434, 3
      %v436 = vand.u32 %v434, 7
      %v437 = vsub.s32 0, %v436
      %v438 = vsel %vm432, %v437, %v436
      %vm439 = vcmp.lt.s32.totalorder %v383, 0
      %v440 = vsub.s32 0, %v383
      %v441 = vsel %vm439, %v440, %v383
      %v442 = vshrl.u32 %v441, 3
      %v443 = vand.u32 %v441, 7
      %v444 = vsub.s32 0, %v443
      %v445 = vsel %vm439, %v444, %v443
      %vm446 = vcmp.lt.s32.totalorder %v384, 0
      %v447 = vsub.s32 0, %v384
      %v448 = vsel %vm446, %v447, %v384
      %v449 = vshrl.u32 %v448, 3
      %v450 = vand.u32 %v448, 7
      %v451 = vsub.s32 0, %v450
      %v452 = vsel %vm446, %v451, %v450
      %vm453 = vcmp.lt.s32.totalorder %v385, 0
      %v454 = vsub.s32 0, %v385
      %v455 = vsel %vm453, %v454, %v385
      %v456 = vshrl.u32 %v455, 3
      %v457 = vand.u32 %v455, 7
      %v458 = vsub.s32 0, %v457
      %v459 = vsel %vm453, %v458, %v457
      %vm460 = vcmp.lt.s32.totalorder %v386, 0
      %v461 = vsub.s32 0, %v386
      %v462 = vsel %vm460, %v461, %v386
      %v463 = vshrl.u32 %v462, 3
      %v464 = vand.u32 %v462, 7
      %v465 = vsub.s32 0, %v464
      %v466 = vsel %vm460, %v465, %v464
      %vm467 = vcmp.lt.s32.totalorder %v387, 0
      %v468 = vsub.s32 0, %v387
      %v469 = vsel %vm467, %v468, %v387
      %v470 = vshrl.u32 %v469, 3
      %v471 = vand.u32 %v469, 7
      %v472 = vsub.s32 0, %v471
      %v473 = vsel %vm467, %v472, %v471
      %vm474 = vcmp.lt.s32.totalorder %v388, 0
      %v475 = vsub.s32 0, %v388
      %v476 = vsel %vm474, %v475, %v388
      %v477 = vshrl.u32 %v476, 3
      %v478 = vand.u32 %v476, 7
      %v479 = vsub.s32 0, %v478
      %v480 = vsel %vm474, %v479, %v478
      %vm481 = vcmp.lt.s32.totalorder %v389, 0
      %v482 = vsub.s32 0, %v389
      %v483 = vsel %vm481, %v482, %v389
      %v484 = vshrl.u32 %v483, 3
      %v485 = vand.u32 %v483, 7
      %v486 = vsub.s32 0, %v485
      %v487 = vsel %vm481, %v486, %v485
      %vm488 = vcmp.ne.s32.totalorder %v396, 0
      %vm489 = vcmp.ne.s32.totalorder %v403, 0
      %vm490 = vcmp.ne.s32.totalorder %v410, 0
      %vm491 = vcmp.ne.s32.totalorder %v417, 0
      %vm492 = vcmp.ne.s32.totalorder %v424, 0
      %vm493 = vcmp.ne.s32.totalorder %v431, 0
      %vm494 = vcmp.ne.s32.totalorder %v438, 0
      %vm495 = vcmp.ne.s32.totalorder %v445, 0
      %vm496 = vcmp.ne.s32.totalorder %v452, 0
      %vm497 = vcmp.ne.s32.totalorder %v459, 0
      %vm498 = vcmp.ne.s32.totalorder %v466, 0
      %vm499 = vcmp.ne.s32.totalorder %v473, 0
      %vm500 = vcmp.ne.s32.totalorder %v480, 0
      %vm501 = vcmp.ne.s32.totalorder %v487, 0
      %vm502 = vcmp.lt.s32.totalorder %v396, 0
      %vm503 = vcmp.lt.s32.totalorder %v403, 0
      %vm504 = vcmp.lt.s32.totalorder %v410, 0
      %vm505 = vcmp.lt.s32.totalorder %v417, 0
      %vm506 = vcmp.lt.s32.totalorder %v424, 0
      %vm507 = vcmp.lt.s32.totalorder %v431, 0
      %vm508 = vcmp.lt.s32.totalorder %v438, 0
      %vm509 = vcmp.lt.s32.totalorder %v445, 0
      %vm510 = vcmp.lt.s32.totalorder %v452, 0
      %vm511 = vcmp.lt.s32.totalorder %v459, 0
      %vm512 = vcmp.lt.s32.totalorder %v466, 0
      %vm513 = vcmp.lt.s32.totalorder %v473, 0
      %vm514 = vcmp.lt.s32.totalorder %v480, 0
      %vm515 = vcmp.lt.s32.totalorder %v487, 0
      %vm516 = vmand %vm502, %vm488
      %vm517 = vmand %vm503, %vm489
      %vm518 = vmand %vm504, %vm490
      %vm519 = vmand %vm505, %vm491
      %vm520 = vmand %vm506, %vm492
      %vm521 = vmand %vm507, %vm493
      %vm522 = vmand %vm508, %vm494
      %vm523 = vmand %vm509, %vm495
      %vm524 = vmand %vm510, %vm496
      %vm525 = vmand %vm511, %vm497
      %vm526 = vmand %vm512, %vm498
      %vm527 = vmand %vm513, %vm499
      %vm528 = vmand %vm514, %vm500
      %vm529 = vmand %vm515, %vm501
      %v530 = vadd.s32 %v396, 8
      %v531 = vadd.s32 %v403, 8
      %v532 = vadd.s32 %v410, 8
      %v533 = vadd.s32 %v417, 8
      %v534 = vadd.s32 %v424, 8
      %v535 = vadd.s32 %v431, 8
      %v536 = vadd.s32 %v438, 8
      %v537 = vadd.s32 %v445, 8
      %v538 = vadd.s32 %v452, 8
      %v539 = vadd.s32 %v459, 8
      %v540 = vadd.s32 %v466, 8
      %v541 = vadd.s32 %v473, 8
      %v542 = vadd.s32 %v480, 8
      %v543 = vadd.s32 %v487, 8
      %v544 = vsel %vm516, %v530, %v396
      %v545 = vsel %vm517, %v531, %v403
      %v546 = vsel %vm518, %v532, %v410
      %v547 = vsel %vm519, %v533, %v417
      %v548 = vsel %vm520, %v534, %v424
      %v549 = vsel %vm521, %v535, %v431
      %v550 = vsel %vm522, %v536, %v438
      %v551 = vsel %vm523, %v537, %v445
      %v552 = vsel %vm524, %v538, %v452
      %v553 = vsel %vm525, %v539, %v459
      %v554 = vsel %vm526, %v540, %v466
      %v555 = vsel %vm527, %v541, %v473
      %v556 = vsel %vm528, %v542, %v480
      %v557 = vsel %vm529, %v543, %v487
      %vm558 = vcmp.ge.s32.totalorder %v544, 1
      %vm559 = vcmp.ge.s32.totalorder %v545, 1
      %vm560 = vcmp.ge.s32.totalorder %v546, 1
      %vm561 = vcmp.ge.s32.totalorder %v547, 1
      %vm562 = vcmp.ge.s32.totalorder %v548, 1
      %vm563 = vcmp.ge.s32.totalorder %v549, 1
      %vm564 = vcmp.ge.s32.totalorder %v550, 1
      %vm565 = vcmp.ge.s32.totalorder %v551, 1
      %vm566 = vcmp.ge.s32.totalorder %v552, 1
      %vm567 = vcmp.ge.s32.totalorder %v553, 1
      %vm568 = vcmp.ge.s32.totalorder %v554, 1
      %vm569 = vcmp.ge.s32.totalorder %v555, 1
      %vm570 = vcmp.ge.s32.totalorder %v556, 1
      %vm571 = vcmp.ge.s32.totalorder %v557, 1
      %vm572 = vcmp.le.s32.totalorder %v544, 6
      %vm573 = vcmp.le.s32.totalorder %v545, 6
      %vm574 = vcmp.le.s32.totalorder %v546, 6
      %vm575 = vcmp.le.s32.totalorder %v547, 6
      %vm576 = vcmp.le.s32.totalorder %v548, 6
      %vm577 = vcmp.le.s32.totalorder %v549, 6
      %vm578 = vcmp.le.s32.totalorder %v550, 6
      %vm579 = vcmp.le.s32.totalorder %v551, 6
      %vm580 = vcmp.le.s32.totalorder %v552, 6
      %vm581 = vcmp.le.s32.totalorder %v553, 6
      %vm582 = vcmp.le.s32.totalorder %v554, 6
      %vm583 = vcmp.le.s32.totalorder %v555, 6
      %vm584 = vcmp.le.s32.totalorder %v556, 6
      %vm585 = vcmp.le.s32.totalorder %v557, 6
      %s586 = ssub.s32 3, %s373
      %s587 = smul.u32 %s586, 8
      %s588 = ssub.s32 19, %s373
      %s589 = smul.u32 %s588, 8
      %v590 = vstv %s28
      %vm591 = vcmp.ge.s32.totalorder %v544, %v590
      %vm592 = vcmp.ge.s32.totalorder %v545, %v590
      %vm593 = vcmp.ge.s32.totalorder %v546, %v590
      %vm594 = vcmp.ge.s32.totalorder %v547, %v590
      %vm595 = vcmp.ge.s32.totalorder %v548, %v590
      %vm596 = vcmp.ge.s32.totalorder %v549, %v590
      %vm597 = vcmp.ge.s32.totalorder %v550, %v590
      %vm598 = vcmp.ge.s32.totalorder %v551, %v590
      %vm599 = vcmp.ge.s32.totalorder %v552, %v590
      %vm600 = vcmp.ge.s32.totalorder %v553, %v590
      %vm601 = vcmp.ge.s32.totalorder %v554, %v590
      %vm602 = vcmp.ge.s32.totalorder %v555, %v590
      %vm603 = vcmp.ge.s32.totalorder %v556, %v590
      %vm604 = vcmp.ge.s32.totalorder %v557, %v590
      %v605 = vstv %s587
      %vm606 = vcmp.ge.s32.totalorder %v376, %v605
      %vm607 = vcmp.ge.s32.totalorder %v377, %v605
      %vm608 = vcmp.ge.s32.totalorder %v378, %v605
      %vm609 = vcmp.ge.s32.totalorder %v379, %v605
      %vm610 = vcmp.ge.s32.totalorder %v380, %v605
      %vm611 = vcmp.ge.s32.totalorder %v381, %v605
      %vm612 = vcmp.ge.s32.totalorder %v382, %v605
      %vm613 = vcmp.ge.s32.totalorder %v383, %v605
      %vm614 = vcmp.ge.s32.totalorder %v384, %v605
      %vm615 = vcmp.ge.s32.totalorder %v385, %v605
      %vm616 = vcmp.ge.s32.totalorder %v386, %v605
      %vm617 = vcmp.ge.s32.totalorder %v387, %v605
      %vm618 = vcmp.ge.s32.totalorder %v388, %v605
      %vm619 = vcmp.ge.s32.totalorder %v389, %v605
      %vm620 = vmand %vm591, %vm606
      %vm621 = vmand %vm592, %vm607
      %vm622 = vmand %vm593, %vm608
      %vm623 = vmand %vm594, %vm609
      %vm624 = vmand %vm595, %vm610
      %vm625 = vmand %vm596, %vm611
      %vm626 = vmand %vm597, %vm612
      %vm627 = vmand %vm598, %vm613
      %vm628 = vmand %vm599, %vm614
      %vm629 = vmand %vm600, %vm615
      %vm630 = vmand %vm601, %vm616
      %vm631 = vmand %vm602, %vm617
      %vm632 = vmand %vm603, %vm618
      %vm633 = vmand %vm604, %vm619
      %v634 = vstv %s589
      %vm635 = vcmp.lt.s32.totalorder %v376, %v634
      %vm636 = vcmp.lt.s32.totalorder %v377, %v634
      %vm637 = vcmp.lt.s32.totalorder %v378, %v634
      %vm638 = vcmp.lt.s32.totalorder %v379, %v634
      %vm639 = vcmp.lt.s32.totalorder %v380, %v634
      %vm640 = vcmp.lt.s32.totalorder %v381, %v634
      %vm641 = vcmp.lt.s32.totalorder %v382, %v634
      %vm642 = vcmp.lt.s32.totalorder %v383, %v634
      %vm643 = vcmp.lt.s32.totalorder %v384, %v634
      %vm644 = vcmp.lt.s32.totalorder %v385, %v634
      %vm645 = vcmp.lt.s32.totalorder %v386, %v634
      %vm646 = vcmp.lt.s32.totalorder %v387, %v634
      %vm647 = vcmp.lt.s32.totalorder %v388, %v634
      %vm648 = vcmp.lt.s32.totalorder %v389, %v634
      %vm649 = vmand %vm620, %vm635
      %vm650 = vmand %vm621, %vm636
      %vm651 = vmand %vm622, %vm637
      %vm652 = vmand %vm623, %vm638
      %vm653 = vmand %vm624, %vm639
      %vm654 = vmand %vm625, %vm640
      %vm655 = vmand %vm626, %vm641
      %vm656 = vmand %vm627, %vm642
      %vm657 = vmand %vm628, %vm643
      %vm658 = vmand %vm629, %vm644
      %vm659 = vmand %vm630, %vm645
      %vm660 = vmand %vm631, %vm646
      %vm661 = vmand %vm632, %vm647
      %vm662 = vmand %vm633, %vm648
      %v663 = vlaneseq
      %v664 = vand.u32 %v663, 127
      %vm665 = vcmp.lt.s32.totalorder %v664, 0
      %v666 = vsub.s32 0, %v664
      %v667 = vsel %vm665, %v666, %v664
      %v668 = vshrl.u32 %v667, 1
      %v669 = vand.u32 %v667, 1
      %v670 = vsub.s32 0, %v669
      %v671 = vsel %vm665, %v670, %v669
      %vm672 = vcmp.ne.s32.totalorder %v671, 0
      %vm673 = vcmp.lt.s32.totalorder %v671, 0
      %vm674 = vmand %vm673, %vm672
      %v675 = vadd.s32 %v671, 2
      %v676 = vsel %vm674, %v675, %v671
      %vm677 = vcmp.eq.s32.totalorder %v676, 0
      %s678 = smul.u32 %s374, 8
      %s679 = sadd.s32 %s678, 32
      %s680 = scalar_lea.vmem %s359, %s679
      %v681 = vld [vmem:[%s680] sm:$0xff]
      %v682 = vld [vmem:[%s680 + $0x8] sm:$0xff]
      %v683 = vld [vmem:[%s680 + $0x10] sm:$0xff]
      %v684 = vld [vmem:[%s680 + $0x18] sm:$0xff]
      %v685 = vld [vmem:[%s680 + $0x20] sm:$0xff]
      %v686 = vld [vmem:[%s680 + $0x28] sm:$0xff]
      %v687 = vld [vmem:[%s680 + $0x30] sm:$0xff]
      %v688 = vld [vmem:[%s680 + $0x38] sm:$0xff]
      %v689 = vld [vmem:[%s680 + $0x40] sm:$0xff]
      %v690 = vld [vmem:[%s680 + $0x48] sm:$0xff]
      %v691 = vld [vmem:[%s680 + $0x50] sm:$0xff]
      %v692 = vld [vmem:[%s680 + $0x58] sm:$0xff]
      %v693 = vld [vmem:[%s680 + $0x60] sm:$0xff]
      %v694 = vld [vmem:[%s680 + $0x68] sm:$0xff]
      %s695 = ssub.s32 %s679, %s28
      %s696 = scalar_lea.vmem %s359, %s695
      %v697 = vld [vmem:[%s696] sm:$0xff]
      %v698 = vld [vmem:[%s696 + $0x8] sm:$0xff]
      %v699 = vld [vmem:[%s696 + $0x10] sm:$0xff]
      %v700 = vld [vmem:[%s696 + $0x18] sm:$0xff]
      %v701 = vld [vmem:[%s696 + $0x20] sm:$0xff]
      %v702 = vld [vmem:[%s696 + $0x28] sm:$0xff]
      %v703 = vld [vmem:[%s696 + $0x30] sm:$0xff]
      %v704 = vld [vmem:[%s696 + $0x38] sm:$0xff]
      %v705 = vld [vmem:[%s696 + $0x40] sm:$0xff]
      %v706 = vld [vmem:[%s696 + $0x48] sm:$0xff]
      %v707 = vld [vmem:[%s696 + $0x50] sm:$0xff]
      %v708 = vld [vmem:[%s696 + $0x58] sm:$0xff]
      %v709 = vld [vmem:[%s696 + $0x60] sm:$0xff]
      %v710 = vld [vmem:[%s696 + $0x68] sm:$0xff]
      %v711 = vsel %vm677, 1, 0
      %vm712 = vcmp.eq.s32.totalorder %v711, 1
      %v713 = vsel %vm712, %v697, %v681
      %v714 = vsel %vm712, %v698, %v682
      %v715 = vsel %vm712, %v699, %v683
      %v716 = vsel %vm712, %v700, %v684
      %v717 = vsel %vm712, %v701, %v685
      %v718 = vsel %vm712, %v702, %v686
      %v719 = vsel %vm712, %v703, %v687
      %v720 = vsel %vm712, %v704, %v688
      %v721 = vsel %vm712, %v705, %v689
      %v722 = vsel %vm712, %v706, %v690
      %v723 = vsel %vm712, %v707, %v691
      %v724 = vsel %vm712, %v708, %v692
      %v725 = vsel %vm712, %v709, %v693
      %v726 = vsel %vm712, %v710, %v694
      %v727 = vsel %vm649, 1, 0
      %v728 = vsel %vm650, 1, 0
      %v729 = vsel %vm651, 1, 0
      %v730 = vsel %vm652, 1, 0
      %v731 = vsel %vm653, 1, 0
      %v732 = vsel %vm654, 1, 0
      %v733 = vsel %vm655, 1, 0
      %v734 = vsel %vm656, 1, 0
      %v735 = vsel %vm657, 1, 0
      %v736 = vsel %vm658, 1, 0
      %v737 = vsel %vm659, 1, 0
      %v738 = vsel %vm660, 1, 0
      %v739 = vsel %vm661, 1, 0
      %v740 = vsel %vm662, 1, 0
      %vm741 = vcmp.eq.s32.totalorder %v727, 1
      %vm742 = vcmp.eq.s32.totalorder %v728, 1
      %vm743 = vcmp.eq.s32.totalorder %v729, 1
      %vm744 = vcmp.eq.s32.totalorder %v730, 1
      %vm745 = vcmp.eq.s32.totalorder %v731, 1
      %vm746 = vcmp.eq.s32.totalorder %v732, 1
      %vm747 = vcmp.eq.s32.totalorder %v733, 1
      %vm748 = vcmp.eq.s32.totalorder %v734, 1
      %vm749 = vcmp.eq.s32.totalorder %v735, 1
      %vm750 = vcmp.eq.s32.totalorder %v736, 1
      %vm751 = vcmp.eq.s32.totalorder %v737, 1
      %vm752 = vcmp.eq.s32.totalorder %v738, 1
      %vm753 = vcmp.eq.s32.totalorder %v739, 1
      %vm754 = vcmp.eq.s32.totalorder %v740, 1
      %v755 = vsel %vm741, %v713, 0.0
      %v756 = vsel %vm742, %v714, 0.0
      %v757 = vsel %vm743, %v715, 0.0
      %v758 = vsel %vm744, %v716, 0.0
      %v759 = vsel %vm745, %v717, 0.0
      %v760 = vsel %vm746, %v718, 0.0
      %v761 = vsel %vm747, %v719, 0.0
      %v762 = vsel %vm748, %v720, 0.0
      %v763 = vsel %vm749, %v721, 0.0
      %v764 = vsel %vm750, %v722, 0.0
      %v765 = vsel %vm751, %v723, 0.0
      %v766 = vsel %vm752, %v724, 0.0
      %v767 = vsel %vm753, %v725, 0.0
      %v768 = vsel %vm754, %v726, 0.0
      %vm783 = vcmask 1040384
      %v784 = vrot.slane %v755, 7
      %v785 = vrot.slane %v756, 7
      %v786 = vsel %vm783, %v784, %v785
      %v787 = vrot.slane %v757, 7
      %v788 = vsel %vm783, %v785, %v787
      %v789 = vrot.slane %v758, 7
      %v790 = vsel %vm783, %v787, %v789
      %v791 = vrot.slane %v759, 7
      %v792 = vsel %vm783, %v789, %v791
      %v793 = vrot.slane %v760, 7
      %v794 = vsel %vm783, %v791, %v793
      %v795 = vrot.slane %v761, 7
      %v796 = vsel %vm783, %v793, %v795
      %v797 = vrot.slane %v762, 7
      %v798 = vsel %vm783, %v795, %v797
      %v799 = vrot.slane %v763, 7
      %v800 = vsel %vm783, %v797, %v799
      %v801 = vrot.slane %v764, 7
      %v802 = vsel %vm783, %v799, %v801
      %v803 = vrot.slane %v765, 7
      %v804 = vsel %vm783, %v801, %v803
      %v805 = vrot.slane %v766, 7
      %v806 = vsel %vm783, %v803, %v805
      %v807 = vrot.slane %v767, 7
      %v808 = vsel %vm783, %v805, %v807
      %v809 = vrot.slane %v768, 7
      %v810 = vsel %vm783, %v807, %v809
      %v825 = vsel %vm783, 0.0, %v784
      %v826 = vsel %vm558, 1, 0
      %v827 = vsel %vm559, 1, 0
      %v828 = vsel %vm560, 1, 0
      %v829 = vsel %vm561, 1, 0
      %v830 = vsel %vm562, 1, 0
      %v831 = vsel %vm563, 1, 0
      %v832 = vsel %vm564, 1, 0
      %v833 = vsel %vm565, 1, 0
      %v834 = vsel %vm566, 1, 0
      %v835 = vsel %vm567, 1, 0
      %v836 = vsel %vm568, 1, 0
      %v837 = vsel %vm569, 1, 0
      %v838 = vsel %vm570, 1, 0
      %v839 = vsel %vm571, 1, 0
      %vm840 = vcmp.eq.s32.totalorder %v826, 1
      %vm841 = vcmp.eq.s32.totalorder %v827, 1
      %vm842 = vcmp.eq.s32.totalorder %v828, 1
      %vm843 = vcmp.eq.s32.totalorder %v829, 1
      %vm844 = vcmp.eq.s32.totalorder %v830, 1
      %vm845 = vcmp.eq.s32.totalorder %v831, 1
      %vm846 = vcmp.eq.s32.totalorder %v832, 1
      %vm847 = vcmp.eq.s32.totalorder %v833, 1
      %vm848 = vcmp.eq.s32.totalorder %v834, 1
      %vm849 = vcmp.eq.s32.totalorder %v835, 1
      %vm850 = vcmp.eq.s32.totalorder %v836, 1
      %vm851 = vcmp.eq.s32.totalorder %v837, 1
      %vm852 = vcmp.eq.s32.totalorder %v838, 1
      %vm853 = vcmp.eq.s32.totalorder %v839, 1
      %v854 = vsel %vm840, %v825, 0.0
      %v855 = vsel %vm841, %v786, 0.0
      %v856 = vsel %vm842, %v788, 0.0
      %v857 = vsel %vm843, %v790, 0.0
      %v858 = vsel %vm844, %v792, 0.0
      %v859 = vsel %vm845, %v794, 0.0
      %v860 = vsel %vm846, %v796, 0.0
      %v861 = vsel %vm847, %v798, 0.0
      %v862 = vsel %vm848, %v800, 0.0
      %v863 = vsel %vm849, %v802, 0.0
      %v864 = vsel %vm850, %v804, 0.0
      %v865 = vsel %vm851, %v806, 0.0
      %v866 = vsel %vm852, %v808, 0.0
      %v867 = vsel %vm853, %v810, 0.0
      %vm868 = vcmask 1046528
      %v869 = vrot.slane %v755, 1
      %v870 = vrot.slane %v756, 1
      %v871 = vsel %vm868, %v869, %v870
      %v872 = vrot.slane %v757, 1
      %v873 = vsel %vm868, %v870, %v872
      %v874 = vrot.slane %v758, 1
      %v875 = vsel %vm868, %v872, %v874
      %v876 = vrot.slane %v759, 1
      %v877 = vsel %vm868, %v874, %v876
      %v878 = vrot.slane %v760, 1
      %v879 = vsel %vm868, %v876, %v878
      %v880 = vrot.slane %v761, 1
      %v881 = vsel %vm868, %v878, %v880
      %v882 = vrot.slane %v762, 1
      %v883 = vsel %vm868, %v880, %v882
      %v884 = vrot.slane %v763, 1
      %v885 = vsel %vm868, %v882, %v884
      %v886 = vrot.slane %v764, 1
      %v887 = vsel %vm868, %v884, %v886
      %v888 = vrot.slane %v765, 1
      %v889 = vsel %vm868, %v886, %v888
      %v890 = vrot.slane %v766, 1
      %v891 = vsel %vm868, %v888, %v890
      %v892 = vrot.slane %v767, 1
      %v893 = vsel %vm868, %v890, %v892
      %v894 = vrot.slane %v768, 1
      %v895 = vsel %vm868, %v892, %v894
      %v910 = vsel %vm868, %v894, 0.0
      %v911 = vsel %vm572, 1, 0
      %v912 = vsel %vm573, 1, 0
      %v913 = vsel %vm574, 1, 0
      %v914 = vsel %vm575, 1, 0
      %v915 = vsel %vm576, 1, 0
      %v916 = vsel %vm577, 1, 0
      %v917 = vsel %vm578, 1, 0
      %v918 = vsel %vm579, 1, 0
      %v919 = vsel %vm580, 1, 0
      %v920 = vsel %vm581, 1, 0
      %v921 = vsel %vm582, 1, 0
      %v922 = vsel %vm583, 1, 0
      %v923 = vsel %vm584, 1, 0
      %v924 = vsel %vm585, 1, 0
      %vm925 = vcmp.eq.s32.totalorder %v911, 1
      %vm926 = vcmp.eq.s32.totalorder %v912, 1
      %vm927 = vcmp.eq.s32.totalorder %v913, 1
      %vm928 = vcmp.eq.s32.totalorder %v914, 1
      %vm929 = vcmp.eq.s32.totalorder %v915, 1
      %vm930 = vcmp.eq.s32.totalorder %v916, 1
      %vm931 = vcmp.eq.s32.totalorder %v917, 1
      %vm932 = vcmp.eq.s32.totalorder %v918, 1
      %vm933 = vcmp.eq.s32.totalorder %v919, 1
      %vm934 = vcmp.eq.s32.totalorder %v920, 1
      %vm935 = vcmp.eq.s32.totalorder %v921, 1
      %vm936 = vcmp.eq.s32.totalorder %v922, 1
      %vm937 = vcmp.eq.s32.totalorder %v923, 1
      %vm938 = vcmp.eq.s32.totalorder %v924, 1
      %v939 = vsel %vm925, %v871, 0.0
      %v940 = vsel %vm926, %v873, 0.0
      %v941 = vsel %vm927, %v875, 0.0
      %v942 = vsel %vm928, %v877, 0.0
      %v943 = vsel %vm929, %v879, 0.0
      %v944 = vsel %vm930, %v881, 0.0
      %v945 = vsel %vm931, %v883, 0.0
      %v946 = vsel %vm932, %v885, 0.0
      %v947 = vsel %vm933, %v887, 0.0
      %v948 = vsel %vm934, %v889, 0.0
      %v949 = vsel %vm935, %v891, 0.0
      %v950 = vsel %vm936, %v893, 0.0
      %v951 = vsel %vm937, %v895, 0.0
      %v952 = vsel %vm938, %v910, 0.0
      %953 = vrot.lane.b32.xlu0 %v755, 64
      %v954 = vpop.permute.xlu0 %953
      %955 = vrot.lane.b32.xlu0 %v756, 64
      %v956 = vpop.permute.xlu0 %955
      %957 = vrot.lane.b32.xlu0 %v757, 64
      %v958 = vpop.permute.xlu0 %957
      %959 = vrot.lane.b32.xlu0 %v758, 64
      %v960 = vpop.permute.xlu0 %959
      %961 = vrot.lane.b32.xlu0 %v759, 64
      %v962 = vpop.permute.xlu0 %961
      %963 = vrot.lane.b32.xlu0 %v760, 64
      %v964 = vpop.permute.xlu0 %963
      %965 = vrot.lane.b32.xlu0 %v761, 64
      %v966 = vpop.permute.xlu0 %965
      %967 = vrot.lane.b32.xlu0 %v762, 64
      %v968 = vpop.permute.xlu0 %967
      %969 = vrot.lane.b32.xlu0 %v763, 64
      %v970 = vpop.permute.xlu0 %969
      %971 = vrot.lane.b32.xlu0 %v764, 64
      %v972 = vpop.permute.xlu0 %971
      %973 = vrot.lane.b32.xlu0 %v765, 64
      %v974 = vpop.permute.xlu0 %973
      %975 = vrot.lane.b32.xlu0 %v766, 64
      %v976 = vpop.permute.xlu0 %975
      %977 = vrot.lane.b32.xlu0 %v767, 64
      %v978 = vpop.permute.xlu0 %977
      %979 = vrot.lane.b32.xlu0 %v768, 64
      %v980 = vpop.permute.xlu0 %979
      %vm995 = vcmask 523264
      %v996 = vsel %vm995, %v854, %v954
      %v997 = vsel %vm995, %v855, %v956
      %v998 = vsel %vm995, %v856, %v958
      %v999 = vsel %vm995, %v857, %v960
      %v1000 = vsel %vm995, %v858, %v962
      %v1001 = vsel %vm995, %v859, %v964
      %v1002 = vsel %vm995, %v860, %v966
      %v1003 = vsel %vm995, %v861, %v968
      %v1004 = vsel %vm995, %v862, %v970
      %v1005 = vsel %vm995, %v863, %v972
      %v1006 = vsel %vm995, %v864, %v974
      %v1007 = vsel %vm995, %v865, %v976
      %v1008 = vsel %vm995, %v866, %v978
      %v1009 = vsel %vm995, %v867, %v980
      %v1010 = vpack.c.bf16 %v997, %v996
      %v1011 = vpack.c.bf16 %v940, %v939
      %v1012 = vpack.c.bf16 %v999, %v998
      %v1013 = vpack.c.bf16 %v942, %v941
      %v1014 = vpack.c.bf16 %v1001, %v1000
      %v1015 = vpack.c.bf16 %v944, %v943
      %v1016 = vpack.c.bf16 %v1003, %v1002
      %v1017 = vpack.c.bf16 %v946, %v945
      %v1018 = vpack.c.bf16 %v1005, %v1004
      %v1019 = vpack.c.bf16 %v948, %v947
      %v1020 = vpack.c.bf16 %v1007, %v1006
      %v1021 = vpack.c.bf16 %v950, %v949
      %v1022 = vpack.c.bf16 %v1009, %v1008
      %v1023 = vpack.c.bf16 %v952, %v951
      %v1024 = vld [vmem:[%s1] sm:$0xf]
      %v1025 = vld [vmem:[%s1 + $0x4] sm:$0xf]
      %v1026 = vld [vmem:[%s1 + $0x8] sm:$0xf]
      %v1027 = vld [vmem:[%s1 + $0xc] sm:$0xf]
      %v1028 = vld [vmem:[%s1 + $0x10] sm:$0xf]
      %v1029 = vld [vmem:[%s1 + $0x14] sm:$0xf]
      %v1030 = vld [vmem:[%s1 + $0x18] sm:$0xf]
      %v1031 = vld [vmem:[%s1 + $0x1c] sm:$0xf]
      %v1032 = vld [vmem:[%s1 + $0x20] sm:$0xf]
      %v1033 = vld [vmem:[%s1 + $0x24] sm:$0xf]
      %v1034 = vld [vmem:[%s1 + $0x28] sm:$0xf]
      %v1035 = vld [vmem:[%s1 + $0x2c] sm:$0xf]
      %v1036 = vld [vmem:[%s1 + $0x30] sm:$0xf]
      %v1037 = vld [vmem:[%s1 + $0x34] sm:$0xf]
      %v1038 = vld [vmem:[%s1 + $0x38] sm:$0xf]
      %v1039 = vld [vmem:[%s1 + $0x3c] sm:$0xf]
      %v1040 = vld [vmem:[%s1 + $0x40] sm:$0xf]
      %v1041 = vld [vmem:[%s1 + $0x44] sm:$0xf]
      %v1042 = vld [vmem:[%s1 + $0x48] sm:$0xf]
      %v1043 = vld [vmem:[%s1 + $0x4c] sm:$0xf]
      %v1044 = vld [vmem:[%s1 + $0x50] sm:$0xf]
      %v1045 = vld [vmem:[%s1 + $0x54] sm:$0xf]
      %v1046 = vld [vmem:[%s1 + $0x58] sm:$0xf]
      %v1047 = vld [vmem:[%s1 + $0x5c] sm:$0xf]
      %v1072 = vunpack.c.l.b16 %v1024
      %v1073 = vunpack.c.l.b16 %v1025
      %v1074 = vunpack.c.l.b16 %v1026
      %v1075 = vunpack.c.l.b16 %v1027
      %v1076 = vunpack.c.l.b16 %v1028
      %v1077 = vunpack.c.l.b16 %v1029
      %v1078 = vunpack.c.l.b16 %v1030
      %v1079 = vunpack.c.l.b16 %v1031
      %v1080 = vunpack.c.l.b16 %v1032
      %v1081 = vunpack.c.l.b16 %v1033
      %v1082 = vunpack.c.l.b16 %v1034
      %v1083 = vunpack.c.l.b16 %v1035
      %v1084 = vunpack.c.l.b16 %v1036
      %v1085 = vunpack.c.l.b16 %v1037
      %v1086 = vunpack.c.l.b16 %v1038
      %v1087 = vunpack.c.l.b16 %v1039
      %v1088 = vunpack.c.l.b16 %v1040
      %v1089 = vunpack.c.l.b16 %v1041
      %v1090 = vunpack.c.l.b16 %v1042
      %v1091 = vunpack.c.l.b16 %v1043
      %v1092 = vunpack.c.l.b16 %v1044
      %v1093 = vunpack.c.l.b16 %v1045
      %v1094 = vunpack.c.l.b16 %v1046
      %v1095 = vunpack.c.l.b16 %v1047
      %v1096 = vpack.c.b16 %v1073, %v1072
      %v1097 = vpack.c.b16 %v1075, %v1074
      %v1098 = vpack.c.b16 %v1077, %v1076
      %v1099 = vpack.c.b16 %v1079, %v1078
      %v1100 = vpack.c.b16 %v1081, %v1080
      %v1101 = vpack.c.b16 %v1083, %v1082
      %v1102 = vpack.c.b16 %v1085, %v1084
      %v1103 = vpack.c.b16 %v1087, %v1086
      %v1104 = vpack.c.b16 %v1089, %v1088
      %v1105 = vpack.c.b16 %v1091, %v1090
      %v1106 = vpack.c.b16 %v1093, %v1092
      %v1107 = vpack.c.b16 %v1095, %v1094
      %v1121 = vsel %vm995, %v1011, 0
      %v1124 = vsel %vm995, %v1013, 0
      %v1127 = vsel %vm995, %v1015, 0
      %v1130 = vsel %vm995, %v1017, 0
      %v1133 = vsel %vm995, %v1019, 0
      %v1136 = vsel %vm995, %v1021, 0
      %v1139 = vsel %vm995, %v1023, 0
      %1141 = vmatpush.bf16.msra.mxu0 %v1103
      %1142 = vmatpush.bf16.msra.mxu0 %v1102
      %1143 = vmatpush.bf16.msra.mxu0 %v1101
      %1144 = vmatpush.bf16.msra.mxu0 %v1100
      %1145 = vmatpush.bf16.msra.mxu0 %v1099
      %1146 = vmatpush.bf16.msra.mxu0 %v1098
      %1147 = vmatpush.bf16.msra.mxu0 %v1097
      %1148 = vmatpush.bf16.msra.mxu0 %v1096
      %1149 = vmatmul.bf16.gmra.mxu0 %v1010
      %v1150 = vpop.f32.mrf.mxu0
      %v1151 = vadd.f32 0.0, %v1150
      %v1152 = vpop.f32.mrf.mxu0
      %v1153 = vadd.f32 0.0, %v1152
      %1154 = vmatmul.bf16.gmra.mxu0 %v1012
      %v1155 = vpop.f32.mrf.mxu0
      %v1156 = vadd.f32 0.0, %v1155
      %v1157 = vpop.f32.mrf.mxu0
      %v1158 = vadd.f32 0.0, %v1157
      %1159 = vmatmul.bf16.gmra.mxu0 %v1014
      %v1160 = vpop.f32.mrf.mxu0
      %v1161 = vadd.f32 0.0, %v1160
      %v1162 = vpop.f32.mrf.mxu0
      %v1163 = vadd.f32 0.0, %v1162
      %1164 = vmatmul.bf16.gmra.mxu0 %v1016
      %v1165 = vpop.f32.mrf.mxu0
      %v1166 = vadd.f32 0.0, %v1165
      %v1167 = vpop.f32.mrf.mxu0
      %v1168 = vadd.f32 0.0, %v1167
      %1169 = vmatmul.bf16.gmra.mxu0 %v1018
      %v1170 = vpop.f32.mrf.mxu0
      %v1171 = vadd.f32 0.0, %v1170
      %v1172 = vpop.f32.mrf.mxu0
      %v1173 = vadd.f32 0.0, %v1172
      %1174 = vmatmul.bf16.gmra.mxu0 %v1020
      %v1175 = vpop.f32.mrf.mxu0
      %v1176 = vadd.f32 0.0, %v1175
      %v1177 = vpop.f32.mrf.mxu0
      %v1178 = vadd.f32 0.0, %v1177
      %1179 = vmatmul.bf16.gmra.mxu0 %v1022
      %v1180 = vpop.f32.mrf.mxu0
      %v1181 = vadd.f32 0.0, %v1180
      %v1182 = vpop.f32.mrf.mxu0
      %1183 = vdwg.mxu0
      %1184 = vmatpush.bf16.msra.mxu0 0
      %1185 = vmatpush.bf16.msra.mxu0 0
      %1186 = vmatpush.bf16.msra.mxu0 0
      %1187 = vmatpush.bf16.msra.mxu0 0
      %1188 = vmatpush.bf16.msra.mxu0 %v1107
      %1189 = vmatpush.bf16.msra.mxu0 %v1106
      %1190 = vmatpush.bf16.msra.mxu0 %v1105
      %1191 = vmatpush.bf16.msra.mxu0 %v1104
      %1192 = vmatmul.bf16.gmra.mxu0 %v1121
      %v1193 = vpop.f32.mrf.mxu0
      %v1194 = vadd.f32 %v1151, %v1193
      %v1195 = vpop.f32.mrf.mxu0
      %v1196 = vadd.f32 %v1153, %v1195
      %1197 = vmatmul.bf16.gmra.mxu0 %v1124
      %v1198 = vpop.f32.mrf.mxu0
      %v1199 = vadd.f32 %v1156, %v1198
      %v1200 = vpop.f32.mrf.mxu0
      %v1201 = vadd.f32 %v1158, %v1200
      %1202 = vmatmul.bf16.gmra.mxu0 %v1127
      %v1203 = vpop.f32.mrf.mxu0
      %v1204 = vadd.f32 %v1161, %v1203
      %v1205 = vpop.f32.mrf.mxu0
      %v1206 = vadd.f32 %v1163, %v1205
      %1207 = vmatmul.bf16.gmra.mxu0 %v1130
      %v1208 = vpop.f32.mrf.mxu0
      %v1209 = vadd.f32 %v1166, %v1208
      %v1210 = vpop.f32.mrf.mxu0
      %v1211 = vadd.f32 %v1168, %v1210
      %1212 = vmatmul.bf16.gmra.mxu0 %v1133
      %v1213 = vpop.f32.mrf.mxu0
      %v1214 = vadd.f32 %v1171, %v1213
      %v1215 = vpop.f32.mrf.mxu0
      %v1216 = vadd.f32 %v1173, %v1215
      %1217 = vmatmul.bf16.gmra.mxu0 %v1136
      %v1218 = vpop.f32.mrf.mxu0
      %v1219 = vadd.f32 %v1176, %v1218
      %v1220 = vpop.f32.mrf.mxu0
      %v1221 = vadd.f32 %v1178, %v1220
      %1222 = vmatmul.bf16.gmra.mxu0 %v1139
      %v1223 = vpop.f32.mrf.mxu0
      %v1224 = vadd.f32 %v1181, %v1223
      %v1225 = vpop.f32.mrf.mxu0
      %1226 = vdwg.mxu0
      %s1227 = scalar_lea.vmem %s1, 96
      %v1228 = vld [vmem:[%s1227] sm:$0xf]
      %v1229 = vld [vmem:[%s1227 + $0x4] sm:$0xf]
      %v1230 = vld [vmem:[%s1227 + $0x8] sm:$0xf]
      %v1231 = vld [vmem:[%s1227 + $0xc] sm:$0xf]
      %v1232 = vld [vmem:[%s1227 + $0x10] sm:$0xf]
      %v1233 = vld [vmem:[%s1227 + $0x14] sm:$0xf]
      %v1234 = vld [vmem:[%s1227 + $0x18] sm:$0xf]
      %v1235 = vld [vmem:[%s1227 + $0x1c] sm:$0xf]
      %v1236 = vld [vmem:[%s1227 + $0x20] sm:$0xf]
      %v1237 = vld [vmem:[%s1227 + $0x24] sm:$0xf]
      %v1238 = vld [vmem:[%s1227 + $0x28] sm:$0xf]
      %v1239 = vld [vmem:[%s1227 + $0x2c] sm:$0xf]
      %v1240 = vld [vmem:[%s1227 + $0x30] sm:$0xf]
      %v1241 = vld [vmem:[%s1227 + $0x34] sm:$0xf]
      %v1242 = vld [vmem:[%s1227 + $0x38] sm:$0xf]
      %v1243 = vld [vmem:[%s1227 + $0x3c] sm:$0xf]
      %v1244 = vld [vmem:[%s1227 + $0x40] sm:$0xf]
      %v1245 = vld [vmem:[%s1227 + $0x44] sm:$0xf]
      %v1246 = vld [vmem:[%s1227 + $0x48] sm:$0xf]
      %v1247 = vld [vmem:[%s1227 + $0x4c] sm:$0xf]
      %v1248 = vld [vmem:[%s1227 + $0x50] sm:$0xf]
      %v1249 = vld [vmem:[%s1227 + $0x54] sm:$0xf]
      %v1250 = vld [vmem:[%s1227 + $0x58] sm:$0xf]
      %v1251 = vld [vmem:[%s1227 + $0x5c] sm:$0xf]
      %s1252 = scalar_lea.vmem %s1, 192
      %v1253 = vld [vmem:[%s1252] sm:$0xf]
      %v1254 = vld [vmem:[%s1252 + $0x4] sm:$0xf]
      %v1255 = vld [vmem:[%s1252 + $0x8] sm:$0xf]
      %v1256 = vld [vmem:[%s1252 + $0xc] sm:$0xf]
      %v1257 = vld [vmem:[%s1252 + $0x10] sm:$0xf]
      %v1258 = vld [vmem:[%s1252 + $0x14] sm:$0xf]
      %v1259 = vld [vmem:[%s1252 + $0x18] sm:$0xf]
      %v1260 = vld [vmem:[%s1252 + $0x1c] sm:$0xf]
      %v1261 = vld [vmem:[%s1252 + $0x20] sm:$0xf]
      %v1262 = vld [vmem:[%s1252 + $0x24] sm:$0xf]
      %v1263 = vld [vmem:[%s1252 + $0x28] sm:$0xf]
      %v1264 = vld [vmem:[%s1252 + $0x2c] sm:$0xf]
      %v1265 = vld [vmem:[%s1252 + $0x30] sm:$0xf]
      %v1266 = vld [vmem:[%s1252 + $0x34] sm:$0xf]
      %v1267 = vld [vmem:[%s1252 + $0x38] sm:$0xf]
      %v1268 = vld [vmem:[%s1252 + $0x3c] sm:$0xf]
      %v1269 = vld [vmem:[%s1252 + $0x40] sm:$0xf]
      %v1270 = vld [vmem:[%s1252 + $0x44] sm:$0xf]
      %v1271 = vld [vmem:[%s1252 + $0x48] sm:$0xf]
      %v1272 = vld [vmem:[%s1252 + $0x4c] sm:$0xf]
      %v1273 = vld [vmem:[%s1252 + $0x50] sm:$0xf]
      %v1274 = vld [vmem:[%s1252 + $0x54] sm:$0xf]
      %v1275 = vld [vmem:[%s1252 + $0x58] sm:$0xf]
      %v1276 = vld [vmem:[%s1252 + $0x5c] sm:$0xf]
      %v1301 = vunpack.c.l.b16 %v1253
      %v1302 = vunpack.c.l.b16 %v1254
      %v1303 = vunpack.c.l.b16 %v1255
      %v1304 = vunpack.c.l.b16 %v1256
      %v1305 = vunpack.c.l.b16 %v1257
      %v1306 = vunpack.c.l.b16 %v1258
      %v1307 = vunpack.c.l.b16 %v1259
      %v1308 = vunpack.c.l.b16 %v1260
      %v1309 = vunpack.c.l.b16 %v1261
      %v1310 = vunpack.c.l.b16 %v1262
      %v1311 = vunpack.c.l.b16 %v1263
      %v1312 = vunpack.c.l.b16 %v1264
      %v1313 = vunpack.c.l.b16 %v1265
      %v1314 = vunpack.c.l.b16 %v1266
      %v1315 = vunpack.c.l.b16 %v1267
      %v1316 = vunpack.c.l.b16 %v1268
      %v1317 = vunpack.c.l.b16 %v1269
      %v1318 = vunpack.c.l.b16 %v1270
      %v1319 = vunpack.c.l.b16 %v1271
      %v1320 = vunpack.c.l.b16 %v1272
      %v1321 = vunpack.c.l.b16 %v1273
      %v1322 = vunpack.c.l.b16 %v1274
      %v1323 = vunpack.c.l.b16 %v1275
      %v1324 = vunpack.c.l.b16 %v1276
      %v1325 = vpack.c.b16 %v1302, %v1301
      %v1326 = vpack.c.b16 %v1304, %v1303
      %v1327 = vpack.c.b16 %v1306, %v1305
      %v1328 = vpack.c.b16 %v1308, %v1307
      %v1329 = vpack.c.b16 %v1310, %v1309
      %v1330 = vpack.c.b16 %v1312, %v1311
      %v1331 = vpack.c.b16 %v1314, %v1313
      %v1332 = vpack.c.b16 %v1316, %v1315
      %v1333 = vpack.c.b16 %v1318, %v1317
      %v1334 = vpack.c.b16 %v1320, %v1319
      %v1335 = vpack.c.b16 %v1322, %v1321
      %v1336 = vpack.c.b16 %v1324, %v1323
      %1349 = vmatpush.bf16.msra.mxu0 %v1332
      %1350 = vmatpush.bf16.msra.mxu0 %v1331
      %1351 = vmatpush.bf16.msra.mxu0 %v1330
      %1352 = vmatpush.bf16.msra.mxu0 %v1329
      %1353 = vmatpush.bf16.msra.mxu0 %v1328
      %1354 = vmatpush.bf16.msra.mxu0 %v1327
      %1355 = vmatpush.bf16.msra.mxu0 %v1326
      %1356 = vmatpush.bf16.msra.mxu0 %v1325
      %1357 = vmatmul.bf16.gmra.mxu0 %v1010
      %v1358 = vpop.f32.mrf.mxu0
      %v1359 = vpop.f32.mrf.mxu0
      %v1360 = vadd.f32 0.0, %v1359
      %1361 = vmatmul.bf16.gmra.mxu0 %v1012
      %v1362 = vpop.f32.mrf.mxu0
      %v1363 = vadd.f32 0.0, %v1362
      %v1364 = vpop.f32.mrf.mxu0
      %v1365 = vadd.f32 0.0, %v1364
      %1366 = vmatmul.bf16.gmra.mxu0 %v1014
      %v1367 = vpop.f32.mrf.mxu0
      %v1368 = vadd.f32 0.0, %v1367
      %v1369 = vpop.f32.mrf.mxu0
      %v1370 = vadd.f32 0.0, %v1369
      %1371 = vmatmul.bf16.gmra.mxu0 %v1016
      %v1372 = vpop.f32.mrf.mxu0
      %v1373 = vadd.f32 0.0, %v1372
      %v1374 = vpop.f32.mrf.mxu0
      %v1375 = vadd.f32 0.0, %v1374
      %1376 = vmatmul.bf16.gmra.mxu0 %v1018
      %v1377 = vpop.f32.mrf.mxu0
      %v1378 = vadd.f32 0.0, %v1377
      %v1379 = vpop.f32.mrf.mxu0
      %v1380 = vadd.f32 0.0, %v1379
      %1381 = vmatmul.bf16.gmra.mxu0 %v1020
      %v1382 = vpop.f32.mrf.mxu0
      %v1383 = vadd.f32 0.0, %v1382
      %v1384 = vpop.f32.mrf.mxu0
      %v1385 = vadd.f32 0.0, %v1384
      %1386 = vmatmul.bf16.gmra.mxu0 %v1022
      %v1387 = vpop.f32.mrf.mxu0
      %v1388 = vadd.f32 0.0, %v1387
      %v1389 = vpop.f32.mrf.mxu0
      %v1390 = vadd.f32 0.0, %v1389
      %1391 = vdwg.mxu0
      %1392 = vmatpush.bf16.msra.mxu0 0
      %1393 = vmatpush.bf16.msra.mxu0 0
      %1394 = vmatpush.bf16.msra.mxu0 0
      %1395 = vmatpush.bf16.msra.mxu0 0
      %1396 = vmatpush.bf16.msra.mxu0 %v1336
      %1397 = vmatpush.bf16.msra.mxu0 %v1335
      %1398 = vmatpush.bf16.msra.mxu0 %v1334
      %1399 = vmatpush.bf16.msra.mxu0 %v1333
      %1400 = vmatmul.bf16.gmra.mxu0 %v1121
      %v1401 = vpop.f32.mrf.mxu0
      %v1402 = vpop.f32.mrf.mxu0
      %v1403 = vadd.f32 %v1360, %v1402
      %1404 = vmatmul.bf16.gmra.mxu0 %v1124
      %v1405 = vpop.f32.mrf.mxu0
      %v1406 = vadd.f32 %v1363, %v1405
      %v1407 = vpop.f32.mrf.mxu0
      %v1408 = vadd.f32 %v1365, %v1407
      %1409 = vmatmul.bf16.gmra.mxu0 %v1127
      %v1410 = vpop.f32.mrf.mxu0
      %v1411 = vadd.f32 %v1368, %v1410
      %v1412 = vpop.f32.mrf.mxu0
      %v1413 = vadd.f32 %v1370, %v1412
      %1414 = vmatmul.bf16.gmra.mxu0 %v1130
      %v1415 = vpop.f32.mrf.mxu0
      %v1416 = vadd.f32 %v1373, %v1415
      %v1417 = vpop.f32.mrf.mxu0
      %v1418 = vadd.f32 %v1375, %v1417
      %1419 = vmatmul.bf16.gmra.mxu0 %v1133
      %v1420 = vpop.f32.mrf.mxu0
      %v1421 = vadd.f32 %v1378, %v1420
      %v1422 = vpop.f32.mrf.mxu0
      %v1423 = vadd.f32 %v1380, %v1422
      %1424 = vmatmul.bf16.gmra.mxu0 %v1136
      %v1425 = vpop.f32.mrf.mxu0
      %v1426 = vadd.f32 %v1383, %v1425
      %v1427 = vpop.f32.mrf.mxu0
      %v1428 = vadd.f32 %v1385, %v1427
      %1429 = vmatmul.bf16.gmra.mxu0 %v1139
      %v1430 = vpop.f32.mrf.mxu0
      %v1431 = vadd.f32 %v1388, %v1430
      %v1432 = vpop.f32.mrf.mxu0
      %v1433 = vadd.f32 %v1390, %v1432
      %1434 = vdwg.mxu0
      %v1459 = vunpack.c.l.b16 %v1228
      %v1460 = vunpack.c.l.b16 %v1229
      %v1461 = vunpack.c.l.b16 %v1230
      %v1462 = vunpack.c.l.b16 %v1231
      %v1463 = vunpack.c.l.b16 %v1232
      %v1464 = vunpack.c.l.b16 %v1233
      %v1465 = vunpack.c.l.b16 %v1234
      %v1466 = vunpack.c.l.b16 %v1235
      %v1467 = vunpack.c.l.b16 %v1236
      %v1468 = vunpack.c.l.b16 %v1237
      %v1469 = vunpack.c.l.b16 %v1238
      %v1470 = vunpack.c.l.b16 %v1239
      %v1471 = vunpack.c.l.b16 %v1240
      %v1472 = vunpack.c.l.b16 %v1241
      %v1473 = vunpack.c.l.b16 %v1242
      %v1474 = vunpack.c.l.b16 %v1243
      %v1475 = vunpack.c.l.b16 %v1244
      %v1476 = vunpack.c.l.b16 %v1245
      %v1477 = vunpack.c.l.b16 %v1246
      %v1478 = vunpack.c.l.b16 %v1247
      %v1479 = vunpack.c.l.b16 %v1248
      %v1480 = vunpack.c.l.b16 %v1249
      %v1481 = vunpack.c.l.b16 %v1250
      %v1482 = vunpack.c.l.b16 %v1251
      %v1483 = vpack.c.b16 %v1460, %v1459
      %v1484 = vpack.c.b16 %v1462, %v1461
      %v1485 = vpack.c.b16 %v1464, %v1463
      %v1486 = vpack.c.b16 %v1466, %v1465
      %v1487 = vpack.c.b16 %v1468, %v1467
      %v1488 = vpack.c.b16 %v1470, %v1469
      %v1489 = vpack.c.b16 %v1472, %v1471
      %v1490 = vpack.c.b16 %v1474, %v1473
      %v1491 = vpack.c.b16 %v1476, %v1475
      %v1492 = vpack.c.b16 %v1478, %v1477
      %v1493 = vpack.c.b16 %v1480, %v1479
      %v1494 = vpack.c.b16 %v1482, %v1481
      %1507 = vmatpush.bf16.msra.mxu0 %v1490
      %1508 = vmatpush.bf16.msra.mxu0 %v1489
      %1509 = vmatpush.bf16.msra.mxu0 %v1488
      %1510 = vmatpush.bf16.msra.mxu0 %v1487
      %1511 = vmatpush.bf16.msra.mxu0 %v1486
      %1512 = vmatpush.bf16.msra.mxu0 %v1485
      %1513 = vmatpush.bf16.msra.mxu0 %v1484
      %1514 = vmatpush.bf16.msra.mxu0 %v1483
      %1515 = vmatmul.bf16.gmra.mxu0 %v1010
      %v1516 = vpop.f32.mrf.mxu0
      %v1517 = vadd.f32 0.0, %v1516
      %v1518 = vpop.f32.mrf.mxu0
      %v1519 = vadd.f32 %v1194, %v1518
      %1520 = vmatmul.bf16.gmra.mxu0 %v1012
      %v1521 = vpop.f32.mrf.mxu0
      %v1522 = vadd.f32 %v1196, %v1521
      %v1523 = vpop.f32.mrf.mxu0
      %v1524 = vadd.f32 %v1199, %v1523
      %1525 = vmatmul.bf16.gmra.mxu0 %v1014
      %v1526 = vpop.f32.mrf.mxu0
      %v1527 = vadd.f32 %v1201, %v1526
      %v1528 = vpop.f32.mrf.mxu0
      %v1529 = vadd.f32 %v1204, %v1528
      %1530 = vmatmul.bf16.gmra.mxu0 %v1016
      %v1531 = vpop.f32.mrf.mxu0
      %v1532 = vadd.f32 %v1206, %v1531
      %v1533 = vpop.f32.mrf.mxu0
      %v1534 = vadd.f32 %v1209, %v1533
      %1535 = vmatmul.bf16.gmra.mxu0 %v1018
      %v1536 = vpop.f32.mrf.mxu0
      %v1537 = vadd.f32 %v1211, %v1536
      %v1538 = vpop.f32.mrf.mxu0
      %v1539 = vadd.f32 %v1214, %v1538
      %1540 = vmatmul.bf16.gmra.mxu0 %v1020
      %v1541 = vpop.f32.mrf.mxu0
      %v1542 = vadd.f32 %v1216, %v1541
      %v1543 = vpop.f32.mrf.mxu0
      %v1544 = vadd.f32 %v1219, %v1543
      %1545 = vmatmul.bf16.gmra.mxu0 %v1022
      %v1546 = vpop.f32.mrf.mxu0
      %v1547 = vadd.f32 %v1221, %v1546
      %v1548 = vpop.f32.mrf.mxu0
      %v1549 = vadd.f32 %v1224, %v1548
      %1550 = vdwg.mxu0
      %1551 = vmatpush.bf16.msra.mxu0 0
      %1552 = vmatpush.bf16.msra.mxu0 0
      %1553 = vmatpush.bf16.msra.mxu0 0
      %1554 = vmatpush.bf16.msra.mxu0 0
      %1555 = vmatpush.bf16.msra.mxu0 %v1494
      %1556 = vmatpush.bf16.msra.mxu0 %v1493
      %1557 = vmatpush.bf16.msra.mxu0 %v1492
      %1558 = vmatpush.bf16.msra.mxu0 %v1491
      %1559 = vmatmul.bf16.gmra.mxu0 %v1121
      %v1560 = vpop.f32.mrf.mxu0
      %v1561 = vadd.f32 %v1517, %v1560
      %v1562 = vpop.f32.mrf.mxu0
      %v1563 = vadd.f32 %v1519, %v1562
      %1564 = vmatmul.bf16.gmra.mxu0 %v1124
      %v1565 = vpop.f32.mrf.mxu0
      %v1566 = vadd.f32 %v1522, %v1565
      %v1567 = vpop.f32.mrf.mxu0
      %v1568 = vadd.f32 %v1524, %v1567
      %1569 = vmatmul.bf16.gmra.mxu0 %v1127
      %v1570 = vpop.f32.mrf.mxu0
      %v1571 = vadd.f32 %v1527, %v1570
      %v1572 = vpop.f32.mrf.mxu0
      %v1573 = vadd.f32 %v1529, %v1572
      %1574 = vmatmul.bf16.gmra.mxu0 %v1130
      %v1575 = vpop.f32.mrf.mxu0
      %v1576 = vadd.f32 %v1532, %v1575
      %v1577 = vpop.f32.mrf.mxu0
      %v1578 = vadd.f32 %v1534, %v1577
      %1579 = vmatmul.bf16.gmra.mxu0 %v1133
      %v1580 = vpop.f32.mrf.mxu0
      %v1581 = vadd.f32 %v1537, %v1580
      %v1582 = vpop.f32.mrf.mxu0
      %v1583 = vadd.f32 %v1539, %v1582
      %1584 = vmatmul.bf16.gmra.mxu0 %v1136
      %v1585 = vpop.f32.mrf.mxu0
      %v1586 = vadd.f32 %v1542, %v1585
      %v1587 = vpop.f32.mrf.mxu0
      %v1588 = vadd.f32 %v1544, %v1587
      %1589 = vmatmul.bf16.gmra.mxu0 %v1139
      %v1590 = vpop.f32.mrf.mxu0
      %v1591 = vadd.f32 %v1547, %v1590
      %v1592 = vpop.f32.mrf.mxu0
      %v1593 = vadd.f32 %v1549, %v1592
      %1594 = vdwg.mxu0
      %v1595 = vadd.f32 %v1561, %v1403
      %v1596 = vadd.f32 %v1563, %v1406
      %v1597 = vadd.f32 %v1566, %v1408
      %v1598 = vadd.f32 %v1568, %v1411
      %v1599 = vadd.f32 %v1571, %v1413
      %v1600 = vadd.f32 %v1573, %v1416
      %v1601 = vadd.f32 %v1576, %v1418
      %v1602 = vadd.f32 %v1578, %v1421
      %v1603 = vadd.f32 %v1581, %v1423
      %v1604 = vadd.f32 %v1583, %v1426
      %v1605 = vadd.f32 %v1586, %v1428
      %v1606 = vadd.f32 %v1588, %v1431
      %v1607 = vadd.f32 %v1591, %v1433
      %v1608 = vadd.f32 %v1593, 0.0
      %v1609 = vld [vmem:[%s2] sm:$0x1]
      %v1611 = vperm.slane %v1609, 0
      %v1613 = vadd.f32 %v1595, %v1611
      %v1614 = vadd.f32 %v1596, %v1611
      %v1615 = vadd.f32 %v1597, %v1611
      %v1616 = vadd.f32 %v1598, %v1611
      %v1617 = vadd.f32 %v1599, %v1611
      %v1618 = vadd.f32 %v1600, %v1611
      %v1619 = vadd.f32 %v1601, %v1611
      %v1620 = vadd.f32 %v1602, %v1611
      %v1621 = vadd.f32 %v1603, %v1611
      %v1622 = vadd.f32 %v1604, %v1611
      %v1623 = vadd.f32 %v1605, %v1611
      %v1624 = vadd.f32 %v1606, %v1611
      %v1625 = vadd.f32 %v1607, %v1611
      %v1626 = vadd.f32 %v1608, %v1611
      %v1627 = vmax.f32 %v1613, 0.0
      %v1628 = vmax.f32 %v1614, 0.0
      %v1629 = vmax.f32 %v1615, 0.0
      %v1630 = vmax.f32 %v1616, 0.0
      %v1631 = vmax.f32 %v1617, 0.0
      %v1632 = vmax.f32 %v1618, 0.0
      %v1633 = vmax.f32 %v1619, 0.0
      %v1634 = vmax.f32 %v1620, 0.0
      %v1635 = vmax.f32 %v1621, 0.0
      %v1636 = vmax.f32 %v1622, 0.0
      %v1637 = vmax.f32 %v1623, 0.0
      %v1638 = vmax.f32 %v1624, 0.0
      %v1639 = vmax.f32 %v1625, 0.0
      %v1640 = vmax.f32 %v1626, 0.0
      %v1641 = vsel %vm741, %v1627, 0.0
      %v1642 = vsel %vm742, %v1628, 0.0
      %v1643 = vsel %vm743, %v1629, 0.0
      %v1644 = vsel %vm744, %v1630, 0.0
      %v1645 = vsel %vm745, %v1631, 0.0
      %v1646 = vsel %vm746, %v1632, 0.0
      %v1647 = vsel %vm747, %v1633, 0.0
      %v1648 = vsel %vm748, %v1634, 0.0
      %v1649 = vsel %vm749, %v1635, 0.0
      %v1650 = vsel %vm750, %v1636, 0.0
      %v1651 = vsel %vm751, %v1637, 0.0
      %v1652 = vsel %vm752, %v1638, 0.0
      %v1653 = vsel %vm753, %v1639, 0.0
      %v1654 = vsel %vm754, %v1640, 0.0
      %v1669 = vrot.slane %v1641, 7
      %v1670 = vrot.slane %v1642, 7
      %v1671 = vsel %vm783, %v1669, %v1670
      %v1672 = vrot.slane %v1643, 7
      %v1673 = vsel %vm783, %v1670, %v1672
      %v1674 = vrot.slane %v1644, 7
      %v1675 = vsel %vm783, %v1672, %v1674
      %v1676 = vrot.slane %v1645, 7
      %v1677 = vsel %vm783, %v1674, %v1676
      %v1678 = vrot.slane %v1646, 7
      %v1679 = vsel %vm783, %v1676, %v1678
      %v1680 = vrot.slane %v1647, 7
      %v1681 = vsel %vm783, %v1678, %v1680
      %v1682 = vrot.slane %v1648, 7
      %v1683 = vsel %vm783, %v1680, %v1682
      %v1684 = vrot.slane %v1649, 7
      %v1685 = vsel %vm783, %v1682, %v1684
      %v1686 = vrot.slane %v1650, 7
      %v1687 = vsel %vm783, %v1684, %v1686
      %v1688 = vrot.slane %v1651, 7
      %v1689 = vsel %vm783, %v1686, %v1688
      %v1690 = vrot.slane %v1652, 7
      %v1691 = vsel %vm783, %v1688, %v1690
      %v1692 = vrot.slane %v1653, 7
      %v1693 = vsel %vm783, %v1690, %v1692
      %v1694 = vrot.slane %v1654, 7
      %v1695 = vsel %vm783, %v1692, %v1694
      %v1710 = vsel %vm783, 0.0, %v1669
      %v1711 = vsel %vm840, %v1710, 0.0
      %v1712 = vsel %vm841, %v1671, 0.0
      %v1713 = vsel %vm842, %v1673, 0.0
      %v1714 = vsel %vm843, %v1675, 0.0
      %v1715 = vsel %vm844, %v1677, 0.0
      %v1716 = vsel %vm845, %v1679, 0.0
      %v1717 = vsel %vm846, %v1681, 0.0
      %v1718 = vsel %vm847, %v1683, 0.0
      %v1719 = vsel %vm848, %v1685, 0.0
      %v1720 = vsel %vm849, %v1687, 0.0
      %v1721 = vsel %vm850, %v1689, 0.0
      %v1722 = vsel %vm851, %v1691, 0.0
      %v1723 = vsel %vm852, %v1693, 0.0
      %v1724 = vsel %vm853, %v1695, 0.0
      %v1725 = vrot.slane %v1641, 1
      %v1726 = vrot.slane %v1642, 1
      %v1727 = vsel %vm868, %v1725, %v1726
      %v1728 = vrot.slane %v1643, 1
      %v1729 = vsel %vm868, %v1726, %v1728
      %v1730 = vrot.slane %v1644, 1
      %v1731 = vsel %vm868, %v1728, %v1730
      %v1732 = vrot.slane %v1645, 1
      %v1733 = vsel %vm868, %v1730, %v1732
      %v1734 = vrot.slane %v1646, 1
      %v1735 = vsel %vm868, %v1732, %v1734
      %v1736 = vrot.slane %v1647, 1
      %v1737 = vsel %vm868, %v1734, %v1736
      %v1738 = vrot.slane %v1648, 1
      %v1739 = vsel %vm868, %v1736, %v1738
      %v1740 = vrot.slane %v1649, 1
      %v1741 = vsel %vm868, %v1738, %v1740
      %v1742 = vrot.slane %v1650, 1
      %v1743 = vsel %vm868, %v1740, %v1742
      %v1744 = vrot.slane %v1651, 1
      %v1745 = vsel %vm868, %v1742, %v1744
      %v1746 = vrot.slane %v1652, 1
      %v1747 = vsel %vm868, %v1744, %v1746
      %v1748 = vrot.slane %v1653, 1
      %v1749 = vsel %vm868, %v1746, %v1748
      %v1750 = vrot.slane %v1654, 1
      %v1751 = vsel %vm868, %v1748, %v1750
      %v1766 = vsel %vm868, %v1750, 0.0
      %v1767 = vsel %vm925, %v1727, 0.0
      %v1768 = vsel %vm926, %v1729, 0.0
      %v1769 = vsel %vm927, %v1731, 0.0
      %v1770 = vsel %vm928, %v1733, 0.0
      %v1771 = vsel %vm929, %v1735, 0.0
      %v1772 = vsel %vm930, %v1737, 0.0
      %v1773 = vsel %vm931, %v1739, 0.0
      %v1774 = vsel %vm932, %v1741, 0.0
      %v1775 = vsel %vm933, %v1743, 0.0
      %v1776 = vsel %vm934, %v1745, 0.0
      %v1777 = vsel %vm935, %v1747, 0.0
      %v1778 = vsel %vm936, %v1749, 0.0
      %v1779 = vsel %vm937, %v1751, 0.0
      %v1780 = vsel %vm938, %v1766, 0.0
      %v1781 = vpack.c.bf16 %v1712, %v1711
      %v1782 = vpack.c.bf16 %v1642, %v1641
      %v1783 = vpack.c.bf16 %v1768, %v1767
      %v1784 = vpack.c.bf16 %v1714, %v1713
      %v1785 = vpack.c.bf16 %v1644, %v1643
      %v1786 = vpack.c.bf16 %v1770, %v1769
      %v1787 = vpack.c.bf16 %v1716, %v1715
      %v1788 = vpack.c.bf16 %v1646, %v1645
      %v1789 = vpack.c.bf16 %v1772, %v1771
      %v1790 = vpack.c.bf16 %v1718, %v1717
      %v1791 = vpack.c.bf16 %v1648, %v1647
      %v1792 = vpack.c.bf16 %v1774, %v1773
      %v1793 = vpack.c.bf16 %v1720, %v1719
      %v1794 = vpack.c.bf16 %v1650, %v1649
      %v1795 = vpack.c.bf16 %v1776, %v1775
      %v1796 = vpack.c.bf16 %v1722, %v1721
      %v1797 = vpack.c.bf16 %v1652, %v1651
      %v1798 = vpack.c.bf16 %v1778, %v1777
      %v1799 = vpack.c.bf16 %v1724, %v1723
      %v1800 = vpack.c.bf16 %v1654, %v1653
      %v1801 = vpack.c.bf16 %v1780, %v1779
      %v1802 = vld [vmem:[%s3] sm:$0xf]
      %v1803 = vld [vmem:[%s3 + $0x4] sm:$0xf]
      %v1804 = vld [vmem:[%s3 + $0x8] sm:$0xf]
      %v1805 = vld [vmem:[%s3 + $0xc] sm:$0xf]
      %v1806 = vld [vmem:[%s3 + $0x10] sm:$0xf]
      %v1807 = vld [vmem:[%s3 + $0x14] sm:$0xf]
      %v1808 = vld [vmem:[%s3 + $0x18] sm:$0xf]
      %v1809 = vld [vmem:[%s3 + $0x1c] sm:$0xf]
      %v1810 = vld [vmem:[%s3 + $0x20] sm:$0xf]
      %v1811 = vld [vmem:[%s3 + $0x24] sm:$0xf]
      %v1812 = vld [vmem:[%s3 + $0x28] sm:$0xf]
      %v1813 = vld [vmem:[%s3 + $0x2c] sm:$0xf]
      %v1814 = vld [vmem:[%s3 + $0x30] sm:$0xf]
      %v1815 = vld [vmem:[%s3 + $0x34] sm:$0xf]
      %v1816 = vld [vmem:[%s3 + $0x38] sm:$0xf]
      %v1817 = vld [vmem:[%s3 + $0x3c] sm:$0xf]
      %v1818 = vld [vmem:[%s3 + $0x40] sm:$0xf]
      %v1819 = vld [vmem:[%s3 + $0x44] sm:$0xf]
      %v1820 = vld [vmem:[%s3 + $0x48] sm:$0xf]
      %v1821 = vld [vmem:[%s3 + $0x4c] sm:$0xf]
      %v1822 = vld [vmem:[%s3 + $0x50] sm:$0xf]
      %v1823 = vld [vmem:[%s3 + $0x54] sm:$0xf]
      %v1824 = vld [vmem:[%s3 + $0x58] sm:$0xf]
      %v1825 = vld [vmem:[%s3 + $0x5c] sm:$0xf]
      %v1826 = vld [vmem:[%s3 + $0x60] sm:$0xf]
      %v1827 = vld [vmem:[%s3 + $0x64] sm:$0xf]
      %v1828 = vld [vmem:[%s3 + $0x68] sm:$0xf]
      %v1829 = vld [vmem:[%s3 + $0x6c] sm:$0xf]
      %v1830 = vld [vmem:[%s3 + $0x70] sm:$0xf]
      %v1831 = vld [vmem:[%s3 + $0x74] sm:$0xf]
      %v1832 = vld [vmem:[%s3 + $0x78] sm:$0xf]
      %v1833 = vld [vmem:[%s3 + $0x7c] sm:$0xf]
      %v1834 = vld [vmem:[%s3 + $0x80] sm:$0xf]
      %v1835 = vld [vmem:[%s3 + $0x84] sm:$0xf]
      %v1836 = vld [vmem:[%s3 + $0x88] sm:$0xf]
      %v1837 = vld [vmem:[%s3 + $0x8c] sm:$0xf]
      %v1838 = vld [vmem:[%s3 + $0x90] sm:$0xf]
      %v1839 = vld [vmem:[%s3 + $0x94] sm:$0xf]
      %v1840 = vld [vmem:[%s3 + $0x98] sm:$0xf]
      %v1841 = vld [vmem:[%s3 + $0x9c] sm:$0xf]
      %v1842 = vld [vmem:[%s3 + $0xa0] sm:$0xf]
      %v1843 = vld [vmem:[%s3 + $0xa4] sm:$0xf]
      %v1844 = vld [vmem:[%s3 + $0xa8] sm:$0xf]
      %v1845 = vld [vmem:[%s3 + $0xac] sm:$0xf]
      %v1846 = vld [vmem:[%s3 + $0xb0] sm:$0xf]
      %v1847 = vld [vmem:[%s3 + $0xb4] sm:$0xf]
      %v1848 = vld [vmem:[%s3 + $0xb8] sm:$0xf]
      %v1849 = vld [vmem:[%s3 + $0xbc] sm:$0xf]
      %v1898 = vunpack.c.l.b16 %v1802
      %v1899 = vunpack.c.l.b16 %v1803
      %v1900 = vunpack.c.l.b16 %v1804
      %v1901 = vunpack.c.l.b16 %v1805
      %v1902 = vunpack.c.l.b16 %v1806
      %v1903 = vunpack.c.l.b16 %v1807
      %v1904 = vunpack.c.l.b16 %v1808
      %v1905 = vunpack.c.l.b16 %v1809
      %v1906 = vunpack.c.l.b16 %v1810
      %v1907 = vunpack.c.l.b16 %v1811
      %v1908 = vunpack.c.l.b16 %v1812
      %v1909 = vunpack.c.l.b16 %v1813
      %v1910 = vunpack.c.l.b16 %v1814
      %v1911 = vunpack.c.l.b16 %v1815
      %v1912 = vunpack.c.l.b16 %v1816
      %v1913 = vunpack.c.l.b16 %v1817
      %v1914 = vunpack.c.l.b16 %v1818
      %v1915 = vunpack.c.l.b16 %v1819
      %v1916 = vunpack.c.l.b16 %v1820
      %v1917 = vunpack.c.l.b16 %v1821
      %v1918 = vunpack.c.l.b16 %v1822
      %v1919 = vunpack.c.l.b16 %v1823
      %v1920 = vunpack.c.l.b16 %v1824
      %v1921 = vunpack.c.l.b16 %v1825
      %v1922 = vunpack.c.l.b16 %v1826
      %v1923 = vunpack.c.l.b16 %v1827
      %v1924 = vunpack.c.l.b16 %v1828
      %v1925 = vunpack.c.l.b16 %v1829
      %v1926 = vunpack.c.l.b16 %v1830
      %v1927 = vunpack.c.l.b16 %v1831
      %v1928 = vunpack.c.l.b16 %v1832
      %v1929 = vunpack.c.l.b16 %v1833
      %v1930 = vunpack.c.l.b16 %v1834
      %v1931 = vunpack.c.l.b16 %v1835
      %v1932 = vunpack.c.l.b16 %v1836
      %v1933 = vunpack.c.l.b16 %v1837
      %v1934 = vunpack.c.l.b16 %v1838
      %v1935 = vunpack.c.l.b16 %v1839
      %v1936 = vunpack.c.l.b16 %v1840
      %v1937 = vunpack.c.l.b16 %v1841
      %v1938 = vunpack.c.l.b16 %v1842
      %v1939 = vunpack.c.l.b16 %v1843
      %v1940 = vunpack.c.l.b16 %v1844
      %v1941 = vunpack.c.l.b16 %v1845
      %v1942 = vunpack.c.l.b16 %v1846
      %v1943 = vunpack.c.l.b16 %v1847
      %v1944 = vunpack.c.l.b16 %v1848
      %v1945 = vunpack.c.l.b16 %v1849
      %v1946 = vpack.c.b16 %v1899, %v1898
      %v1947 = vpack.c.b16 %v1901, %v1900
      %v1948 = vpack.c.b16 %v1903, %v1902
      %v1949 = vpack.c.b16 %v1905, %v1904
      %v1950 = vpack.c.b16 %v1907, %v1906
      %v1951 = vpack.c.b16 %v1909, %v1908
      %v1952 = vpack.c.b16 %v1911, %v1910
      %v1953 = vpack.c.b16 %v1913, %v1912
      %v1954 = vpack.c.b16 %v1915, %v1914
      %v1955 = vpack.c.b16 %v1917, %v1916
      %v1956 = vpack.c.b16 %v1919, %v1918
      %v1957 = vpack.c.b16 %v1921, %v1920
      %v1958 = vpack.c.b16 %v1923, %v1922
      %v1959 = vpack.c.b16 %v1925, %v1924
      %v1960 = vpack.c.b16 %v1927, %v1926
      %v1961 = vpack.c.b16 %v1929, %v1928
      %v1962 = vpack.c.b16 %v1931, %v1930
      %v1963 = vpack.c.b16 %v1933, %v1932
      %v1964 = vpack.c.b16 %v1935, %v1934
      %v1965 = vpack.c.b16 %v1937, %v1936
      %v1966 = vpack.c.b16 %v1939, %v1938
      %v1967 = vpack.c.b16 %v1941, %v1940
      %v1968 = vpack.c.b16 %v1943, %v1942
      %v1969 = vpack.c.b16 %v1945, %v1944
      %1994 = vmatpush.bf16.msra.mxu0 %v1953
      %1995 = vmatpush.bf16.msra.mxu0 %v1952
      %1996 = vmatpush.bf16.msra.mxu0 %v1951
      %1997 = vmatpush.bf16.msra.mxu0 %v1950
      %1998 = vmatpush.bf16.msra.mxu0 %v1949
      %1999 = vmatpush.bf16.msra.mxu0 %v1948
      %2000 = vmatpush.bf16.msra.mxu0 %v1947
      %2001 = vmatpush.bf16.msra.mxu0 %v1946
      %2002 = vmatmul.bf16.gmra.mxu0 %v1781
      %v2003 = vpop.f32.mrf.mxu0
      %v2004 = vadd.f32 0.0, %v2003
      %v2005 = vpop.f32.mrf.mxu0
      %v2006 = vadd.f32 0.0, %v2005
      %2007 = vmatmul.bf16.gmra.mxu0 %v1784
      %v2008 = vpop.f32.mrf.mxu0
      %v2009 = vadd.f32 0.0, %v2008
      %v2010 = vpop.f32.mrf.mxu0
      %v2011 = vadd.f32 0.0, %v2010
      %2012 = vmatmul.bf16.gmra.mxu0 %v1787
      %v2013 = vpop.f32.mrf.mxu0
      %v2014 = vadd.f32 0.0, %v2013
      %v2015 = vpop.f32.mrf.mxu0
      %v2016 = vadd.f32 0.0, %v2015
      %2017 = vmatmul.bf16.gmra.mxu0 %v1790
      %v2018 = vpop.f32.mrf.mxu0
      %v2019 = vadd.f32 0.0, %v2018
      %v2020 = vpop.f32.mrf.mxu0
      %v2021 = vadd.f32 0.0, %v2020
      %2022 = vmatmul.bf16.gmra.mxu0 %v1793
      %v2023 = vpop.f32.mrf.mxu0
      %v2024 = vadd.f32 0.0, %v2023
      %v2025 = vpop.f32.mrf.mxu0
      %v2026 = vadd.f32 0.0, %v2025
      %2027 = vmatmul.bf16.gmra.mxu0 %v1796
      %v2028 = vpop.f32.mrf.mxu0
      %v2029 = vadd.f32 0.0, %v2028
      %v2030 = vpop.f32.mrf.mxu0
      %v2031 = vadd.f32 0.0, %v2030
      %2032 = vmatmul.bf16.gmra.mxu0 %v1799
      %v2033 = vpop.f32.mrf.mxu0
      %v2034 = vadd.f32 0.0, %v2033
      %v2035 = vpop.f32.mrf.mxu0
      %2036 = vdwg.mxu0
      %2037 = vmatpush.bf16.msra.mxu0 %v1961
      %2038 = vmatpush.bf16.msra.mxu0 %v1960
      %2039 = vmatpush.bf16.msra.mxu0 %v1959
      %2040 = vmatpush.bf16.msra.mxu0 %v1958
      %2041 = vmatpush.bf16.msra.mxu0 %v1957
      %2042 = vmatpush.bf16.msra.mxu0 %v1956
      %2043 = vmatpush.bf16.msra.mxu0 %v1955
      %2044 = vmatpush.bf16.msra.mxu0 %v1954
      %2045 = vmatmul.bf16.gmra.mxu0 %v1782
      %v2046 = vpop.f32.mrf.mxu0
      %v2047 = vadd.f32 %v2004, %v2046
      %v2048 = vpop.f32.mrf.mxu0
      %v2049 = vadd.f32 %v2006, %v2048
      %2050 = vmatmul.bf16.gmra.mxu0 %v1785
      %v2051 = vpop.f32.mrf.mxu0
      %v2052 = vadd.f32 %v2009, %v2051
      %v2053 = vpop.f32.mrf.mxu0
      %v2054 = vadd.f32 %v2011, %v2053
      %2055 = vmatmul.bf16.gmra.mxu0 %v1788
      %v2056 = vpop.f32.mrf.mxu0
      %v2057 = vadd.f32 %v2014, %v2056
      %v2058 = vpop.f32.mrf.mxu0
      %v2059 = vadd.f32 %v2016, %v2058
      %2060 = vmatmul.bf16.gmra.mxu0 %v1791
      %v2061 = vpop.f32.mrf.mxu0
      %v2062 = vadd.f32 %v2019, %v2061
      %v2063 = vpop.f32.mrf.mxu0
      %v2064 = vadd.f32 %v2021, %v2063
      %2065 = vmatmul.bf16.gmra.mxu0 %v1794
      %v2066 = vpop.f32.mrf.mxu0
      %v2067 = vadd.f32 %v2024, %v2066
      %v2068 = vpop.f32.mrf.mxu0
      %v2069 = vadd.f32 %v2026, %v2068
      %2070 = vmatmul.bf16.gmra.mxu0 %v1797
      %v2071 = vpop.f32.mrf.mxu0
      %v2072 = vadd.f32 %v2029, %v2071
      %v2073 = vpop.f32.mrf.mxu0
      %v2074 = vadd.f32 %v2031, %v2073
      %2075 = vmatmul.bf16.gmra.mxu0 %v1800
      %v2076 = vpop.f32.mrf.mxu0
      %v2077 = vadd.f32 %v2034, %v2076
      %v2078 = vpop.f32.mrf.mxu0
      %2079 = vdwg.mxu0
      %2080 = vmatpush.bf16.msra.mxu0 %v1969
      %2081 = vmatpush.bf16.msra.mxu0 %v1968
      %2082 = vmatpush.bf16.msra.mxu0 %v1967
      %2083 = vmatpush.bf16.msra.mxu0 %v1966
      %2084 = vmatpush.bf16.msra.mxu0 %v1965
      %2085 = vmatpush.bf16.msra.mxu0 %v1964
      %2086 = vmatpush.bf16.msra.mxu0 %v1963
      %2087 = vmatpush.bf16.msra.mxu0 %v1962
      %2088 = vmatmul.bf16.gmra.mxu0 %v1783
      %v2089 = vpop.f32.mrf.mxu0
      %v2090 = vadd.f32 %v2047, %v2089
      %v2091 = vpop.f32.mrf.mxu0
      %v2092 = vadd.f32 %v2049, %v2091
      %2093 = vmatmul.bf16.gmra.mxu0 %v1786
      %v2094 = vpop.f32.mrf.mxu0
      %v2095 = vadd.f32 %v2052, %v2094
      %v2096 = vpop.f32.mrf.mxu0
      %v2097 = vadd.f32 %v2054, %v2096
      %2098 = vmatmul.bf16.gmra.mxu0 %v1789
      %v2099 = vpop.f32.mrf.mxu0
      %v2100 = vadd.f32 %v2057, %v2099
      %v2101 = vpop.f32.mrf.mxu0
      %v2102 = vadd.f32 %v2059, %v2101
      %2103 = vmatmul.bf16.gmra.mxu0 %v1792
      %v2104 = vpop.f32.mrf.mxu0
      %v2105 = vadd.f32 %v2062, %v2104
      %v2106 = vpop.f32.mrf.mxu0
      %v2107 = vadd.f32 %v2064, %v2106
      %2108 = vmatmul.bf16.gmra.mxu0 %v1795
      %v2109 = vpop.f32.mrf.mxu0
      %v2110 = vadd.f32 %v2067, %v2109
      %v2111 = vpop.f32.mrf.mxu0
      %v2112 = vadd.f32 %v2069, %v2111
      %2113 = vmatmul.bf16.gmra.mxu0 %v1798
      %v2114 = vpop.f32.mrf.mxu0
      %v2115 = vadd.f32 %v2072, %v2114
      %v2116 = vpop.f32.mrf.mxu0
      %v2117 = vadd.f32 %v2074, %v2116
      %2118 = vmatmul.bf16.gmra.mxu0 %v1801
      %v2119 = vpop.f32.mrf.mxu0
      %v2120 = vadd.f32 %v2077, %v2119
      %v2121 = vpop.f32.mrf.mxu0
      %2122 = vdwg.mxu0
      %s2123 = scalar_lea.vmem %s3, 192
      %v2124 = vld [vmem:[%s2123] sm:$0xf]
      %v2125 = vld [vmem:[%s2123 + $0x4] sm:$0xf]
      %v2126 = vld [vmem:[%s2123 + $0x8] sm:$0xf]
      %v2127 = vld [vmem:[%s2123 + $0xc] sm:$0xf]
      %v2128 = vld [vmem:[%s2123 + $0x10] sm:$0xf]
      %v2129 = vld [vmem:[%s2123 + $0x14] sm:$0xf]
      %v2130 = vld [vmem:[%s2123 + $0x18] sm:$0xf]
      %v2131 = vld [vmem:[%s2123 + $0x1c] sm:$0xf]
      %v2132 = vld [vmem:[%s2123 + $0x20] sm:$0xf]
      %v2133 = vld [vmem:[%s2123 + $0x24] sm:$0xf]
      %v2134 = vld [vmem:[%s2123 + $0x28] sm:$0xf]
      %v2135 = vld [vmem:[%s2123 + $0x2c] sm:$0xf]
      %v2136 = vld [vmem:[%s2123 + $0x30] sm:$0xf]
      %v2137 = vld [vmem:[%s2123 + $0x34] sm:$0xf]
      %v2138 = vld [vmem:[%s2123 + $0x38] sm:$0xf]
      %v2139 = vld [vmem:[%s2123 + $0x3c] sm:$0xf]
      %v2140 = vld [vmem:[%s2123 + $0x40] sm:$0xf]
      %v2141 = vld [vmem:[%s2123 + $0x44] sm:$0xf]
      %v2142 = vld [vmem:[%s2123 + $0x48] sm:$0xf]
      %v2143 = vld [vmem:[%s2123 + $0x4c] sm:$0xf]
      %v2144 = vld [vmem:[%s2123 + $0x50] sm:$0xf]
      %v2145 = vld [vmem:[%s2123 + $0x54] sm:$0xf]
      %v2146 = vld [vmem:[%s2123 + $0x58] sm:$0xf]
      %v2147 = vld [vmem:[%s2123 + $0x5c] sm:$0xf]
      %v2148 = vld [vmem:[%s2123 + $0x60] sm:$0xf]
      %v2149 = vld [vmem:[%s2123 + $0x64] sm:$0xf]
      %v2150 = vld [vmem:[%s2123 + $0x68] sm:$0xf]
      %v2151 = vld [vmem:[%s2123 + $0x6c] sm:$0xf]
      %v2152 = vld [vmem:[%s2123 + $0x70] sm:$0xf]
      %v2153 = vld [vmem:[%s2123 + $0x74] sm:$0xf]
      %v2154 = vld [vmem:[%s2123 + $0x78] sm:$0xf]
      %v2155 = vld [vmem:[%s2123 + $0x7c] sm:$0xf]
      %v2156 = vld [vmem:[%s2123 + $0x80] sm:$0xf]
      %v2157 = vld [vmem:[%s2123 + $0x84] sm:$0xf]
      %v2158 = vld [vmem:[%s2123 + $0x88] sm:$0xf]
      %v2159 = vld [vmem:[%s2123 + $0x8c] sm:$0xf]
      %v2160 = vld [vmem:[%s2123 + $0x90] sm:$0xf]
      %v2161 = vld [vmem:[%s2123 + $0x94] sm:$0xf]
      %v2162 = vld [vmem:[%s2123 + $0x98] sm:$0xf]
      %v2163 = vld [vmem:[%s2123 + $0x9c] sm:$0xf]
      %v2164 = vld [vmem:[%s2123 + $0xa0] sm:$0xf]
      %v2165 = vld [vmem:[%s2123 + $0xa4] sm:$0xf]
      %v2166 = vld [vmem:[%s2123 + $0xa8] sm:$0xf]
      %v2167 = vld [vmem:[%s2123 + $0xac] sm:$0xf]
      %v2168 = vld [vmem:[%s2123 + $0xb0] sm:$0xf]
      %v2169 = vld [vmem:[%s2123 + $0xb4] sm:$0xf]
      %v2170 = vld [vmem:[%s2123 + $0xb8] sm:$0xf]
      %v2171 = vld [vmem:[%s2123 + $0xbc] sm:$0xf]
      %s2172 = scalar_lea.vmem %s3, 384
      %v2173 = vld [vmem:[%s2172] sm:$0xf]
      %v2174 = vld [vmem:[%s2172 + $0x4] sm:$0xf]
      %v2175 = vld [vmem:[%s2172 + $0x8] sm:$0xf]
      %v2176 = vld [vmem:[%s2172 + $0xc] sm:$0xf]
      %v2177 = vld [vmem:[%s2172 + $0x10] sm:$0xf]
      %v2178 = vld [vmem:[%s2172 + $0x14] sm:$0xf]
      %v2179 = vld [vmem:[%s2172 + $0x18] sm:$0xf]
      %v2180 = vld [vmem:[%s2172 + $0x1c] sm:$0xf]
      %v2181 = vld [vmem:[%s2172 + $0x20] sm:$0xf]
      %v2182 = vld [vmem:[%s2172 + $0x24] sm:$0xf]
      %v2183 = vld [vmem:[%s2172 + $0x28] sm:$0xf]
      %v2184 = vld [vmem:[%s2172 + $0x2c] sm:$0xf]
      %v2185 = vld [vmem:[%s2172 + $0x30] sm:$0xf]
      %v2186 = vld [vmem:[%s2172 + $0x34] sm:$0xf]
      %v2187 = vld [vmem:[%s2172 + $0x38] sm:$0xf]
      %v2188 = vld [vmem:[%s2172 + $0x3c] sm:$0xf]
      %v2189 = vld [vmem:[%s2172 + $0x40] sm:$0xf]
      %v2190 = vld [vmem:[%s2172 + $0x44] sm:$0xf]
      %v2191 = vld [vmem:[%s2172 + $0x48] sm:$0xf]
      %v2192 = vld [vmem:[%s2172 + $0x4c] sm:$0xf]
      %v2193 = vld [vmem:[%s2172 + $0x50] sm:$0xf]
      %v2194 = vld [vmem:[%s2172 + $0x54] sm:$0xf]
      %v2195 = vld [vmem:[%s2172 + $0x58] sm:$0xf]
      %v2196 = vld [vmem:[%s2172 + $0x5c] sm:$0xf]
      %v2197 = vld [vmem:[%s2172 + $0x60] sm:$0xf]
      %v2198 = vld [vmem:[%s2172 + $0x64] sm:$0xf]
      %v2199 = vld [vmem:[%s2172 + $0x68] sm:$0xf]
      %v2200 = vld [vmem:[%s2172 + $0x6c] sm:$0xf]
      %v2201 = vld [vmem:[%s2172 + $0x70] sm:$0xf]
      %v2202 = vld [vmem:[%s2172 + $0x74] sm:$0xf]
      %v2203 = vld [vmem:[%s2172 + $0x78] sm:$0xf]
      %v2204 = vld [vmem:[%s2172 + $0x7c] sm:$0xf]
      %v2205 = vld [vmem:[%s2172 + $0x80] sm:$0xf]
      %v2206 = vld [vmem:[%s2172 + $0x84] sm:$0xf]
      %v2207 = vld [vmem:[%s2172 + $0x88] sm:$0xf]
      %v2208 = vld [vmem:[%s2172 + $0x8c] sm:$0xf]
      %v2209 = vld [vmem:[%s2172 + $0x90] sm:$0xf]
      %v2210 = vld [vmem:[%s2172 + $0x94] sm:$0xf]
      %v2211 = vld [vmem:[%s2172 + $0x98] sm:$0xf]
      %v2212 = vld [vmem:[%s2172 + $0x9c] sm:$0xf]
      %v2213 = vld [vmem:[%s2172 + $0xa0] sm:$0xf]
      %v2214 = vld [vmem:[%s2172 + $0xa4] sm:$0xf]
      %v2215 = vld [vmem:[%s2172 + $0xa8] sm:$0xf]
      %v2216 = vld [vmem:[%s2172 + $0xac] sm:$0xf]
      %v2217 = vld [vmem:[%s2172 + $0xb0] sm:$0xf]
      %v2218 = vld [vmem:[%s2172 + $0xb4] sm:$0xf]
      %v2219 = vld [vmem:[%s2172 + $0xb8] sm:$0xf]
      %v2220 = vld [vmem:[%s2172 + $0xbc] sm:$0xf]
      %v2269 = vunpack.c.l.b16 %v2173
      %v2270 = vunpack.c.l.b16 %v2174
      %v2271 = vunpack.c.l.b16 %v2175
      %v2272 = vunpack.c.l.b16 %v2176
      %v2273 = vunpack.c.l.b16 %v2177
      %v2274 = vunpack.c.l.b16 %v2178
      %v2275 = vunpack.c.l.b16 %v2179
      %v2276 = vunpack.c.l.b16 %v2180
      %v2277 = vunpack.c.l.b16 %v2181
      %v2278 = vunpack.c.l.b16 %v2182
      %v2279 = vunpack.c.l.b16 %v2183
      %v2280 = vunpack.c.l.b16 %v2184
      %v2281 = vunpack.c.l.b16 %v2185
      %v2282 = vunpack.c.l.b16 %v2186
      %v2283 = vunpack.c.l.b16 %v2187
      %v2284 = vunpack.c.l.b16 %v2188
      %v2285 = vunpack.c.l.b16 %v2189
      %v2286 = vunpack.c.l.b16 %v2190
      %v2287 = vunpack.c.l.b16 %v2191
      %v2288 = vunpack.c.l.b16 %v2192
      %v2289 = vunpack.c.l.b16 %v2193
      %v2290 = vunpack.c.l.b16 %v2194
      %v2291 = vunpack.c.l.b16 %v2195
      %v2292 = vunpack.c.l.b16 %v2196
      %v2293 = vunpack.c.l.b16 %v2197
      %v2294 = vunpack.c.l.b16 %v2198
      %v2295 = vunpack.c.l.b16 %v2199
      %v2296 = vunpack.c.l.b16 %v2200
      %v2297 = vunpack.c.l.b16 %v2201
      %v2298 = vunpack.c.l.b16 %v2202
      %v2299 = vunpack.c.l.b16 %v2203
      %v2300 = vunpack.c.l.b16 %v2204
      %v2301 = vunpack.c.l.b16 %v2205
      %v2302 = vunpack.c.l.b16 %v2206
      %v2303 = vunpack.c.l.b16 %v2207
      %v2304 = vunpack.c.l.b16 %v2208
      %v2305 = vunpack.c.l.b16 %v2209
      %v2306 = vunpack.c.l.b16 %v2210
      %v2307 = vunpack.c.l.b16 %v2211
      %v2308 = vunpack.c.l.b16 %v2212
      %v2309 = vunpack.c.l.b16 %v2213
      %v2310 = vunpack.c.l.b16 %v2214
      %v2311 = vunpack.c.l.b16 %v2215
      %v2312 = vunpack.c.l.b16 %v2216
      %v2313 = vunpack.c.l.b16 %v2217
      %v2314 = vunpack.c.l.b16 %v2218
      %v2315 = vunpack.c.l.b16 %v2219
      %v2316 = vunpack.c.l.b16 %v2220
      %v2317 = vpack.c.b16 %v2270, %v2269
      %v2318 = vpack.c.b16 %v2272, %v2271
      %v2319 = vpack.c.b16 %v2274, %v2273
      %v2320 = vpack.c.b16 %v2276, %v2275
      %v2321 = vpack.c.b16 %v2278, %v2277
      %v2322 = vpack.c.b16 %v2280, %v2279
      %v2323 = vpack.c.b16 %v2282, %v2281
      %v2324 = vpack.c.b16 %v2284, %v2283
      %v2325 = vpack.c.b16 %v2286, %v2285
      %v2326 = vpack.c.b16 %v2288, %v2287
      %v2327 = vpack.c.b16 %v2290, %v2289
      %v2328 = vpack.c.b16 %v2292, %v2291
      %v2329 = vpack.c.b16 %v2294, %v2293
      %v2330 = vpack.c.b16 %v2296, %v2295
      %v2331 = vpack.c.b16 %v2298, %v2297
      %v2332 = vpack.c.b16 %v2300, %v2299
      %v2333 = vpack.c.b16 %v2302, %v2301
      %v2334 = vpack.c.b16 %v2304, %v2303
      %v2335 = vpack.c.b16 %v2306, %v2305
      %v2336 = vpack.c.b16 %v2308, %v2307
      %v2337 = vpack.c.b16 %v2310, %v2309
      %v2338 = vpack.c.b16 %v2312, %v2311
      %v2339 = vpack.c.b16 %v2314, %v2313
      %v2340 = vpack.c.b16 %v2316, %v2315
      %2365 = vmatpush.bf16.msra.mxu0 %v2324
      %2366 = vmatpush.bf16.msra.mxu0 %v2323
      %2367 = vmatpush.bf16.msra.mxu0 %v2322
      %2368 = vmatpush.bf16.msra.mxu0 %v2321
      %2369 = vmatpush.bf16.msra.mxu0 %v2320
      %2370 = vmatpush.bf16.msra.mxu0 %v2319
      %2371 = vmatpush.bf16.msra.mxu0 %v2318
      %2372 = vmatpush.bf16.msra.mxu0 %v2317
      %2373 = vmatmul.bf16.gmra.mxu0 %v1781
      %v2374 = vpop.f32.mrf.mxu0
      %v2375 = vpop.f32.mrf.mxu0
      %v2376 = vadd.f32 0.0, %v2375
      %2377 = vmatmul.bf16.gmra.mxu0 %v1784
      %v2378 = vpop.f32.mrf.mxu0
      %v2379 = vadd.f32 0.0, %v2378
      %v2380 = vpop.f32.mrf.mxu0
      %v2381 = vadd.f32 0.0, %v2380
      %2382 = vmatmul.bf16.gmra.mxu0 %v1787
      %v2383 = vpop.f32.mrf.mxu0
      %v2384 = vadd.f32 0.0, %v2383
      %v2385 = vpop.f32.mrf.mxu0
      %v2386 = vadd.f32 0.0, %v2385
      %2387 = vmatmul.bf16.gmra.mxu0 %v1790
      %v2388 = vpop.f32.mrf.mxu0
      %v2389 = vadd.f32 0.0, %v2388
      %v2390 = vpop.f32.mrf.mxu0
      %v2391 = vadd.f32 0.0, %v2390
      %2392 = vmatmul.bf16.gmra.mxu0 %v1793
      %v2393 = vpop.f32.mrf.mxu0
      %v2394 = vadd.f32 0.0, %v2393
      %v2395 = vpop.f32.mrf.mxu0
      %v2396 = vadd.f32 0.0, %v2395
      %2397 = vmatmul.bf16.gmra.mxu0 %v1796
      %v2398 = vpop.f32.mrf.mxu0
      %v2399 = vadd.f32 0.0, %v2398
      %v2400 = vpop.f32.mrf.mxu0
      %v2401 = vadd.f32 0.0, %v2400
      %2402 = vmatmul.bf16.gmra.mxu0 %v1799
      %v2403 = vpop.f32.mrf.mxu0
      %v2404 = vadd.f32 0.0, %v2403
      %v2405 = vpop.f32.mrf.mxu0
      %v2406 = vadd.f32 0.0, %v2405
      %2407 = vdwg.mxu0
      %2408 = vmatpush.bf16.msra.mxu0 %v2332
      %2409 = vmatpush.bf16.msra.mxu0 %v2331
      %2410 = vmatpush.bf16.msra.mxu0 %v2330
      %2411 = vmatpush.bf16.msra.mxu0 %v2329
      %2412 = vmatpush.bf16.msra.mxu0 %v2328
      %2413 = vmatpush.bf16.msra.mxu0 %v2327
      %2414 = vmatpush.bf16.msra.mxu0 %v2326
      %2415 = vmatpush.bf16.msra.mxu0 %v2325
      %2416 = vmatmul.bf16.gmra.mxu0 %v1782
      %v2417 = vpop.f32.mrf.mxu0
      %v2418 = vpop.f32.mrf.mxu0
      %v2419 = vadd.f32 %v2376, %v2418
      %2420 = vmatmul.bf16.gmra.mxu0 %v1785
      %v2421 = vpop.f32.mrf.mxu0
      %v2422 = vadd.f32 %v2379, %v2421
      %v2423 = vpop.f32.mrf.mxu0
      %v2424 = vadd.f32 %v2381, %v2423
      %2425 = vmatmul.bf16.gmra.mxu0 %v1788
      %v2426 = vpop.f32.mrf.mxu0
      %v2427 = vadd.f32 %v2384, %v2426
      %v2428 = vpop.f32.mrf.mxu0
      %v2429 = vadd.f32 %v2386, %v2428
      %2430 = vmatmul.bf16.gmra.mxu0 %v1791
      %v2431 = vpop.f32.mrf.mxu0
      %v2432 = vadd.f32 %v2389, %v2431
      %v2433 = vpop.f32.mrf.mxu0
      %v2434 = vadd.f32 %v2391, %v2433
      %2435 = vmatmul.bf16.gmra.mxu0 %v1794
      %v2436 = vpop.f32.mrf.mxu0
      %v2437 = vadd.f32 %v2394, %v2436
      %v2438 = vpop.f32.mrf.mxu0
      %v2439 = vadd.f32 %v2396, %v2438
      %2440 = vmatmul.bf16.gmra.mxu0 %v1797
      %v2441 = vpop.f32.mrf.mxu0
      %v2442 = vadd.f32 %v2399, %v2441
      %v2443 = vpop.f32.mrf.mxu0
      %v2444 = vadd.f32 %v2401, %v2443
      %2445 = vmatmul.bf16.gmra.mxu0 %v1800
      %v2446 = vpop.f32.mrf.mxu0
      %v2447 = vadd.f32 %v2404, %v2446
      %v2448 = vpop.f32.mrf.mxu0
      %v2449 = vadd.f32 %v2406, %v2448
      %2450 = vdwg.mxu0
      %2451 = vmatpush.bf16.msra.mxu0 %v2340
      %2452 = vmatpush.bf16.msra.mxu0 %v2339
      %2453 = vmatpush.bf16.msra.mxu0 %v2338
      %2454 = vmatpush.bf16.msra.mxu0 %v2337
      %2455 = vmatpush.bf16.msra.mxu0 %v2336
      %2456 = vmatpush.bf16.msra.mxu0 %v2335
      %2457 = vmatpush.bf16.msra.mxu0 %v2334
      %2458 = vmatpush.bf16.msra.mxu0 %v2333
      %2459 = vmatmul.bf16.gmra.mxu0 %v1783
      %v2460 = vpop.f32.mrf.mxu0
      %v2461 = vpop.f32.mrf.mxu0
      %v2462 = vadd.f32 %v2419, %v2461
      %2463 = vmatmul.bf16.gmra.mxu0 %v1786
      %v2464 = vpop.f32.mrf.mxu0
      %v2465 = vadd.f32 %v2422, %v2464
      %v2466 = vpop.f32.mrf.mxu0
      %v2467 = vadd.f32 %v2424, %v2466
      %2468 = vmatmul.bf16.gmra.mxu0 %v1789
      %v2469 = vpop.f32.mrf.mxu0
      %v2470 = vadd.f32 %v2427, %v2469
      %v2471 = vpop.f32.mrf.mxu0
      %v2472 = vadd.f32 %v2429, %v2471
      %2473 = vmatmul.bf16.gmra.mxu0 %v1792
      %v2474 = vpop.f32.mrf.mxu0
      %v2475 = vadd.f32 %v2432, %v2474
      %v2476 = vpop.f32.mrf.mxu0
      %v2477 = vadd.f32 %v2434, %v2476
      %2478 = vmatmul.bf16.gmra.mxu0 %v1795
      %v2479 = vpop.f32.mrf.mxu0
      %v2480 = vadd.f32 %v2437, %v2479
      %v2481 = vpop.f32.mrf.mxu0
      %v2482 = vadd.f32 %v2439, %v2481
      %2483 = vmatmul.bf16.gmra.mxu0 %v1798
      %v2484 = vpop.f32.mrf.mxu0
      %v2485 = vadd.f32 %v2442, %v2484
      %v2486 = vpop.f32.mrf.mxu0
      %v2487 = vadd.f32 %v2444, %v2486
      %2488 = vmatmul.bf16.gmra.mxu0 %v1801
      %v2489 = vpop.f32.mrf.mxu0
      %v2490 = vadd.f32 %v2447, %v2489
      %v2491 = vpop.f32.mrf.mxu0
      %v2492 = vadd.f32 %v2449, %v2491
      %2493 = vdwg.mxu0
      %v2542 = vunpack.c.l.b16 %v2124
      %v2543 = vunpack.c.l.b16 %v2125
      %v2544 = vunpack.c.l.b16 %v2126
      %v2545 = vunpack.c.l.b16 %v2127
      %v2546 = vunpack.c.l.b16 %v2128
      %v2547 = vunpack.c.l.b16 %v2129
      %v2548 = vunpack.c.l.b16 %v2130
      %v2549 = vunpack.c.l.b16 %v2131
      %v2550 = vunpack.c.l.b16 %v2132
      %v2551 = vunpack.c.l.b16 %v2133
      %v2552 = vunpack.c.l.b16 %v2134
      %v2553 = vunpack.c.l.b16 %v2135
      %v2554 = vunpack.c.l.b16 %v2136
      %v2555 = vunpack.c.l.b16 %v2137
      %v2556 = vunpack.c.l.b16 %v2138
      %v2557 = vunpack.c.l.b16 %v2139
      %v2558 = vunpack.c.l.b16 %v2140
      %v2559 = vunpack.c.l.b16 %v2141
      %v2560 = vunpack.c.l.b16 %v2142
      %v2561 = vunpack.c.l.b16 %v2143
      %v2562 = vunpack.c.l.b16 %v2144
      %v2563 = vunpack.c.l.b16 %v2145
      %v2564 = vunpack.c.l.b16 %v2146
      %v2565 = vunpack.c.l.b16 %v2147
      %v2566 = vunpack.c.l.b16 %v2148
      %v2567 = vunpack.c.l.b16 %v2149
      %v2568 = vunpack.c.l.b16 %v2150
      %v2569 = vunpack.c.l.b16 %v2151
      %v2570 = vunpack.c.l.b16 %v2152
      %v2571 = vunpack.c.l.b16 %v2153
      %v2572 = vunpack.c.l.b16 %v2154
      %v2573 = vunpack.c.l.b16 %v2155
      %v2574 = vunpack.c.l.b16 %v2156
      %v2575 = vunpack.c.l.b16 %v2157
      %v2576 = vunpack.c.l.b16 %v2158
      %v2577 = vunpack.c.l.b16 %v2159
      %v2578 = vunpack.c.l.b16 %v2160
      %v2579 = vunpack.c.l.b16 %v2161
      %v2580 = vunpack.c.l.b16 %v2162
      %v2581 = vunpack.c.l.b16 %v2163
      %v2582 = vunpack.c.l.b16 %v2164
      %v2583 = vunpack.c.l.b16 %v2165
      %v2584 = vunpack.c.l.b16 %v2166
      %v2585 = vunpack.c.l.b16 %v2167
      %v2586 = vunpack.c.l.b16 %v2168
      %v2587 = vunpack.c.l.b16 %v2169
      %v2588 = vunpack.c.l.b16 %v2170
      %v2589 = vunpack.c.l.b16 %v2171
      %v2590 = vpack.c.b16 %v2543, %v2542
      %v2591 = vpack.c.b16 %v2545, %v2544
      %v2592 = vpack.c.b16 %v2547, %v2546
      %v2593 = vpack.c.b16 %v2549, %v2548
      %v2594 = vpack.c.b16 %v2551, %v2550
      %v2595 = vpack.c.b16 %v2553, %v2552
      %v2596 = vpack.c.b16 %v2555, %v2554
      %v2597 = vpack.c.b16 %v2557, %v2556
      %v2598 = vpack.c.b16 %v2559, %v2558
      %v2599 = vpack.c.b16 %v2561, %v2560
      %v2600 = vpack.c.b16 %v2563, %v2562
      %v2601 = vpack.c.b16 %v2565, %v2564
      %v2602 = vpack.c.b16 %v2567, %v2566
      %v2603 = vpack.c.b16 %v2569, %v2568
      %v2604 = vpack.c.b16 %v2571, %v2570
      %v2605 = vpack.c.b16 %v2573, %v2572
      %v2606 = vpack.c.b16 %v2575, %v2574
      %v2607 = vpack.c.b16 %v2577, %v2576
      %v2608 = vpack.c.b16 %v2579, %v2578
      %v2609 = vpack.c.b16 %v2581, %v2580
      %v2610 = vpack.c.b16 %v2583, %v2582
      %v2611 = vpack.c.b16 %v2585, %v2584
      %v2612 = vpack.c.b16 %v2587, %v2586
      %v2613 = vpack.c.b16 %v2589, %v2588
      %2638 = vmatpush.bf16.msra.mxu0 %v2597
      %2639 = vmatpush.bf16.msra.mxu0 %v2596
      %2640 = vmatpush.bf16.msra.mxu0 %v2595
      %2641 = vmatpush.bf16.msra.mxu0 %v2594
      %2642 = vmatpush.bf16.msra.mxu0 %v2593
      %2643 = vmatpush.bf16.msra.mxu0 %v2592
      %2644 = vmatpush.bf16.msra.mxu0 %v2591
      %2645 = vmatpush.bf16.msra.mxu0 %v2590
      %2646 = vmatmul.bf16.gmra.mxu0 %v1781
      %v2647 = vpop.f32.mrf.mxu0
      %v2648 = vadd.f32 0.0, %v2647
      %v2649 = vpop.f32.mrf.mxu0
      %v2650 = vadd.f32 %v2090, %v2649
      %2651 = vmatmul.bf16.gmra.mxu0 %v1784
      %v2652 = vpop.f32.mrf.mxu0
      %v2653 = vadd.f32 %v2092, %v2652
      %v2654 = vpop.f32.mrf.mxu0
      %v2655 = vadd.f32 %v2095, %v2654
      %2656 = vmatmul.bf16.gmra.mxu0 %v1787
      %v2657 = vpop.f32.mrf.mxu0
      %v2658 = vadd.f32 %v2097, %v2657
      %v2659 = vpop.f32.mrf.mxu0
      %v2660 = vadd.f32 %v2100, %v2659
      %2661 = vmatmul.bf16.gmra.mxu0 %v1790
      %v2662 = vpop.f32.mrf.mxu0
      %v2663 = vadd.f32 %v2102, %v2662
      %v2664 = vpop.f32.mrf.mxu0
      %v2665 = vadd.f32 %v2105, %v2664
      %2666 = vmatmul.bf16.gmra.mxu0 %v1793
      %v2667 = vpop.f32.mrf.mxu0
      %v2668 = vadd.f32 %v2107, %v2667
      %v2669 = vpop.f32.mrf.mxu0
      %v2670 = vadd.f32 %v2110, %v2669
      %2671 = vmatmul.bf16.gmra.mxu0 %v1796
      %v2672 = vpop.f32.mrf.mxu0
      %v2673 = vadd.f32 %v2112, %v2672
      %v2674 = vpop.f32.mrf.mxu0
      %v2675 = vadd.f32 %v2115, %v2674
      %2676 = vmatmul.bf16.gmra.mxu0 %v1799
      %v2677 = vpop.f32.mrf.mxu0
      %v2678 = vadd.f32 %v2117, %v2677
      %v2679 = vpop.f32.mrf.mxu0
      %v2680 = vadd.f32 %v2120, %v2679
      %2681 = vdwg.mxu0
      %2682 = vmatpush.bf16.msra.mxu0 %v2605
      %2683 = vmatpush.bf16.msra.mxu0 %v2604
      %2684 = vmatpush.bf16.msra.mxu0 %v2603
      %2685 = vmatpush.bf16.msra.mxu0 %v2602
      %2686 = vmatpush.bf16.msra.mxu0 %v2601
      %2687 = vmatpush.bf16.msra.mxu0 %v2600
      %2688 = vmatpush.bf16.msra.mxu0 %v2599
      %2689 = vmatpush.bf16.msra.mxu0 %v2598
      %2690 = vmatmul.bf16.gmra.mxu0 %v1782
      %v2691 = vpop.f32.mrf.mxu0
      %v2692 = vadd.f32 %v2648, %v2691
      %v2693 = vpop.f32.mrf.mxu0
      %v2694 = vadd.f32 %v2650, %v2693
      %2695 = vmatmul.bf16.gmra.mxu0 %v1785
      %v2696 = vpop.f32.mrf.mxu0
      %v2697 = vadd.f32 %v2653, %v2696
      %v2698 = vpop.f32.mrf.mxu0
      %v2699 = vadd.f32 %v2655, %v2698
      %2700 = vmatmul.bf16.gmra.mxu0 %v1788
      %v2701 = vpop.f32.mrf.mxu0
      %v2702 = vadd.f32 %v2658, %v2701
      %v2703 = vpop.f32.mrf.mxu0
      %v2704 = vadd.f32 %v2660, %v2703
      %2705 = vmatmul.bf16.gmra.mxu0 %v1791
      %v2706 = vpop.f32.mrf.mxu0
      %v2707 = vadd.f32 %v2663, %v2706
      %v2708 = vpop.f32.mrf.mxu0
      %v2709 = vadd.f32 %v2665, %v2708
      %2710 = vmatmul.bf16.gmra.mxu0 %v1794
      %v2711 = vpop.f32.mrf.mxu0
      %v2712 = vadd.f32 %v2668, %v2711
      %v2713 = vpop.f32.mrf.mxu0
      %v2714 = vadd.f32 %v2670, %v2713
      %2715 = vmatmul.bf16.gmra.mxu0 %v1797
      %v2716 = vpop.f32.mrf.mxu0
      %v2717 = vadd.f32 %v2673, %v2716
      %v2718 = vpop.f32.mrf.mxu0
      %v2719 = vadd.f32 %v2675, %v2718
      %2720 = vmatmul.bf16.gmra.mxu0 %v1800
      %v2721 = vpop.f32.mrf.mxu0
      %v2722 = vadd.f32 %v2678, %v2721
      %v2723 = vpop.f32.mrf.mxu0
      %v2724 = vadd.f32 %v2680, %v2723
      %2725 = vdwg.mxu0
      %2726 = vmatpush.bf16.msra.mxu0 %v2613
      %2727 = vmatpush.bf16.msra.mxu0 %v2612
      %2728 = vmatpush.bf16.msra.mxu0 %v2611
      %2729 = vmatpush.bf16.msra.mxu0 %v2610
      %2730 = vmatpush.bf16.msra.mxu0 %v2609
      %2731 = vmatpush.bf16.msra.mxu0 %v2608
      %2732 = vmatpush.bf16.msra.mxu0 %v2607
      %2733 = vmatpush.bf16.msra.mxu0 %v2606
      %2734 = vmatmul.bf16.gmra.mxu0 %v1783
      %v2735 = vpop.f32.mrf.mxu0
      %v2736 = vadd.f32 %v2692, %v2735
      %v2737 = vpop.f32.mrf.mxu0
      %v2738 = vadd.f32 %v2694, %v2737
      %2739 = vmatmul.bf16.gmra.mxu0 %v1786
      %v2740 = vpop.f32.mrf.mxu0
      %v2741 = vadd.f32 %v2697, %v2740
      %v2742 = vpop.f32.mrf.mxu0
      %v2743 = vadd.f32 %v2699, %v2742
      %2744 = vmatmul.bf16.gmra.mxu0 %v1789
      %v2745 = vpop.f32.mrf.mxu0
      %v2746 = vadd.f32 %v2702, %v2745
      %v2747 = vpop.f32.mrf.mxu0
      %v2748 = vadd.f32 %v2704, %v2747
      %2749 = vmatmul.bf16.gmra.mxu0 %v1792
      %v2750 = vpop.f32.mrf.mxu0
      %v2751 = vadd.f32 %v2707, %v2750
      %v2752 = vpop.f32.mrf.mxu0
      %v2753 = vadd.f32 %v2709, %v2752
      %2754 = vmatmul.bf16.gmra.mxu0 %v1795
      %v2755 = vpop.f32.mrf.mxu0
      %v2756 = vadd.f32 %v2712, %v2755
      %v2757 = vpop.f32.mrf.mxu0
      %v2758 = vadd.f32 %v2714, %v2757
      %2759 = vmatmul.bf16.gmra.mxu0 %v1798
      %v2760 = vpop.f32.mrf.mxu0
      %v2761 = vadd.f32 %v2717, %v2760
      %v2762 = vpop.f32.mrf.mxu0
      %v2763 = vadd.f32 %v2719, %v2762
      %2764 = vmatmul.bf16.gmra.mxu0 %v1801
      %v2765 = vpop.f32.mrf.mxu0
      %v2766 = vadd.f32 %v2722, %v2765
      %v2767 = vpop.f32.mrf.mxu0
      %v2768 = vadd.f32 %v2724, %v2767
      %2769 = vdwg.mxu0
      %v2770 = vadd.f32 %v2736, %v2462
      %v2771 = vadd.f32 %v2738, %v2465
      %v2772 = vadd.f32 %v2741, %v2467
      %v2773 = vadd.f32 %v2743, %v2470
      %v2774 = vadd.f32 %v2746, %v2472
      %v2775 = vadd.f32 %v2748, %v2475
      %v2776 = vadd.f32 %v2751, %v2477
      %v2777 = vadd.f32 %v2753, %v2480
      %v2778 = vadd.f32 %v2756, %v2482
      %v2779 = vadd.f32 %v2758, %v2485
      %v2780 = vadd.f32 %v2761, %v2487
      %v2781 = vadd.f32 %v2763, %v2490
      %v2782 = vadd.f32 %v2766, %v2492
      %v2783 = vadd.f32 %v2768, 0.0
      %v2784 = vld [vmem:[%s4] sm:$0x1]
      %v2786 = vperm.slane %v2784, 0
      %v2788 = vadd.f32 %v2770, %v2786
      %v2789 = vadd.f32 %v2771, %v2786
      %v2790 = vadd.f32 %v2772, %v2786
      %v2791 = vadd.f32 %v2773, %v2786
      %v2792 = vadd.f32 %v2774, %v2786
      %v2793 = vadd.f32 %v2775, %v2786
      %v2794 = vadd.f32 %v2776, %v2786
      %v2795 = vadd.f32 %v2777, %v2786
      %v2796 = vadd.f32 %v2778, %v2786
      %v2797 = vadd.f32 %v2779, %v2786
      %v2798 = vadd.f32 %v2780, %v2786
      %v2799 = vadd.f32 %v2781, %v2786
      %v2800 = vadd.f32 %v2782, %v2786
      %v2801 = vadd.f32 %v2783, %v2786
      %v2802 = vmax.f32 %v2788, 0.0
      %v2803 = vmax.f32 %v2789, 0.0
      %v2804 = vmax.f32 %v2790, 0.0
      %v2805 = vmax.f32 %v2791, 0.0
      %v2806 = vmax.f32 %v2792, 0.0
      %v2807 = vmax.f32 %v2793, 0.0
      %v2808 = vmax.f32 %v2794, 0.0
      %v2809 = vmax.f32 %v2795, 0.0
      %v2810 = vmax.f32 %v2796, 0.0
      %v2811 = vmax.f32 %v2797, 0.0
      %v2812 = vmax.f32 %v2798, 0.0
      %v2813 = vmax.f32 %v2799, 0.0
      %v2814 = vmax.f32 %v2800, 0.0
      %v2815 = vmax.f32 %v2801, 0.0
      %v2816 = vsel %vm741, %v2802, 0.0
      %v2817 = vsel %vm742, %v2803, 0.0
      %v2818 = vsel %vm743, %v2804, 0.0
      %v2819 = vsel %vm744, %v2805, 0.0
      %v2820 = vsel %vm745, %v2806, 0.0
      %v2821 = vsel %vm746, %v2807, 0.0
      %v2822 = vsel %vm747, %v2808, 0.0
      %v2823 = vsel %vm748, %v2809, 0.0
      %v2824 = vsel %vm749, %v2810, 0.0
      %v2825 = vsel %vm750, %v2811, 0.0
      %v2826 = vsel %vm751, %v2812, 0.0
      %v2827 = vsel %vm752, %v2813, 0.0
      %v2828 = vsel %vm753, %v2814, 0.0
      %v2829 = vsel %vm754, %v2815, 0.0
      %v2844 = vrot.slane %v2816, 7
      %v2845 = vrot.slane %v2817, 7
      %v2846 = vsel %vm783, %v2844, %v2845
      %v2847 = vrot.slane %v2818, 7
      %v2848 = vsel %vm783, %v2845, %v2847
      %v2849 = vrot.slane %v2819, 7
      %v2850 = vsel %vm783, %v2847, %v2849
      %v2851 = vrot.slane %v2820, 7
      %v2852 = vsel %vm783, %v2849, %v2851
      %v2853 = vrot.slane %v2821, 7
      %v2854 = vsel %vm783, %v2851, %v2853
      %v2855 = vrot.slane %v2822, 7
      %v2856 = vsel %vm783, %v2853, %v2855
      %v2857 = vrot.slane %v2823, 7
      %v2858 = vsel %vm783, %v2855, %v2857
      %v2859 = vrot.slane %v2824, 7
      %v2860 = vsel %vm783, %v2857, %v2859
      %v2861 = vrot.slane %v2825, 7
      %v2862 = vsel %vm783, %v2859, %v2861
      %v2863 = vrot.slane %v2826, 7
      %v2864 = vsel %vm783, %v2861, %v2863
      %v2865 = vrot.slane %v2827, 7
      %v2866 = vsel %vm783, %v2863, %v2865
      %v2867 = vrot.slane %v2828, 7
      %v2868 = vsel %vm783, %v2865, %v2867
      %v2869 = vrot.slane %v2829, 7
      %v2870 = vsel %vm783, %v2867, %v2869
      %v2885 = vsel %vm783, 0.0, %v2844
      %v2886 = vsel %vm840, %v2885, 0.0
      %v2887 = vsel %vm841, %v2846, 0.0
      %v2888 = vsel %vm842, %v2848, 0.0
      %v2889 = vsel %vm843, %v2850, 0.0
      %v2890 = vsel %vm844, %v2852, 0.0
      %v2891 = vsel %vm845, %v2854, 0.0
      %v2892 = vsel %vm846, %v2856, 0.0
      %v2893 = vsel %vm847, %v2858, 0.0
      %v2894 = vsel %vm848, %v2860, 0.0
      %v2895 = vsel %vm849, %v2862, 0.0
      %v2896 = vsel %vm850, %v2864, 0.0
      %v2897 = vsel %vm851, %v2866, 0.0
      %v2898 = vsel %vm852, %v2868, 0.0
      %v2899 = vsel %vm853, %v2870, 0.0
      %v2900 = vrot.slane %v2816, 1
      %v2901 = vrot.slane %v2817, 1
      %v2902 = vsel %vm868, %v2900, %v2901
      %v2903 = vrot.slane %v2818, 1
      %v2904 = vsel %vm868, %v2901, %v2903
      %v2905 = vrot.slane %v2819, 1
      %v2906 = vsel %vm868, %v2903, %v2905
      %v2907 = vrot.slane %v2820, 1
      %v2908 = vsel %vm868, %v2905, %v2907
      %v2909 = vrot.slane %v2821, 1
      %v2910 = vsel %vm868, %v2907, %v2909
      %v2911 = vrot.slane %v2822, 1
      %v2912 = vsel %vm868, %v2909, %v2911
      %v2913 = vrot.slane %v2823, 1
      %v2914 = vsel %vm868, %v2911, %v2913
      %v2915 = vrot.slane %v2824, 1
      %v2916 = vsel %vm868, %v2913, %v2915
      %v2917 = vrot.slane %v2825, 1
      %v2918 = vsel %vm868, %v2915, %v2917
      %v2919 = vrot.slane %v2826, 1
      %v2920 = vsel %vm868, %v2917, %v2919
      %v2921 = vrot.slane %v2827, 1
      %v2922 = vsel %vm868, %v2919, %v2921
      %v2923 = vrot.slane %v2828, 1
      %v2924 = vsel %vm868, %v2921, %v2923
      %v2925 = vrot.slane %v2829, 1
      %v2926 = vsel %vm868, %v2923, %v2925
      %v2941 = vsel %vm868, %v2925, 0.0
      %v2942 = vsel %vm925, %v2902, 0.0
      %v2943 = vsel %vm926, %v2904, 0.0
      %v2944 = vsel %vm927, %v2906, 0.0
      %v2945 = vsel %vm928, %v2908, 0.0
      %v2946 = vsel %vm929, %v2910, 0.0
      %v2947 = vsel %vm930, %v2912, 0.0
      %v2948 = vsel %vm931, %v2914, 0.0
      %v2949 = vsel %vm932, %v2916, 0.0
      %v2950 = vsel %vm933, %v2918, 0.0
      %v2951 = vsel %vm934, %v2920, 0.0
      %v2952 = vsel %vm935, %v2922, 0.0
      %v2953 = vsel %vm936, %v2924, 0.0
      %v2954 = vsel %vm937, %v2926, 0.0
      %v2955 = vsel %vm938, %v2941, 0.0
      %2956 = vrot.lane.b32.xlu0 %v2816, 64
      %v2957 = vpop.permute.xlu0 %2956
      %2958 = vrot.lane.b32.xlu0 %v2817, 64
      %v2959 = vpop.permute.xlu0 %2958
      %2960 = vrot.lane.b32.xlu0 %v2818, 64
      %v2961 = vpop.permute.xlu0 %2960
      %2962 = vrot.lane.b32.xlu0 %v2819, 64
      %v2963 = vpop.permute.xlu0 %2962
      %2964 = vrot.lane.b32.xlu0 %v2820, 64
      %v2965 = vpop.permute.xlu0 %2964
      %2966 = vrot.lane.b32.xlu0 %v2821, 64
      %v2967 = vpop.permute.xlu0 %2966
      %2968 = vrot.lane.b32.xlu0 %v2822, 64
      %v2969 = vpop.permute.xlu0 %2968
      %2970 = vrot.lane.b32.xlu0 %v2823, 64
      %v2971 = vpop.permute.xlu0 %2970
      %2972 = vrot.lane.b32.xlu0 %v2824, 64
      %v2973 = vpop.permute.xlu0 %2972
      %2974 = vrot.lane.b32.xlu0 %v2825, 64
      %v2975 = vpop.permute.xlu0 %2974
      %2976 = vrot.lane.b32.xlu0 %v2826, 64
      %v2977 = vpop.permute.xlu0 %2976
      %2978 = vrot.lane.b32.xlu0 %v2827, 64
      %v2979 = vpop.permute.xlu0 %2978
      %2980 = vrot.lane.b32.xlu0 %v2828, 64
      %v2981 = vpop.permute.xlu0 %2980
      %2982 = vrot.lane.b32.xlu0 %v2829, 64
      %v2983 = vpop.permute.xlu0 %2982
      %v2998 = vsel %vm995, %v2886, %v2957
      %v2999 = vsel %vm995, %v2887, %v2959
      %v3000 = vsel %vm995, %v2888, %v2961
      %v3001 = vsel %vm995, %v2889, %v2963
      %v3002 = vsel %vm995, %v2890, %v2965
      %v3003 = vsel %vm995, %v2891, %v2967
      %v3004 = vsel %vm995, %v2892, %v2969
      %v3005 = vsel %vm995, %v2893, %v2971
      %v3006 = vsel %vm995, %v2894, %v2973
      %v3007 = vsel %vm995, %v2895, %v2975
      %v3008 = vsel %vm995, %v2896, %v2977
      %v3009 = vsel %vm995, %v2897, %v2979
      %v3010 = vsel %vm995, %v2898, %v2981
      %v3011 = vsel %vm995, %v2899, %v2983
      %v3012 = vpack.c.bf16 %v2999, %v2998
      %v3013 = vpack.c.bf16 %v2943, %v2942
      %v3014 = vpack.c.bf16 %v3001, %v3000
      %v3015 = vpack.c.bf16 %v2945, %v2944
      %v3016 = vpack.c.bf16 %v3003, %v3002
      %v3017 = vpack.c.bf16 %v2947, %v2946
      %v3018 = vpack.c.bf16 %v3005, %v3004
      %v3019 = vpack.c.bf16 %v2949, %v2948
      %v3020 = vpack.c.bf16 %v3007, %v3006
      %v3021 = vpack.c.bf16 %v2951, %v2950
      %v3022 = vpack.c.bf16 %v3009, %v3008
      %v3023 = vpack.c.bf16 %v2953, %v2952
      %v3024 = vpack.c.bf16 %v3011, %v3010
      %v3025 = vpack.c.bf16 %v2955, %v2954
      %v3026 = vld [vmem:[%s5] sm:$0xf]
      %v3027 = vld [vmem:[%s5 + $0x4] sm:$0xf]
      %v3028 = vld [vmem:[%s5 + $0x8] sm:$0xf]
      %v3029 = vld [vmem:[%s5 + $0xc] sm:$0xf]
      %v3030 = vld [vmem:[%s5 + $0x10] sm:$0xf]
      %v3031 = vld [vmem:[%s5 + $0x14] sm:$0xf]
      %v3032 = vld [vmem:[%s5 + $0x18] sm:$0xf]
      %v3033 = vld [vmem:[%s5 + $0x1c] sm:$0xf]
      %v3034 = vld [vmem:[%s5 + $0x20] sm:$0xf]
      %v3035 = vld [vmem:[%s5 + $0x24] sm:$0xf]
      %v3036 = vld [vmem:[%s5 + $0x28] sm:$0xf]
      %v3037 = vld [vmem:[%s5 + $0x2c] sm:$0xf]
      %v3038 = vld [vmem:[%s5 + $0x30] sm:$0xf]
      %v3039 = vld [vmem:[%s5 + $0x34] sm:$0xf]
      %v3040 = vld [vmem:[%s5 + $0x38] sm:$0xf]
      %v3041 = vld [vmem:[%s5 + $0x3c] sm:$0xf]
      %v3042 = vld [vmem:[%s5 + $0x40] sm:$0xf]
      %v3043 = vld [vmem:[%s5 + $0x44] sm:$0xf]
      %v3044 = vld [vmem:[%s5 + $0x48] sm:$0xf]
      %v3045 = vld [vmem:[%s5 + $0x4c] sm:$0xf]
      %v3046 = vld [vmem:[%s5 + $0x50] sm:$0xf]
      %v3047 = vld [vmem:[%s5 + $0x54] sm:$0xf]
      %v3048 = vld [vmem:[%s5 + $0x58] sm:$0xf]
      %v3049 = vld [vmem:[%s5 + $0x5c] sm:$0xf]
      %v3074 = vunpack.c.l.b16 %v3026
      %v3075 = vunpack.c.l.b16 %v3027
      %v3076 = vunpack.c.l.b16 %v3028
      %v3077 = vunpack.c.l.b16 %v3029
      %v3078 = vunpack.c.l.b16 %v3030
      %v3079 = vunpack.c.l.b16 %v3031
      %v3080 = vunpack.c.l.b16 %v3032
      %v3081 = vunpack.c.l.b16 %v3033
      %v3082 = vunpack.c.l.b16 %v3034
      %v3083 = vunpack.c.l.b16 %v3035
      %v3084 = vunpack.c.l.b16 %v3036
      %v3085 = vunpack.c.l.b16 %v3037
      %v3086 = vunpack.c.l.b16 %v3038
      %v3087 = vunpack.c.l.b16 %v3039
      %v3088 = vunpack.c.l.b16 %v3040
      %v3089 = vunpack.c.l.b16 %v3041
      %v3090 = vunpack.c.l.b16 %v3042
      %v3091 = vunpack.c.l.b16 %v3043
      %v3092 = vunpack.c.l.b16 %v3044
      %v3093 = vunpack.c.l.b16 %v3045
      %v3094 = vunpack.c.l.b16 %v3046
      %v3095 = vunpack.c.l.b16 %v3047
      %v3096 = vunpack.c.l.b16 %v3048
      %v3097 = vunpack.c.l.b16 %v3049
      %v3098 = vpack.c.b16 %v3075, %v3074
      %v3099 = vpack.c.b16 %v3077, %v3076
      %v3100 = vpack.c.b16 %v3079, %v3078
      %v3101 = vpack.c.b16 %v3081, %v3080
      %v3102 = vpack.c.b16 %v3083, %v3082
      %v3103 = vpack.c.b16 %v3085, %v3084
      %v3104 = vpack.c.b16 %v3087, %v3086
      %v3105 = vpack.c.b16 %v3089, %v3088
      %v3106 = vpack.c.b16 %v3091, %v3090
      %v3107 = vpack.c.b16 %v3093, %v3092
      %v3108 = vpack.c.b16 %v3095, %v3094
      %v3109 = vpack.c.b16 %v3097, %v3096
      %v3123 = vsel %vm995, %v3013, 0
      %v3126 = vsel %vm995, %v3015, 0
      %v3129 = vsel %vm995, %v3017, 0
      %v3132 = vsel %vm995, %v3019, 0
      %v3135 = vsel %vm995, %v3021, 0
      %v3138 = vsel %vm995, %v3023, 0
      %v3141 = vsel %vm995, %v3025, 0
      %3143 = vmatpush.bf16.msra.mxu0 %v3105
      %3144 = vmatpush.bf16.msra.mxu0 %v3104
      %3145 = vmatpush.bf16.msra.mxu0 %v3103
      %3146 = vmatpush.bf16.msra.mxu0 %v3102
      %3147 = vmatpush.bf16.msra.mxu0 %v3101
      %3148 = vmatpush.bf16.msra.mxu0 %v3100
      %3149 = vmatpush.bf16.msra.mxu0 %v3099
      %3150 = vmatpush.bf16.msra.mxu0 %v3098
      %3151 = vmatmul.bf16.gmra.mxu0 %v3012
      %v3152 = vpop.f32.mrf.mxu0
      %v3153 = vadd.f32 0.0, %v3152
      %v3154 = vpop.f32.mrf.mxu0
      %v3155 = vadd.f32 0.0, %v3154
      %3156 = vmatmul.bf16.gmra.mxu0 %v3014
      %v3157 = vpop.f32.mrf.mxu0
      %v3158 = vadd.f32 0.0, %v3157
      %v3159 = vpop.f32.mrf.mxu0
      %v3160 = vadd.f32 0.0, %v3159
      %3161 = vmatmul.bf16.gmra.mxu0 %v3016
      %v3162 = vpop.f32.mrf.mxu0
      %v3163 = vadd.f32 0.0, %v3162
      %v3164 = vpop.f32.mrf.mxu0
      %v3165 = vadd.f32 0.0, %v3164
      %3166 = vmatmul.bf16.gmra.mxu0 %v3018
      %v3167 = vpop.f32.mrf.mxu0
      %v3168 = vadd.f32 0.0, %v3167
      %v3169 = vpop.f32.mrf.mxu0
      %v3170 = vadd.f32 0.0, %v3169
      %3171 = vmatmul.bf16.gmra.mxu0 %v3020
      %v3172 = vpop.f32.mrf.mxu0
      %v3173 = vadd.f32 0.0, %v3172
      %v3174 = vpop.f32.mrf.mxu0
      %v3175 = vadd.f32 0.0, %v3174
      %3176 = vmatmul.bf16.gmra.mxu0 %v3022
      %v3177 = vpop.f32.mrf.mxu0
      %v3178 = vadd.f32 0.0, %v3177
      %v3179 = vpop.f32.mrf.mxu0
      %v3180 = vadd.f32 0.0, %v3179
      %3181 = vmatmul.bf16.gmra.mxu0 %v3024
      %v3182 = vpop.f32.mrf.mxu0
      %v3183 = vadd.f32 0.0, %v3182
      %v3184 = vpop.f32.mrf.mxu0
      %3185 = vdwg.mxu0
      %3186 = vmatpush.bf16.msra.mxu0 0
      %3187 = vmatpush.bf16.msra.mxu0 0
      %3188 = vmatpush.bf16.msra.mxu0 0
      %3189 = vmatpush.bf16.msra.mxu0 0
      %3190 = vmatpush.bf16.msra.mxu0 %v3109
      %3191 = vmatpush.bf16.msra.mxu0 %v3108
      %3192 = vmatpush.bf16.msra.mxu0 %v3107
      %3193 = vmatpush.bf16.msra.mxu0 %v3106
      %3194 = vmatmul.bf16.gmra.mxu0 %v3123
      %v3195 = vpop.f32.mrf.mxu0
      %v3196 = vadd.f32 %v3153, %v3195
      %v3197 = vpop.f32.mrf.mxu0
      %v3198 = vadd.f32 %v3155, %v3197
      %3199 = vmatmul.bf16.gmra.mxu0 %v3126
      %v3200 = vpop.f32.mrf.mxu0
      %v3201 = vadd.f32 %v3158, %v3200
      %v3202 = vpop.f32.mrf.mxu0
      %v3203 = vadd.f32 %v3160, %v3202
      %3204 = vmatmul.bf16.gmra.mxu0 %v3129
      %v3205 = vpop.f32.mrf.mxu0
      %v3206 = vadd.f32 %v3163, %v3205
      %v3207 = vpop.f32.mrf.mxu0
      %v3208 = vadd.f32 %v3165, %v3207
      %3209 = vmatmul.bf16.gmra.mxu0 %v3132
      %v3210 = vpop.f32.mrf.mxu0
      %v3211 = vadd.f32 %v3168, %v3210
      %v3212 = vpop.f32.mrf.mxu0
      %v3213 = vadd.f32 %v3170, %v3212
      %3214 = vmatmul.bf16.gmra.mxu0 %v3135
      %v3215 = vpop.f32.mrf.mxu0
      %v3216 = vadd.f32 %v3173, %v3215
      %v3217 = vpop.f32.mrf.mxu0
      %v3218 = vadd.f32 %v3175, %v3217
      %3219 = vmatmul.bf16.gmra.mxu0 %v3138
      %v3220 = vpop.f32.mrf.mxu0
      %v3221 = vadd.f32 %v3178, %v3220
      %v3222 = vpop.f32.mrf.mxu0
      %v3223 = vadd.f32 %v3180, %v3222
      %3224 = vmatmul.bf16.gmra.mxu0 %v3141
      %v3225 = vpop.f32.mrf.mxu0
      %v3226 = vadd.f32 %v3183, %v3225
      %v3227 = vpop.f32.mrf.mxu0
      %3228 = vdwg.mxu0
      %s3229 = scalar_lea.vmem %s5, 96
      %v3230 = vld [vmem:[%s3229] sm:$0xf]
      %v3231 = vld [vmem:[%s3229 + $0x4] sm:$0xf]
      %v3232 = vld [vmem:[%s3229 + $0x8] sm:$0xf]
      %v3233 = vld [vmem:[%s3229 + $0xc] sm:$0xf]
      %v3234 = vld [vmem:[%s3229 + $0x10] sm:$0xf]
      %v3235 = vld [vmem:[%s3229 + $0x14] sm:$0xf]
      %v3236 = vld [vmem:[%s3229 + $0x18] sm:$0xf]
      %v3237 = vld [vmem:[%s3229 + $0x1c] sm:$0xf]
      %v3238 = vld [vmem:[%s3229 + $0x20] sm:$0xf]
      %v3239 = vld [vmem:[%s3229 + $0x24] sm:$0xf]
      %v3240 = vld [vmem:[%s3229 + $0x28] sm:$0xf]
      %v3241 = vld [vmem:[%s3229 + $0x2c] sm:$0xf]
      %v3242 = vld [vmem:[%s3229 + $0x30] sm:$0xf]
      %v3243 = vld [vmem:[%s3229 + $0x34] sm:$0xf]
      %v3244 = vld [vmem:[%s3229 + $0x38] sm:$0xf]
      %v3245 = vld [vmem:[%s3229 + $0x3c] sm:$0xf]
      %v3246 = vld [vmem:[%s3229 + $0x40] sm:$0xf]
      %v3247 = vld [vmem:[%s3229 + $0x44] sm:$0xf]
      %v3248 = vld [vmem:[%s3229 + $0x48] sm:$0xf]
      %v3249 = vld [vmem:[%s3229 + $0x4c] sm:$0xf]
      %v3250 = vld [vmem:[%s3229 + $0x50] sm:$0xf]
      %v3251 = vld [vmem:[%s3229 + $0x54] sm:$0xf]
      %v3252 = vld [vmem:[%s3229 + $0x58] sm:$0xf]
      %v3253 = vld [vmem:[%s3229 + $0x5c] sm:$0xf]
      %s3254 = scalar_lea.vmem %s5, 192
      %v3255 = vld [vmem:[%s3254] sm:$0xf]
      %v3256 = vld [vmem:[%s3254 + $0x4] sm:$0xf]
      %v3257 = vld [vmem:[%s3254 + $0x8] sm:$0xf]
      %v3258 = vld [vmem:[%s3254 + $0xc] sm:$0xf]
      %v3259 = vld [vmem:[%s3254 + $0x10] sm:$0xf]
      %v3260 = vld [vmem:[%s3254 + $0x14] sm:$0xf]
      %v3261 = vld [vmem:[%s3254 + $0x18] sm:$0xf]
      %v3262 = vld [vmem:[%s3254 + $0x1c] sm:$0xf]
      %v3263 = vld [vmem:[%s3254 + $0x20] sm:$0xf]
      %v3264 = vld [vmem:[%s3254 + $0x24] sm:$0xf]
      %v3265 = vld [vmem:[%s3254 + $0x28] sm:$0xf]
      %v3266 = vld [vmem:[%s3254 + $0x2c] sm:$0xf]
      %v3267 = vld [vmem:[%s3254 + $0x30] sm:$0xf]
      %v3268 = vld [vmem:[%s3254 + $0x34] sm:$0xf]
      %v3269 = vld [vmem:[%s3254 + $0x38] sm:$0xf]
      %v3270 = vld [vmem:[%s3254 + $0x3c] sm:$0xf]
      %v3271 = vld [vmem:[%s3254 + $0x40] sm:$0xf]
      %v3272 = vld [vmem:[%s3254 + $0x44] sm:$0xf]
      %v3273 = vld [vmem:[%s3254 + $0x48] sm:$0xf]
      %v3274 = vld [vmem:[%s3254 + $0x4c] sm:$0xf]
      %v3275 = vld [vmem:[%s3254 + $0x50] sm:$0xf]
      %v3276 = vld [vmem:[%s3254 + $0x54] sm:$0xf]
      %v3277 = vld [vmem:[%s3254 + $0x58] sm:$0xf]
      %v3278 = vld [vmem:[%s3254 + $0x5c] sm:$0xf]
      %v3303 = vunpack.c.l.b16 %v3255
      %v3304 = vunpack.c.l.b16 %v3256
      %v3305 = vunpack.c.l.b16 %v3257
      %v3306 = vunpack.c.l.b16 %v3258
      %v3307 = vunpack.c.l.b16 %v3259
      %v3308 = vunpack.c.l.b16 %v3260
      %v3309 = vunpack.c.l.b16 %v3261
      %v3310 = vunpack.c.l.b16 %v3262
      %v3311 = vunpack.c.l.b16 %v3263
      %v3312 = vunpack.c.l.b16 %v3264
      %v3313 = vunpack.c.l.b16 %v3265
      %v3314 = vunpack.c.l.b16 %v3266
      %v3315 = vunpack.c.l.b16 %v3267
      %v3316 = vunpack.c.l.b16 %v3268
      %v3317 = vunpack.c.l.b16 %v3269
      %v3318 = vunpack.c.l.b16 %v3270
      %v3319 = vunpack.c.l.b16 %v3271
      %v3320 = vunpack.c.l.b16 %v3272
      %v3321 = vunpack.c.l.b16 %v3273
      %v3322 = vunpack.c.l.b16 %v3274
      %v3323 = vunpack.c.l.b16 %v3275
      %v3324 = vunpack.c.l.b16 %v3276
      %v3325 = vunpack.c.l.b16 %v3277
      %v3326 = vunpack.c.l.b16 %v3278
      %v3327 = vpack.c.b16 %v3304, %v3303
      %v3328 = vpack.c.b16 %v3306, %v3305
      %v3329 = vpack.c.b16 %v3308, %v3307
      %v3330 = vpack.c.b16 %v3310, %v3309
      %v3331 = vpack.c.b16 %v3312, %v3311
      %v3332 = vpack.c.b16 %v3314, %v3313
      %v3333 = vpack.c.b16 %v3316, %v3315
      %v3334 = vpack.c.b16 %v3318, %v3317
      %v3335 = vpack.c.b16 %v3320, %v3319
      %v3336 = vpack.c.b16 %v3322, %v3321
      %v3337 = vpack.c.b16 %v3324, %v3323
      %v3338 = vpack.c.b16 %v3326, %v3325
      %3351 = vmatpush.bf16.msra.mxu0 %v3334
      %3352 = vmatpush.bf16.msra.mxu0 %v3333
      %3353 = vmatpush.bf16.msra.mxu0 %v3332
      %3354 = vmatpush.bf16.msra.mxu0 %v3331
      %3355 = vmatpush.bf16.msra.mxu0 %v3330
      %3356 = vmatpush.bf16.msra.mxu0 %v3329
      %3357 = vmatpush.bf16.msra.mxu0 %v3328
      %3358 = vmatpush.bf16.msra.mxu0 %v3327
      %3359 = vmatmul.bf16.gmra.mxu0 %v3012
      %v3360 = vpop.f32.mrf.mxu0
      %v3361 = vpop.f32.mrf.mxu0
      %v3362 = vadd.f32 0.0, %v3361
      %3363 = vmatmul.bf16.gmra.mxu0 %v3014
      %v3364 = vpop.f32.mrf.mxu0
      %v3365 = vadd.f32 0.0, %v3364
      %v3366 = vpop.f32.mrf.mxu0
      %v3367 = vadd.f32 0.0, %v3366
      %3368 = vmatmul.bf16.gmra.mxu0 %v3016
      %v3369 = vpop.f32.mrf.mxu0
      %v3370 = vadd.f32 0.0, %v3369
      %v3371 = vpop.f32.mrf.mxu0
      %v3372 = vadd.f32 0.0, %v3371
      %3373 = vmatmul.bf16.gmra.mxu0 %v3018
      %v3374 = vpop.f32.mrf.mxu0
      %v3375 = vadd.f32 0.0, %v3374
      %v3376 = vpop.f32.mrf.mxu0
      %v3377 = vadd.f32 0.0, %v3376
      %3378 = vmatmul.bf16.gmra.mxu0 %v3020
      %v3379 = vpop.f32.mrf.mxu0
      %v3380 = vadd.f32 0.0, %v3379
      %v3381 = vpop.f32.mrf.mxu0
      %v3382 = vadd.f32 0.0, %v3381
      %3383 = vmatmul.bf16.gmra.mxu0 %v3022
      %v3384 = vpop.f32.mrf.mxu0
      %v3385 = vadd.f32 0.0, %v3384
      %v3386 = vpop.f32.mrf.mxu0
      %v3387 = vadd.f32 0.0, %v3386
      %3388 = vmatmul.bf16.gmra.mxu0 %v3024
      %v3389 = vpop.f32.mrf.mxu0
      %v3390 = vadd.f32 0.0, %v3389
      %v3391 = vpop.f32.mrf.mxu0
      %v3392 = vadd.f32 0.0, %v3391
      %3393 = vdwg.mxu0
      %3394 = vmatpush.bf16.msra.mxu0 0
      %3395 = vmatpush.bf16.msra.mxu0 0
      %3396 = vmatpush.bf16.msra.mxu0 0
      %3397 = vmatpush.bf16.msra.mxu0 0
      %3398 = vmatpush.bf16.msra.mxu0 %v3338
      %3399 = vmatpush.bf16.msra.mxu0 %v3337
      %3400 = vmatpush.bf16.msra.mxu0 %v3336
      %3401 = vmatpush.bf16.msra.mxu0 %v3335
      %3402 = vmatmul.bf16.gmra.mxu0 %v3123
      %v3403 = vpop.f32.mrf.mxu0
      %v3404 = vpop.f32.mrf.mxu0
      %v3405 = vadd.f32 %v3362, %v3404
      %3406 = vmatmul.bf16.gmra.mxu0 %v3126
      %v3407 = vpop.f32.mrf.mxu0
      %v3408 = vadd.f32 %v3365, %v3407
      %v3409 = vpop.f32.mrf.mxu0
      %v3410 = vadd.f32 %v3367, %v3409
      %3411 = vmatmul.bf16.gmra.mxu0 %v3129
      %v3412 = vpop.f32.mrf.mxu0
      %v3413 = vadd.f32 %v3370, %v3412
      %v3414 = vpop.f32.mrf.mxu0
      %v3415 = vadd.f32 %v3372, %v3414
      %3416 = vmatmul.bf16.gmra.mxu0 %v3132
      %v3417 = vpop.f32.mrf.mxu0
      %v3418 = vadd.f32 %v3375, %v3417
      %v3419 = vpop.f32.mrf.mxu0
      %v3420 = vadd.f32 %v3377, %v3419
      %3421 = vmatmul.bf16.gmra.mxu0 %v3135
      %v3422 = vpop.f32.mrf.mxu0
      %v3423 = vadd.f32 %v3380, %v3422
      %v3424 = vpop.f32.mrf.mxu0
      %v3425 = vadd.f32 %v3382, %v3424
      %3426 = vmatmul.bf16.gmra.mxu0 %v3138
      %v3427 = vpop.f32.mrf.mxu0
      %v3428 = vadd.f32 %v3385, %v3427
      %v3429 = vpop.f32.mrf.mxu0
      %v3430 = vadd.f32 %v3387, %v3429
      %3431 = vmatmul.bf16.gmra.mxu0 %v3141
      %v3432 = vpop.f32.mrf.mxu0
      %v3433 = vadd.f32 %v3390, %v3432
      %v3434 = vpop.f32.mrf.mxu0
      %v3435 = vadd.f32 %v3392, %v3434
      %3436 = vdwg.mxu0
      %v3461 = vunpack.c.l.b16 %v3230
      %v3462 = vunpack.c.l.b16 %v3231
      %v3463 = vunpack.c.l.b16 %v3232
      %v3464 = vunpack.c.l.b16 %v3233
      %v3465 = vunpack.c.l.b16 %v3234
      %v3466 = vunpack.c.l.b16 %v3235
      %v3467 = vunpack.c.l.b16 %v3236
      %v3468 = vunpack.c.l.b16 %v3237
      %v3469 = vunpack.c.l.b16 %v3238
      %v3470 = vunpack.c.l.b16 %v3239
      %v3471 = vunpack.c.l.b16 %v3240
      %v3472 = vunpack.c.l.b16 %v3241
      %v3473 = vunpack.c.l.b16 %v3242
      %v3474 = vunpack.c.l.b16 %v3243
      %v3475 = vunpack.c.l.b16 %v3244
      %v3476 = vunpack.c.l.b16 %v3245
      %v3477 = vunpack.c.l.b16 %v3246
      %v3478 = vunpack.c.l.b16 %v3247
      %v3479 = vunpack.c.l.b16 %v3248
      %v3480 = vunpack.c.l.b16 %v3249
      %v3481 = vunpack.c.l.b16 %v3250
      %v3482 = vunpack.c.l.b16 %v3251
      %v3483 = vunpack.c.l.b16 %v3252
      %v3484 = vunpack.c.l.b16 %v3253
      %v3485 = vpack.c.b16 %v3462, %v3461
      %v3486 = vpack.c.b16 %v3464, %v3463
      %v3487 = vpack.c.b16 %v3466, %v3465
      %v3488 = vpack.c.b16 %v3468, %v3467
      %v3489 = vpack.c.b16 %v3470, %v3469
      %v3490 = vpack.c.b16 %v3472, %v3471
      %v3491 = vpack.c.b16 %v3474, %v3473
      %v3492 = vpack.c.b16 %v3476, %v3475
      %v3493 = vpack.c.b16 %v3478, %v3477
      %v3494 = vpack.c.b16 %v3480, %v3479
      %v3495 = vpack.c.b16 %v3482, %v3481
      %v3496 = vpack.c.b16 %v3484, %v3483
      %3509 = vmatpush.bf16.msra.mxu0 %v3492
      %3510 = vmatpush.bf16.msra.mxu0 %v3491
      %3511 = vmatpush.bf16.msra.mxu0 %v3490
      %3512 = vmatpush.bf16.msra.mxu0 %v3489
      %3513 = vmatpush.bf16.msra.mxu0 %v3488
      %3514 = vmatpush.bf16.msra.mxu0 %v3487
      %3515 = vmatpush.bf16.msra.mxu0 %v3486
      %3516 = vmatpush.bf16.msra.mxu0 %v3485
      %3517 = vmatmul.bf16.gmra.mxu0 %v3012
      %v3518 = vpop.f32.mrf.mxu0
      %v3519 = vadd.f32 0.0, %v3518
      %v3520 = vpop.f32.mrf.mxu0
      %v3521 = vadd.f32 %v3196, %v3520
      %3522 = vmatmul.bf16.gmra.mxu0 %v3014
      %v3523 = vpop.f32.mrf.mxu0
      %v3524 = vadd.f32 %v3198, %v3523
      %v3525 = vpop.f32.mrf.mxu0
      %v3526 = vadd.f32 %v3201, %v3525
      %3527 = vmatmul.bf16.gmra.mxu0 %v3016
      %v3528 = vpop.f32.mrf.mxu0
      %v3529 = vadd.f32 %v3203, %v3528
      %v3530 = vpop.f32.mrf.mxu0
      %v3531 = vadd.f32 %v3206, %v3530
      %3532 = vmatmul.bf16.gmra.mxu0 %v3018
      %v3533 = vpop.f32.mrf.mxu0
      %v3534 = vadd.f32 %v3208, %v3533
      %v3535 = vpop.f32.mrf.mxu0
      %v3536 = vadd.f32 %v3211, %v3535
      %3537 = vmatmul.bf16.gmra.mxu0 %v3020
      %v3538 = vpop.f32.mrf.mxu0
      %v3539 = vadd.f32 %v3213, %v3538
      %v3540 = vpop.f32.mrf.mxu0
      %v3541 = vadd.f32 %v3216, %v3540
      %3542 = vmatmul.bf16.gmra.mxu0 %v3022
      %v3543 = vpop.f32.mrf.mxu0
      %v3544 = vadd.f32 %v3218, %v3543
      %v3545 = vpop.f32.mrf.mxu0
      %v3546 = vadd.f32 %v3221, %v3545
      %3547 = vmatmul.bf16.gmra.mxu0 %v3024
      %v3548 = vpop.f32.mrf.mxu0
      %v3549 = vadd.f32 %v3223, %v3548
      %v3550 = vpop.f32.mrf.mxu0
      %v3551 = vadd.f32 %v3226, %v3550
      %3552 = vdwg.mxu0
      %3553 = vmatpush.bf16.msra.mxu0 0
      %3554 = vmatpush.bf16.msra.mxu0 0
      %3555 = vmatpush.bf16.msra.mxu0 0
      %3556 = vmatpush.bf16.msra.mxu0 0
      %3557 = vmatpush.bf16.msra.mxu0 %v3496
      %3558 = vmatpush.bf16.msra.mxu0 %v3495
      %3559 = vmatpush.bf16.msra.mxu0 %v3494
      %3560 = vmatpush.bf16.msra.mxu0 %v3493
      %3561 = vmatmul.bf16.gmra.mxu0 %v3123
      %v3562 = vpop.f32.mrf.mxu0
      %v3563 = vadd.f32 %v3519, %v3562
      %v3564 = vpop.f32.mrf.mxu0
      %v3565 = vadd.f32 %v3521, %v3564
      %3566 = vmatmul.bf16.gmra.mxu0 %v3126
      %v3567 = vpop.f32.mrf.mxu0
      %v3568 = vadd.f32 %v3524, %v3567
      %v3569 = vpop.f32.mrf.mxu0
      %v3570 = vadd.f32 %v3526, %v3569
      %3571 = vmatmul.bf16.gmra.mxu0 %v3129
      %v3572 = vpop.f32.mrf.mxu0
      %v3573 = vadd.f32 %v3529, %v3572
      %v3574 = vpop.f32.mrf.mxu0
      %v3575 = vadd.f32 %v3531, %v3574
      %3576 = vmatmul.bf16.gmra.mxu0 %v3132
      %v3577 = vpop.f32.mrf.mxu0
      %v3578 = vadd.f32 %v3534, %v3577
      %v3579 = vpop.f32.mrf.mxu0
      %v3580 = vadd.f32 %v3536, %v3579
      %3581 = vmatmul.bf16.gmra.mxu0 %v3135
      %v3582 = vpop.f32.mrf.mxu0
      %v3583 = vadd.f32 %v3539, %v3582
      %v3584 = vpop.f32.mrf.mxu0
      %v3585 = vadd.f32 %v3541, %v3584
      %3586 = vmatmul.bf16.gmra.mxu0 %v3138
      %v3587 = vpop.f32.mrf.mxu0
      %v3588 = vadd.f32 %v3544, %v3587
      %v3589 = vpop.f32.mrf.mxu0
      %v3590 = vadd.f32 %v3546, %v3589
      %3591 = vmatmul.bf16.gmra.mxu0 %v3141
      %v3592 = vpop.f32.mrf.mxu0
      %v3593 = vadd.f32 %v3549, %v3592
      %v3594 = vpop.f32.mrf.mxu0
      %v3595 = vadd.f32 %v3551, %v3594
      %3596 = vdwg.mxu0
      %v3597 = vadd.f32 %v3563, %v3405
      %v3598 = vadd.f32 %v3565, %v3408
      %v3599 = vadd.f32 %v3568, %v3410
      %v3600 = vadd.f32 %v3570, %v3413
      %v3601 = vadd.f32 %v3573, %v3415
      %v3602 = vadd.f32 %v3575, %v3418
      %v3603 = vadd.f32 %v3578, %v3420
      %v3604 = vadd.f32 %v3580, %v3423
      %v3605 = vadd.f32 %v3583, %v3425
      %v3606 = vadd.f32 %v3585, %v3428
      %v3607 = vadd.f32 %v3588, %v3430
      %v3608 = vadd.f32 %v3590, %v3433
      %v3609 = vadd.f32 %v3593, %v3435
      %v3610 = vadd.f32 %v3595, 0.0
      %v3611 = vld [vmem:[%s6] sm:$0x1]
      %v3613 = vperm.slane %v3611, 0
      %v3615 = vadd.f32 %v3597, %v3613
      %v3616 = vadd.f32 %v3598, %v3613
      %v3617 = vadd.f32 %v3599, %v3613
      %v3618 = vadd.f32 %v3600, %v3613
      %v3619 = vadd.f32 %v3601, %v3613
      %v3620 = vadd.f32 %v3602, %v3613
      %v3621 = vadd.f32 %v3603, %v3613
      %v3622 = vadd.f32 %v3604, %v3613
      %v3623 = vadd.f32 %v3605, %v3613
      %v3624 = vadd.f32 %v3606, %v3613
      %v3625 = vadd.f32 %v3607, %v3613
      %v3626 = vadd.f32 %v3608, %v3613
      %v3627 = vadd.f32 %v3609, %v3613
      %v3628 = vadd.f32 %v3610, %v3613
      %v3629 = vmax.f32 %v3615, 0.0
      %v3630 = vmax.f32 %v3616, 0.0
      %v3631 = vmax.f32 %v3617, 0.0
      %v3632 = vmax.f32 %v3618, 0.0
      %v3633 = vmax.f32 %v3619, 0.0
      %v3634 = vmax.f32 %v3620, 0.0
      %v3635 = vmax.f32 %v3621, 0.0
      %v3636 = vmax.f32 %v3622, 0.0
      %v3637 = vmax.f32 %v3623, 0.0
      %v3638 = vmax.f32 %v3624, 0.0
      %v3639 = vmax.f32 %v3625, 0.0
      %v3640 = vmax.f32 %v3626, 0.0
      %v3641 = vmax.f32 %v3627, 0.0
      %v3642 = vmax.f32 %v3628, 0.0
      %v3643 = vsel %vm741, %v3629, 0.0
      %v3644 = vsel %vm742, %v3630, 0.0
      %v3645 = vsel %vm743, %v3631, 0.0
      %v3646 = vsel %vm744, %v3632, 0.0
      %v3647 = vsel %vm745, %v3633, 0.0
      %v3648 = vsel %vm746, %v3634, 0.0
      %v3649 = vsel %vm747, %v3635, 0.0
      %v3650 = vsel %vm748, %v3636, 0.0
      %v3651 = vsel %vm749, %v3637, 0.0
      %v3652 = vsel %vm750, %v3638, 0.0
      %v3653 = vsel %vm751, %v3639, 0.0
      %v3654 = vsel %vm752, %v3640, 0.0
      %v3655 = vsel %vm753, %v3641, 0.0
      %v3656 = vsel %vm754, %v3642, 0.0
      %v3657 = vld [vmem:[%s7] sm:$0x1]
      %v3659 = vperm.slane %v3657, 0
      %v3661 = vmul.f32 %v3643, %v3659
      %v3662 = vmul.f32 %v3644, %v3659
      %v3663 = vmul.f32 %v3645, %v3659
      %v3664 = vmul.f32 %v3646, %v3659
      %v3665 = vmul.f32 %v3647, %v3659
      %v3666 = vmul.f32 %v3648, %v3659
      %v3667 = vmul.f32 %v3649, %v3659
      %v3668 = vmul.f32 %v3650, %v3659
      %v3669 = vmul.f32 %v3651, %v3659
      %v3670 = vmul.f32 %v3652, %v3659
      %v3671 = vmul.f32 %v3653, %v3659
      %v3672 = vmul.f32 %v3654, %v3659
      %v3673 = vmul.f32 %v3655, %v3659
      %v3674 = vmul.f32 %v3656, %v3659
      %vm3675 = vcmask 130048
      %v3676 = vsel %vm3675, %v3661, 0.0
      %3677 = vadd.xlane.f32.xlu0 %v3676
      %v3678 = vpop.xlane.xlu0 %3677
      %v3679 = vsel %vm3675, %v3662, 0.0
      %3680 = vadd.xlane.f32.xlu0 %v3679
      %v3681 = vpop.xlane.xlu0 %3680
      %v3682 = vsel %vm3675, %v3663, 0.0
      %3683 = vadd.xlane.f32.xlu0 %v3682
      %v3684 = vpop.xlane.xlu0 %3683
      %v3685 = vsel %vm3675, %v3664, 0.0
      %3686 = vadd.xlane.f32.xlu0 %v3685
      %v3687 = vpop.xlane.xlu0 %3686
      %v3688 = vsel %vm3675, %v3665, 0.0
      %3689 = vadd.xlane.f32.xlu0 %v3688
      %v3690 = vpop.xlane.xlu0 %3689
      %v3691 = vsel %vm3675, %v3666, 0.0
      %3692 = vadd.xlane.f32.xlu0 %v3691
      %v3693 = vpop.xlane.xlu0 %3692
      %v3694 = vsel %vm3675, %v3667, 0.0
      %3695 = vadd.xlane.f32.xlu0 %v3694
      %v3696 = vpop.xlane.xlu0 %3695
      %v3697 = vsel %vm3675, %v3668, 0.0
      %3698 = vadd.xlane.f32.xlu0 %v3697
      %v3699 = vpop.xlane.xlu0 %3698
      %v3700 = vsel %vm3675, %v3669, 0.0
      %3701 = vadd.xlane.f32.xlu0 %v3700
      %v3702 = vpop.xlane.xlu0 %3701
      %v3703 = vsel %vm3675, %v3670, 0.0
      %3704 = vadd.xlane.f32.xlu0 %v3703
      %v3705 = vpop.xlane.xlu0 %3704
      %v3706 = vsel %vm3675, %v3671, 0.0
      %3707 = vadd.xlane.f32.xlu0 %v3706
      %v3708 = vpop.xlane.xlu0 %3707
      %v3709 = vsel %vm3675, %v3672, 0.0
      %3710 = vadd.xlane.f32.xlu0 %v3709
      %v3711 = vpop.xlane.xlu0 %3710
      %v3712 = vsel %vm3675, %v3673, 0.0
      %3713 = vadd.xlane.f32.xlu0 %v3712
      %v3714 = vpop.xlane.xlu0 %3713
      %v3715 = vsel %vm3675, %v3674, 0.0
      %3716 = vadd.xlane.f32.xlu0 %v3715
      %v3717 = vpop.xlane.xlu0 %3716
      %v3718 = vld [vmem:[#allocation2] sm:$0x1]
      %v3720 = vperm.slane %v3718, 0
      %3721 = vset.pattern.permute.xlu0 0
      %3722 = vperm.xlu0 %3721, %v3720
      %v3723 = vpop.permute.xlu0 %3722
      %v3725 = vadd.f32 %v3678, %v3723
      %v3726 = vadd.f32 %v3681, %v3723
      %v3727 = vadd.f32 %v3684, %v3723
      %v3728 = vadd.f32 %v3687, %v3723
      %v3729 = vadd.f32 %v3690, %v3723
      %v3730 = vadd.f32 %v3693, %v3723
      %v3731 = vadd.f32 %v3696, %v3723
      %v3732 = vadd.f32 %v3699, %v3723
      %v3733 = vadd.f32 %v3702, %v3723
      %v3734 = vadd.f32 %v3705, %v3723
      %v3735 = vadd.f32 %v3708, %v3723
      %v3736 = vadd.f32 %v3711, %v3723
      %v3737 = vadd.f32 %v3714, %v3723
      %v3738 = vadd.f32 %v3717, %v3723
      %v3739 = vmax.f32 %v3725, 0.0
      %v3740 = vmax.f32 %v3726, 0.0
      %v3741 = vmax.f32 %v3727, 0.0
      %v3742 = vmax.f32 %v3728, 0.0
      %v3743 = vmax.f32 %v3729, 0.0
      %v3744 = vmax.f32 %v3730, 0.0
      %v3745 = vmax.f32 %v3731, 0.0
      %v3746 = vmax.f32 %v3732, 0.0
      %v3747 = vmax.f32 %v3733, 0.0
      %v3748 = vmax.f32 %v3734, 0.0
      %v3749 = vmax.f32 %v3735, 0.0
      %v3750 = vmax.f32 %v3736, 0.0
      %v3751 = vmax.f32 %v3737, 0.0
      %v3752 = vmax.f32 %v3738, 0.0
      %vm3753 = vcmp.ge.s32.totalorder %v664, %v590
      %v3754 = vsel %vm3753, 1, 0
      %vm3755 = vcmp.eq.s32.totalorder %v3754, 1
      %v3770 = vperm.slane %v3739, %v664
      %v3771 = vperm.slane %v3740, %v664
      %v3772 = vperm.slane %v3741, %v664
      %v3773 = vperm.slane %v3742, %v664
      %v3774 = vperm.slane %v3743, %v664
      %v3775 = vperm.slane %v3744, %v664
      %v3776 = vperm.slane %v3745, %v664
      %v3777 = vperm.slane %v3746, %v664
      %v3778 = vperm.slane %v3747, %v664
      %v3779 = vperm.slane %v3748, %v664
      %v3780 = vperm.slane %v3749, %v664
      %v3781 = vperm.slane %v3750, %v664
      %v3782 = vperm.slane %v3751, %v664
      %v3783 = vperm.slane %v3752, %v664
      %vm3784 = vcmask 1041409
      %v3785 = vsel %vm3784, %v3771, %v3770
      %vm3786 = vcmask 1042434
      %v3787 = vsel %vm3786, %v3772, %v3785
      %vm3788 = vcmask 1043459
      %v3789 = vsel %vm3788, %v3773, %v3787
      %vm3790 = vcmask 1044484
      %v3791 = vsel %vm3790, %v3774, %v3789
      %vm3792 = vcmask 1045509
      %v3793 = vsel %vm3792, %v3775, %v3791
      %vm3794 = vcmask 1046534
      %v3795 = vsel %vm3794, %v3776, %v3793
      %vm3796 = vcmask 1047559
      %v3797 = vsel %vm3796, %v3777, %v3795
      %v3798 = vsel %vm3784, %v3779, %v3778
      %v3799 = vsel %vm3786, %v3780, %v3798
      %v3800 = vsel %vm3788, %v3781, %v3799
      %v3801 = vsel %vm3790, %v3782, %v3800
      %v3802 = vsel %vm3792, %v3783, %v3801
      %v3805 = vsel %vm3755, %v3797, 0.0
      %v3806 = vsel %vm3755, %v3802, 0.0
      %vm3807 = vcmask 64515
      %3808 = vst.msk [vmem:[%s371 - $0x3] sm:$0xf8] %vm3807, %v3805
      %vm3809 = vcmask 59392
      %3810 = vst.msk [vmem:[%s371 + $0x5] sm:$0x7] %vm3809, %v3806
      %p3811 = scmp.lt.s32.totalorder %s27, 1
      %s3812 = scalar_select %p3811, %s27, 1
      %p3813 = scmp.lt.s32.totalorder %s28, 3
      %s3814 = scalar_select %p3813, %s28, 3
      %p3815 = scmp.lt.s32.totalorder %s29, 1
      %s3816 = scalar_select %p3815, %s29, 1
      %s3817 = smul.addr %s3814, 2
      %s3818 = sadd.s32 %s3816, %s3817
      %s3819 = smul.addr %s3812, 8
      %s3820 = sadd.s32 %s3818, %s3819
      %s3821 = smul.addr %s3820, 8
      %s3822 = scalar_lea.vmem %s9, %s3821
      // Predicated region
      $region57: #{tpu_custom_call.1} parent=55 // pred_check
        %p3823 = pneg %p257
      $region58: #{tpu_custom_call.1} parent=55 // pred_check_branch
        %3825 = sbr.rel (%p3823) target = $region60
      $region59: #{tpu_custom_call.1} parent=55 // pred_region
        _
      $region60: #{tpu_custom_call.1} parent=55 // pred_fallthru
        _
    $region56: #{tpu_custom_call.1} parent=5 // pred_fallthru
      _
    %p3826 = scmp.le.s32.totalorder 2, %s17
    // Predicated region
    $region61: #{tpu_custom_call.1} parent=5 // pred_check
      %p3827 = pneg %p3826
    $region62: #{tpu_custom_call.1} parent=5 // pred_check_branch
      %3829 = sbr.rel (%p3827) target = $region64
    $region63: #{tpu_custom_call.1} parent=5 // pred_region
      %s3830 = ssub.s32 %s17, 2
      // Predicated region
      $region65: #{tpu_custom_call.1} parent=63 // pred_check
        %p3831 = pneg %p263
      $region66: #{tpu_custom_call.1} parent=63 // pred_check_branch
        %3833 = sbr.rel (%p3831) target = $region68
      $region67: #{tpu_custom_call.1} parent=63 // pred_region
        %p3834 = scmp.lt.s32.totalorder %s30, 1
        %s3835 = scalar_select %p3834, %s30, 1
        %p3836 = scmp.lt.s32.totalorder %s31, 3
        %s3837 = scalar_select %p3836, %s31, 3
        %p3838 = scmp.lt.s32.totalorder %s32, 1
        %s3839 = scalar_select %p3838, %s32, 1
        %s3840 = smul.addr %s3837, 2
        %s3841 = sadd.s32 %s3839, %s3840
        %s3842 = smul.addr %s3835, 8
        %s3843 = sadd.s32 %s3841, %s3842
        %s3844 = smul.addr %s3843, 8
        %s3845 = scalar_lea.vmem %s9, %s3844
      $region68: #{tpu_custom_call.1} parent=63 // pred_fallthru
        _
    $region64: #{tpu_custom_call.1} parent=5 // pred_fallthru
      _
  $region6: #{tpu_custom_call.1} parent=0 // loop_footer
    %s21 = sadd.s32 1, %s17
  $region7: #{tpu_custom_call.1} parent=0 // loop_footer_branch
    %16 = sbr.rel target = $region3
  $region8: #{tpu_custom_call.1} parent=0 // loop_exit
    _

</llo_original>
